<compile_context>
chip_gen: v7x
topology: tpu7x:2x2x1
jax: 0.10.0
libtpu: 0.0.40
codegen_flags: <defaults>
</compile_context>

<pallas_src>
import numpy as np
import jax
import jax.numpy as jnp
from jax.experimental import pallas as pl

# ----------------------------- tiny BERT config -----------------------------
B = 2          # batch
S = 8          # sequence length
H = 32         # hidden size
I = 64         # FFN intermediate size
N_HEADS = 2
DH = H // N_HEADS
VOCAB = 100
LN_EPS = 1e-12
COS_EPS = 1e-8

HP = 128                     # lane-padded width (one vreg lane tile)
BS = B * S                   # batch folded into the sublane axis
N_QKV_BLOCKS = 3 * N_HEADS   # [q_h0, q_h1, k_h0, k_h1, v_h0, v_h1] blocks of 128 lanes

# rows of the packed per-tower "vecs" (V_ROWS, 128) slab
(V_LNE_G, V_LNE_B, V_BO, V_LN1_G, V_LN1_B, V_B1, V_B2,
 V_LN2_G, V_LN2_B, V_POOL_B, V_LIN_B) = range(11)
V_ROWS = 16

# slab indices inside the packed (2*W_SLABS, 128, 128) weight slab (per tower)
W_O_HEAD0 = 0                # + h for attention-output weight of head h
W_FF1 = N_HEADS
W_FF2 = N_HEADS + 1
W_POOL = N_HEADS + 2
W_LIN = N_HEADS + 3
W_SLABS = N_HEADS + 4


# ------------------------------ Pallas kernel --------------------------------
def _layer_norm_padded(v, g, b):
    """LayerNorm over the H real lanes of a lane-padded (rows, HP) array.

    Padded lanes of v, g, b are zero, so sums over 128 lanes equal sums over
    the H real lanes, and the output stays zero in the padded lanes.
    """
    mu = jnp.sum(v, axis=-1, keepdims=True) * (1.0 / H)
    var = jnp.sum(v * v, axis=-1, keepdims=True) * (1.0 / H) - mu * mu
    return (v - mu) * jax.lax.rsqrt(var + LN_EPS) * g + b


def fused_two_tower_kernel(emb_ref, mask_ref, wqkv_ref, bqkv_ref,
                           wmisc_ref, vecs_ref, out_ref):
    """Both BERT towers + pooler + linear heads + cosine, in one grid step."""
    scale = 1.0 / float(np.sqrt(DH))
    tower_emb = []

    for t in range(2):                       # static loop: 0 = question, 1 = paragraph
        x = emb_ref[t]                       # (BS, HP) padded summed embeddings
        m2d = mask_ref[t]                    # (BS, BS) additive attention mask
        vecs = vecs_ref[t]                   # (V_ROWS, HP) packed biases / LN params
        wbase = t * W_SLABS

        h = _layer_norm_padded(x, vecs[V_LNE_G], vecs[V_LNE_B])

        # fused QKV projection: one (BS,HP) @ (HP, 6*HP) MXU matmul
        qkv = jnp.dot(h, wqkv_ref[t], preferred_element_type=jnp.float32) + bqkv_ref[t]

        attn_out = jnp.zeros((BS, HP), jnp.float32)
        for hh in range(N_HEADS):            # static head loop; 128-aligned slices only
            qh = qkv[:, (0 * N_HEADS + hh) * HP:(0 * N_HEADS + hh + 1) * HP]
            kh = qkv[:, (1 * N_HEADS + hh) * HP:(1 * N_HEADS + hh + 1) * HP]
            vh = qkv[:, (2 * N_HEADS + hh) * HP:(2 * N_HEADS + hh + 1) * HP]
            # q @ k^T via dot_general (contract last dims), no explicit transpose
            s = jax.lax.dot_general(qh, kh, (((1,), (1,)), ((), ())),
                                    preferred_element_type=jnp.float32)
            s = s * scale + m2d
            s = s - jnp.max(s, axis=-1, keepdims=True)
            p = jnp.exp(s)
            p = p * pl.reciprocal(jnp.sum(p, axis=-1, keepdims=True), approx=True)
            ctx = jnp.dot(p, vh, preferred_element_type=jnp.float32)     # (BS, HP)
            # per-head output projection, summed (replaces lane-axis concat)
            attn_out = attn_out + jnp.dot(ctx, wmisc_ref[wbase + W_O_HEAD0 + hh],
                                          preferred_element_type=jnp.float32)
        attn_out = attn_out + vecs[V_BO]

        h1 = _layer_norm_padded(h + attn_out, vecs[V_LN1_G], vecs[V_LN1_B])

        # feed-forward (tanh-approx GELU)
        ff = jax.nn.gelu(
            jnp.dot(h1, wmisc_ref[wbase + W_FF1], preferred_element_type=jnp.float32)
            + vecs[V_B1], approximate=True)
        ff_out = jnp.dot(ff, wmisc_ref[wbase + W_FF2],
                         preferred_element_type=jnp.float32) + vecs[V_B2]
        h2 = _layer_norm_padded(h1 + ff_out, vecs[V_LN2_G], vecs[V_LN2_B])

        # CLS rows (row b*S for batch b) -> pooler -> per-tower Linear head
        cls = jnp.concatenate([h2[b * S:b * S + 1, :] for b in range(B)], axis=0)
        pooled = jnp.tanh(
            jnp.dot(cls, wmisc_ref[wbase + W_POOL], preferred_element_type=jnp.float32)
            + vecs[V_POOL_B])
        emb = jnp.dot(pooled, wmisc_ref[wbase + W_LIN],
                      preferred_element_type=jnp.float32) + vecs[V_LIN_B]
        tower_emb.append(emb)                # (B, HP), padded lanes are zero

    qe, pe = tower_emb
    dot = jnp.sum(qe * pe, axis=-1, keepdims=True)
    qn = jnp.sqrt(jnp.sum(qe * qe, axis=-1, keepdims=True))
    pn = jnp.sqrt(jnp.sum(pe * pe, axis=-1, keepdims=True))
    denom = jnp.maximum(qn, COS_EPS) * jnp.maximum(pn, COS_EPS)
    out_ref[...] = dot * pl.reciprocal(denom, approx=True)


# --------------------------------- wrapper ------------------------------------
def _two_tower_similarity_impl(q_ids, q_mask, p_ids, p_mask, packed):
    ids = jnp.stack([q_ids, p_ids]).astype(jnp.int32)             # (2, B, S)
    masks = jnp.stack([q_mask, p_mask]).astype(jnp.float32)       # (2, B, S)

    # embedding lookup + positional / token-type embeddings (gather glue)
    word = jax.vmap(lambda tbl, i: jnp.take(tbl, i, axis=0))(packed["word_emb"], ids)
    emb = (word + packed["pos_emb"][:, None, :, :]
           + packed["type_emb"][:, None, None, :]).astype(jnp.float32)
    emb = emb.reshape(2, BS, H)
    emb = jnp.pad(emb, ((0, 0), (0, 0), (0, HP - H)))             # lane-pad to 128

    # additive attention mask: block-diagonal over batch + key-padding mask
    row_batch = jnp.arange(BS) // S
    same_batch = row_batch[:, None] == row_batch[None, :]         # (BS, BS)
    key_ok = masks.reshape(2, BS) > 0.0                           # (2, BS)
    allowed = same_batch[None, :, :] & key_ok[:, None, :]
    mask2d = jnp.where(allowed, 0.0, -10000.0).astype(jnp.float32)

    full = lambda a: pl.BlockSpec(a.shape, lambda i: (0,) * a.ndim)
    args = (emb, mask2d, packed["wqkv"], packed["bqkv"],
            packed["wmisc"], packed["vecs"])
    cos = pl.pallas_call(
        fused_two_tower_kernel,
        grid=(1,),
        in_specs=[full(a) for a in args],
        out_specs=pl.BlockSpec((B, 1), lambda i: (0, 0)),
        out_shape=jax.ShapeDtypeStruct((B, 1), jnp.float32),
    )(*args)
    return cos[:, 0]


two_tower_similarity = jax.jit(_two_tower_similarity_impl)


# --------------------------- parameter construction ---------------------------
def make_tower_params(key):
    ks = jax.random.split(key, 12)
    n = lambda k, shp: (0.02 * jax.random.normal(k, shp)).astype(jnp.float32)
    return {
        "word_emb": n(ks[0], (VOCAB, H)),
        "pos_emb": n(ks[1], (S, H)),
        "type_emb": n(ks[2], (2, H)),
        "ln_emb_g": jnp.ones((1, H), jnp.float32),
        "ln_emb_b": jnp.zeros((1, H), jnp.float32),
        "wq": n(ks[3], (H, H)), "bq": jnp.zeros((1, H), jnp.float32),
        "wk": n(ks[4], (H, H)), "bk": jnp.zeros((1, H), jnp.float32),
        "wv": n(ks[5], (H, H)), "bv": jnp.zeros((1, H), jnp.float32),
        "wo": n(ks[6], (H, H)), "bo": jnp.zeros((1, H), jnp.float32),
        "ln1_g": jnp.ones((1, H), jnp.float32),
        "ln1_b": jnp.zeros((1, H), jnp.float32),
        "w1": n(ks[7], (H, I)), "b1": jnp.zeros((1, I), jnp.float32),
        "w2": n(ks[8], (I, H)), "b2": jnp.zeros((1, H), jnp.float32),
        "ln2_g": jnp.ones((1, H), jnp.float32),
        "ln2_b": jnp.zeros((1, H), jnp.float32),
        "pool_w": n(ks[9], (H, H)), "pool_b": jnp.zeros((1, H), jnp.float32),
    }


def make_params(key):
    kq, kp, k1, k2 = jax.random.split(key, 4)
    n = lambda k, shp: (0.02 * jax.random.normal(k, shp)).astype(jnp.float32)
    return {
        "q": make_tower_params(kq),
        "p": make_tower_params(kp),
        "q_linear_w": n(k1, (H, H)), "q_linear_b": jnp.zeros((1, H), jnp.float32),
        "p_linear_w": n(k2, (H, H)), "p_linear_b": jnp.zeros((1, H), jnp.float32),
    }


def pack_params(params):
    """Pad / pack the logical params into lane-dense kernel operand slabs."""
    def pack_tower(tp, lin_w, lin_b):
        wq, wk, wv = (np.asarray(tp[nm]) for nm in ("wq", "wk", "wv"))
        bq, bk, bv = (np.asarray(tp[nm]) for nm in ("bq", "bk", "bv"))
        wqkv = np.zeros((HP, N_QKV_BLOCKS * HP), np.float32)
        bqkv = np.zeros((1, N_QKV_BLOCKS * HP), np.float32)
        for pi, (w, b) in enumerate(((wq, bq), (wk, bk), (wv, bv))):
            for hh in range(N_HEADS):
                blk = (pi * N_HEADS + hh) * HP
                wqkv[:H, blk:blk + DH] = w[:, hh * DH:(hh + 1) * DH]
                bqkv[0, blk:blk + DH] = b[0, hh * DH:(hh + 1) * DH]

        wmisc = np.zeros((W_SLABS, HP, HP), np.float32)
        wo = np.asarray(tp["wo"])
        for hh in range(N_HEADS):
            wmisc[W_O_HEAD0 + hh, :DH, :H] = wo[hh * DH:(hh + 1) * DH, :]
        wmisc[W_FF1, :H, :I] = np.asarray(tp["w1"])
        wmisc[W_FF2, :I, :H] = np.asarray(tp["w2"])
        wmisc[W_POOL, :H, :H] = np.asarray(tp["pool_w"])
        wmisc[W_LIN, :H, :H] = np.asarray(lin_w)

        vecs = np.zeros((V_ROWS, HP), np.float32)
        vecs[V_LNE_G, :H] = np.asarray(tp["ln_emb_g"])[0]
        vecs[V_LNE_B, :H] = np.asarray(tp["ln_emb_b"])[0]
        vecs[V_BO, :H] = np.asarray(tp["bo"])[0]
        vecs[V_LN1_G, :H] = np.asarray(tp["ln1_g"])[0]
        vecs[V_LN1_B, :H] = np.asarray(tp["ln1_b"])[0]
        vecs[V_B1, :I] = np.asarray(tp["b1"])[0]
        vecs[V_B2, :H] = np.asarray(tp["b2"])[0]
        vecs[V_LN2_G, :H] = np.asarray(tp["ln2_g"])[0]
        vecs[V_LN2_B, :H] = np.asarray(tp["ln2_b"])[0]
        vecs[V_POOL_B, :H] = np.asarray(tp["pool_b"])[0]
        vecs[V_LIN_B, :H] = np.asarray(lin_b)[0]
        return wqkv, bqkv, wmisc, vecs

    towers = [
        pack_tower(params["q"], params["q_linear_w"], params["q_linear_b"]),
        pack_tower(params["p"], params["p_linear_w"], params["p_linear_b"]),
    ]
    return {
        "word_emb": jnp.stack([params["q"]["word_emb"], params["p"]["word_emb"]]),
        "pos_emb": jnp.stack([params["q"]["pos_emb"], params["p"]["pos_emb"]]),
        "type_emb": jnp.stack([params["q"]["type_emb"][0], params["p"]["type_emb"][0]]),
        "wqkv": jnp.asarray(np.stack([t[0] for t in towers])),           # (2,128,768)
        "bqkv": jnp.asarray(np.stack([t[1] for t in towers])),           # (2,1,768)
        "wmisc": jnp.asarray(np.concatenate([t[2] for t in towers], 0)), # (12,128,128)
        "vecs": jnp.asarray(np.stack([t[3] for t in towers])),           # (2,16,128)
    }


# ------------------------------ pure-JAX reference ----------------------------
def _ref_tower(ids, mask, tp):
    emb = (jnp.take(tp["word_emb"], ids, axis=0) + tp["pos_emb"][None]
           + tp["type_emb"][0][None, None])
    add_mask = ((1.0 - mask.astype(jnp.float32)) * -10000.0)[:, None, :]
    ln = lambda v, g, b: ((v - v.mean(-1, keepdims=True))
                          / jnp.sqrt(v.var(-1, keepdims=True) + LN_EPS)) * g + b
    h = ln(emb, tp["ln_emb_g"], tp["ln_emb_b"])
    q = h @ tp["wq"] + tp["bq"]
    k = h @ tp["wk"] + tp["bk"]
    v = h @ tp["wv"] + tp["bv"]
    ctxs = []
    for hi in range(N_HEADS):
        sl = slice(hi * DH, (hi + 1) * DH)
        s = jnp.einsum("bqd,bkd->bqk", q[..., sl], k[..., sl]) / np.sqrt(DH) + add_mask
        p = jax.nn.softmax(s, axis=-1)
        ctxs.append(jnp.einsum("bqk,bkd->bqd", p, v[..., sl]))
    ctx = jnp.concatenate(ctxs, -1)
    h1 = ln(h + ctx @ tp["wo"] + tp["bo"], tp["ln1_g"], tp["ln1_b"])
    ff = jax.nn.gelu(h1 @ tp["w1"] + tp["b1"], approximate=True) @ tp["w2"] + tp["b2"]
    return ln(h1 + ff, tp["ln2_g"], tp["ln2_b"])


def _ref_forward(q_ids, q_mask, p_ids, p_mask, params):
    qh = _ref_tower(q_ids, q_mask, params["q"])[:, 0]
    ph = _ref_tower(p_ids, p_mask, params["p"])[:, 0]
    qp = jnp.tanh(qh @ params["q"]["pool_w"] + params["q"]["pool_b"])
    pp = jnp.tanh(ph @ params["p"]["pool_w"] + params["p"]["pool_b"])
    qe = qp @ params["q_linear_w"] + params["q_linear_b"]
    pe = pp @ params["p_linear_w"] + params["p_linear_b"]
    num = jnp.sum(qe * pe, -1)
    den = (jnp.maximum(jnp.linalg.norm(qe, axis=-1), COS_EPS)
           * jnp.maximum(jnp.linalg.norm(pe, axis=-1), COS_EPS))
    return num / den


# ------------------------------------ main ------------------------------------
if __name__ == "__main__":
    key = jax.random.PRNGKey(0)
    kparam, k1, k2 = jax.random.split(key, 3)
    params = make_params(kparam)
    packed = pack_params(params)

    q_ids = jax.random.randint(k1, (B, S), 0, VOCAB, dtype=jnp.int32)
    p_ids = jax.random.randint(k2, (B, S), 0, VOCAB, dtype=jnp.int32)
    # attention masks: last two question tokens / last paragraph token padded out
    q_mask = jnp.array([[1, 1, 1, 1, 1, 1, 0, 0],
                        [1, 1, 1, 1, 1, 1, 1, 1]], dtype=jnp.int32)
    p_mask = jnp.array([[1, 1, 1, 1, 1, 1, 1, 0],
                        [1, 1, 1, 1, 1, 1, 1, 1]], dtype=jnp.int32)

    cos = two_tower_similarity(q_ids, q_mask, p_ids, p_mask, packed)
    cos = jax.block_until_ready(cos)

    ref = _ref_forward(q_ids, q_mask, p_ids, p_mask, params)
    np.testing.assert_allclose(np.asarray(cos), np.asarray(ref), rtol=2e-3, atol=2e-3)

    print("KERNEL_OK")
</pallas_src>

<mosaic_0001>
module attributes {stable_mosaic.version = 11 : i64} {
  func.func @fused_two_tower_kernel(%arg0: i32, %arg1: memref<2x16x128xf32, #tpu.memory_space<vmem>>, %arg2: memref<2x16x16xf32, #tpu.memory_space<vmem>>, %arg3: memref<2x128x768xf32, #tpu.memory_space<vmem>>, %arg4: memref<2x1x768xf32, #tpu.memory_space<vmem>>, %arg5: memref<12x128x128xf32, #tpu.memory_space<vmem>>, %arg6: memref<2x16x128xf32, #tpu.memory_space<vmem>>, %arg7: memref<2x1xf32, #tpu.memory_space<vmem>>) attributes {dimension_semantics = [#tpu.dimension_semantics<arbitrary>], iteration_bounds = array<i64: 1>, scalar_prefetch = 0 : i64, scratch_operands = 0 : i64, tpu.core_type = #tpu.core_type<tc>, window_params = [{pipeline_mode = #tpu.pipeline_mode<synchronous>, transform_indices = @transform_0, window_bounds = array<i64: 2, 16, 128>}, {pipeline_mode = #tpu.pipeline_mode<synchronous>, transform_indices = @transform_1, window_bounds = array<i64: 2, 16, 16>}, {pipeline_mode = #tpu.pipeline_mode<synchronous>, transform_indices = @transform_2, window_bounds = array<i64: 2, 128, 768>}, {pipeline_mode = #tpu.pipeline_mode<synchronous>, transform_indices = @transform_3, window_bounds = array<i64: 2, 1, 768>}, {pipeline_mode = #tpu.pipeline_mode<synchronous>, transform_indices = @transform_4, window_bounds = array<i64: 12, 128, 128>}, {pipeline_mode = #tpu.pipeline_mode<synchronous>, transform_indices = @transform_5, window_bounds = array<i64: 2, 16, 128>}, {pipeline_mode = #tpu.pipeline_mode<synchronous>, transform_indices = @transform_6, window_bounds = array<i64: 2, 1>}]} {
    %c0 = arith.constant 0 : index
    %c0_0 = arith.constant 0 : index
    %c0_1 = arith.constant 0 : index
    %0 = vector.load %arg1[%c0, %c0_0, %c0_1] : memref<2x16x128xf32, #tpu.memory_space<vmem>>, vector<1x16x128xf32>
    %1 = vector.shape_cast %0 : vector<1x16x128xf32> to vector<16x128xf32>
    %c0_2 = arith.constant 0 : index
    %c0_3 = arith.constant 0 : index
    %c0_4 = arith.constant 0 : index
    %2 = vector.load %arg2[%c0_2, %c0_3, %c0_4] : memref<2x16x16xf32, #tpu.memory_space<vmem>>, vector<1x16x16xf32>
    %3 = vector.shape_cast %2 : vector<1x16x16xf32> to vector<16x16xf32>
    %c0_5 = arith.constant 0 : index
    %c0_6 = arith.constant 0 : index
    %c0_7 = arith.constant 0 : index
    %4 = vector.load %arg6[%c0_5, %c0_6, %c0_7] : memref<2x16x128xf32, #tpu.memory_space<vmem>>, vector<1x16x128xf32>
    %5 = vector.shape_cast %4 : vector<1x16x128xf32> to vector<16x128xf32>
    %6 = vector.extract_strided_slice %5 {offsets = [0, 0], sizes = [1, 128], strides = [1, 1]} : vector<16x128xf32> to vector<1x128xf32>
    %7 = vector.shape_cast %6 : vector<1x128xf32> to vector<128xf32>
    %8 = vector.extract_strided_slice %5 {offsets = [1, 0], sizes = [1, 128], strides = [1, 1]} : vector<16x128xf32> to vector<1x128xf32>
    %9 = vector.shape_cast %8 : vector<1x128xf32> to vector<128xf32>
    %cst = arith.constant dense<0.000000e+00> : vector<16xf32>
    %10 = vector.multi_reduction <add>, %1, %cst [1] : vector<16x128xf32> to vector<16xf32>
    %11 = vector.shape_cast %10 : vector<16xf32> to vector<16x1xf32>
    %cst_8 = arith.constant 3.125000e-02 : f32
    %12 = vector.broadcast %cst_8 : f32 to vector<16x1xf32>
    %13 = arith.mulf %11, %12 : vector<16x1xf32>
    %14 = arith.mulf %1, %1 : vector<16x128xf32>
    %cst_9 = arith.constant dense<0.000000e+00> : vector<16xf32>
    %15 = vector.multi_reduction <add>, %14, %cst_9 [1] : vector<16x128xf32> to vector<16xf32>
    %16 = vector.shape_cast %15 : vector<16xf32> to vector<16x1xf32>
    %cst_10 = arith.constant 3.125000e-02 : f32
    %17 = vector.broadcast %cst_10 : f32 to vector<16x1xf32>
    %18 = arith.mulf %16, %17 : vector<16x1xf32>
    %19 = arith.mulf %13, %13 : vector<16x1xf32>
    %20 = arith.subf %18, %19 : vector<16x1xf32>
    %21 = vector.broadcast %13 : vector<16x1xf32> to vector<16x128xf32>
    %22 = arith.subf %1, %21 : vector<16x128xf32>
    %cst_11 = arith.constant 9.99999996E-13 : f32
    %23 = vector.broadcast %cst_11 : f32 to vector<16x1xf32>
    %24 = arith.addf %20, %23 : vector<16x1xf32>
    %25 = math.rsqrt %24 : vector<16x1xf32>
    %26 = vector.broadcast %25 : vector<16x1xf32> to vector<16x128xf32>
    %27 = arith.mulf %22, %26 : vector<16x128xf32>
    %28 = vector.shape_cast %7 : vector<128xf32> to vector<1x128xf32>
    %29 = vector.broadcast %28 : vector<1x128xf32> to vector<16x128xf32>
    %30 = arith.mulf %27, %29 : vector<16x128xf32>
    %31 = vector.shape_cast %9 : vector<128xf32> to vector<1x128xf32>
    %32 = vector.broadcast %31 : vector<1x128xf32> to vector<16x128xf32>
    %33 = arith.addf %30, %32 : vector<16x128xf32>
    %c0_12 = arith.constant 0 : index
    %c0_13 = arith.constant 0 : index
    %c0_14 = arith.constant 0 : index
    %34 = vector.load %arg3[%c0_12, %c0_13, %c0_14] : memref<2x128x768xf32, #tpu.memory_space<vmem>>, vector<1x128x768xf32>
    %35 = vector.shape_cast %34 : vector<1x128x768xf32> to vector<128x768xf32>
    %cst_15 = arith.constant dense<0.000000e+00> : vector<16x768xf32>
    %36 = tpu.matmul %33, %35, %cst_15 {dimension_numbers = #tpu.dot_dimension_numbers<[1], [0], [0], [1], [0, 0, 1, 1], [], []>} : vector<16x128xf32>, vector<128x768xf32>, vector<16x768xf32> -> vector<16x768xf32>
    %c0_16 = arith.constant 0 : index
    %c0_17 = arith.constant 0 : index
    %c0_18 = arith.constant 0 : index
    %37 = vector.load %arg4[%c0_16, %c0_17, %c0_18] : memref<2x1x768xf32, #tpu.memory_space<vmem>>, vector<1x1x768xf32>
    %38 = vector.shape_cast %37 : vector<1x1x768xf32> to vector<1x768xf32>
    %39 = vector.broadcast %38 : vector<1x768xf32> to vector<16x768xf32>
    %40 = arith.addf %36, %39 : vector<16x768xf32>
    %cst_19 = arith.constant 0.000000e+00 : f32
    %41 = vector.broadcast %cst_19 : f32 to vector<16x128xf32>
    %42 = vector.extract_strided_slice %40 {offsets = [0, 0], sizes = [16, 128], strides = [1, 1]} : vector<16x768xf32> to vector<16x128xf32>
    %43 = vector.extract_strided_slice %40 {offsets = [0, 256], sizes = [16, 128], strides = [1, 1]} : vector<16x768xf32> to vector<16x128xf32>
    %44 = vector.extract_strided_slice %40 {offsets = [0, 512], sizes = [16, 128], strides = [1, 1]} : vector<16x768xf32> to vector<16x128xf32>
    %cst_20 = arith.constant dense<0.000000e+00> : vector<16x16xf32>
    %45 = tpu.matmul %42, %43, %cst_20 {dimension_numbers = #tpu.dot_dimension_numbers<[1], [1], [0], [0], [0, 0, 1, 0], [], []>} : vector<16x128xf32>, vector<16x128xf32>, vector<16x16xf32> -> vector<16x16xf32>
    %cst_21 = arith.constant 2.500000e-01 : f32
    %46 = vector.broadcast %cst_21 : f32 to vector<16x16xf32>
    %47 = arith.mulf %45, %46 : vector<16x16xf32>
    %48 = arith.addf %47, %3 : vector<16x16xf32>
    %cst_22 = arith.constant dense<0xFF800000> : vector<16xf32>
    %49 = vector.multi_reduction <maximumf>, %48, %cst_22 [1] : vector<16x16xf32> to vector<16xf32>
    %50 = vector.shape_cast %49 : vector<16xf32> to vector<16x1xf32>
    %51 = vector.broadcast %50 : vector<16x1xf32> to vector<16x16xf32>
    %52 = arith.subf %48, %51 : vector<16x16xf32>
    %53 = math.exp %52 : vector<16x16xf32>
    %cst_23 = arith.constant dense<0.000000e+00> : vector<16xf32>
    %54 = vector.multi_reduction <add>, %53, %cst_23 [1] : vector<16x16xf32> to vector<16xf32>
    %55 = vector.shape_cast %54 : vector<16xf32> to vector<16x1xf32>
    %56 = tpu.reciprocal %55 {approx = true} : vector<16x1xf32> -> vector<16x1xf32>
    %57 = vector.broadcast %56 : vector<16x1xf32> to vector<16x16xf32>
    %58 = arith.mulf %53, %57 : vector<16x16xf32>
    %cst_24 = arith.constant dense<0.000000e+00> : vector<16x128xf32>
    %59 = tpu.matmul %58, %44, %cst_24 {dimension_numbers = #tpu.dot_dimension_numbers<[1], [0], [0], [1], [0, 0, 1, 1], [], []>} : vector<16x16xf32>, vector<16x128xf32>, vector<16x128xf32> -> vector<16x128xf32>
    %c0_25 = arith.constant 0 : index
    %c0_26 = arith.constant 0 : index
    %c0_27 = arith.constant 0 : index
    %60 = vector.load %arg5[%c0_25, %c0_26, %c0_27] : memref<12x128x128xf32, #tpu.memory_space<vmem>>, vector<1x128x128xf32>
    %61 = vector.shape_cast %60 : vector<1x128x128xf32> to vector<128x128xf32>
    %cst_28 = arith.constant dense<0.000000e+00> : vector<16x128xf32>
    %62 = tpu.matmul %59, %61, %cst_28 {dimension_numbers = #tpu.dot_dimension_numbers<[1], [0], [0], [1], [0, 0, 1, 1], [], []>} : vector<16x128xf32>, vector<128x128xf32>, vector<16x128xf32> -> vector<16x128xf32>
    %63 = arith.addf %41, %62 : vector<16x128xf32>
    %64 = vector.extract_strided_slice %40 {offsets = [0, 128], sizes = [16, 128], strides = [1, 1]} : vector<16x768xf32> to vector<16x128xf32>
    %65 = vector.extract_strided_slice %40 {offsets = [0, 384], sizes = [16, 128], strides = [1, 1]} : vector<16x768xf32> to vector<16x128xf32>
    %66 = vector.extract_strided_slice %40 {offsets = [0, 640], sizes = [16, 128], strides = [1, 1]} : vector<16x768xf32> to vector<16x128xf32>
    %cst_29 = arith.constant dense<0.000000e+00> : vector<16x16xf32>
    %67 = tpu.matmul %64, %65, %cst_29 {dimension_numbers = #tpu.dot_dimension_numbers<[1], [1], [0], [0], [0, 0, 1, 0], [], []>} : vector<16x128xf32>, vector<16x128xf32>, vector<16x16xf32> -> vector<16x16xf32>
    %cst_30 = arith.constant 2.500000e-01 : f32
    %68 = vector.broadcast %cst_30 : f32 to vector<16x16xf32>
    %69 = arith.mulf %67, %68 : vector<16x16xf32>
    %70 = arith.addf %69, %3 : vector<16x16xf32>
    %cst_31 = arith.constant dense<0xFF800000> : vector<16xf32>
    %71 = vector.multi_reduction <maximumf>, %70, %cst_31 [1] : vector<16x16xf32> to vector<16xf32>
    %72 = vector.shape_cast %71 : vector<16xf32> to vector<16x1xf32>
    %73 = vector.broadcast %72 : vector<16x1xf32> to vector<16x16xf32>
    %74 = arith.subf %70, %73 : vector<16x16xf32>
    %75 = math.exp %74 : vector<16x16xf32>
    %cst_32 = arith.constant dense<0.000000e+00> : vector<16xf32>
    %76 = vector.multi_reduction <add>, %75, %cst_32 [1] : vector<16x16xf32> to vector<16xf32>
    %77 = vector.shape_cast %76 : vector<16xf32> to vector<16x1xf32>
    %78 = tpu.reciprocal %77 {approx = true} : vector<16x1xf32> -> vector<16x1xf32>
    %79 = vector.broadcast %78 : vector<16x1xf32> to vector<16x16xf32>
    %80 = arith.mulf %75, %79 : vector<16x16xf32>
    %cst_33 = arith.constant dense<0.000000e+00> : vector<16x128xf32>
    %81 = tpu.matmul %80, %66, %cst_33 {dimension_numbers = #tpu.dot_dimension_numbers<[1], [0], [0], [1], [0, 0, 1, 1], [], []>} : vector<16x16xf32>, vector<16x128xf32>, vector<16x128xf32> -> vector<16x128xf32>
    %c1 = arith.constant 1 : index
    %c0_34 = arith.constant 0 : index
    %c0_35 = arith.constant 0 : index
    %82 = vector.load %arg5[%c1, %c0_34, %c0_35] : memref<12x128x128xf32, #tpu.memory_space<vmem>>, vector<1x128x128xf32>
    %83 = vector.shape_cast %82 : vector<1x128x128xf32> to vector<128x128xf32>
    %cst_36 = arith.constant dense<0.000000e+00> : vector<16x128xf32>
    %84 = tpu.matmul %81, %83, %cst_36 {dimension_numbers = #tpu.dot_dimension_numbers<[1], [0], [0], [1], [0, 0, 1, 1], [], []>} : vector<16x128xf32>, vector<128x128xf32>, vector<16x128xf32> -> vector<16x128xf32>
    %85 = arith.addf %63, %84 : vector<16x128xf32>
    %86 = vector.extract_strided_slice %5 {offsets = [2, 0], sizes = [1, 128], strides = [1, 1]} : vector<16x128xf32> to vector<1x128xf32>
    %87 = vector.shape_cast %86 : vector<1x128xf32> to vector<128xf32>
    %88 = vector.shape_cast %87 : vector<128xf32> to vector<1x128xf32>
    %89 = vector.broadcast %88 : vector<1x128xf32> to vector<16x128xf32>
    %90 = arith.addf %85, %89 : vector<16x128xf32>
    %91 = arith.addf %33, %90 : vector<16x128xf32>
    %92 = vector.extract_strided_slice %5 {offsets = [3, 0], sizes = [1, 128], strides = [1, 1]} : vector<16x128xf32> to vector<1x128xf32>
    %93 = vector.shape_cast %92 : vector<1x128xf32> to vector<128xf32>
    %94 = vector.extract_strided_slice %5 {offsets = [4, 0], sizes = [1, 128], strides = [1, 1]} : vector<16x128xf32> to vector<1x128xf32>
    %95 = vector.shape_cast %94 : vector<1x128xf32> to vector<128xf32>
    %cst_37 = arith.constant dense<0.000000e+00> : vector<16xf32>
    %96 = vector.multi_reduction <add>, %91, %cst_37 [1] : vector<16x128xf32> to vector<16xf32>
    %97 = vector.shape_cast %96 : vector<16xf32> to vector<16x1xf32>
    %cst_38 = arith.constant 3.125000e-02 : f32
    %98 = vector.broadcast %cst_38 : f32 to vector<16x1xf32>
    %99 = arith.mulf %97, %98 : vector<16x1xf32>
    %100 = arith.mulf %91, %91 : vector<16x128xf32>
    %cst_39 = arith.constant dense<0.000000e+00> : vector<16xf32>
    %101 = vector.multi_reduction <add>, %100, %cst_39 [1] : vector<16x128xf32> to vector<16xf32>
    %102 = vector.shape_cast %101 : vector<16xf32> to vector<16x1xf32>
    %cst_40 = arith.constant 3.125000e-02 : f32
    %103 = vector.broadcast %cst_40 : f32 to vector<16x1xf32>
    %104 = arith.mulf %102, %103 : vector<16x1xf32>
    %105 = arith.mulf %99, %99 : vector<16x1xf32>
    %106 = arith.subf %104, %105 : vector<16x1xf32>
    %107 = vector.broadcast %99 : vector<16x1xf32> to vector<16x128xf32>
    %108 = arith.subf %91, %107 : vector<16x128xf32>
    %cst_41 = arith.constant 9.99999996E-13 : f32
    %109 = vector.broadcast %cst_41 : f32 to vector<16x1xf32>
    %110 = arith.addf %106, %109 : vector<16x1xf32>
    %111 = math.rsqrt %110 : vector<16x1xf32>
    %112 = vector.broadcast %111 : vector<16x1xf32> to vector<16x128xf32>
    %113 = arith.mulf %108, %112 : vector<16x128xf32>
    %114 = vector.shape_cast %93 : vector<128xf32> to vector<1x128xf32>
    %115 = vector.broadcast %114 : vector<1x128xf32> to vector<16x128xf32>
    %116 = arith.mulf %113, %115 : vector<16x128xf32>
    %117 = vector.shape_cast %95 : vector<128xf32> to vector<1x128xf32>
    %118 = vector.broadcast %117 : vector<1x128xf32> to vector<16x128xf32>
    %119 = arith.addf %116, %118 : vector<16x128xf32>
    %c2 = arith.constant 2 : index
    %c0_42 = arith.constant 0 : index
    %c0_43 = arith.constant 0 : index
    %120 = vector.load %arg5[%c2, %c0_42, %c0_43] : memref<12x128x128xf32, #tpu.memory_space<vmem>>, vector<1x128x128xf32>
    %121 = vector.shape_cast %120 : vector<1x128x128xf32> to vector<128x128xf32>
    %cst_44 = arith.constant dense<0.000000e+00> : vector<16x128xf32>
    %122 = tpu.matmul %119, %121, %cst_44 {dimension_numbers = #tpu.dot_dimension_numbers<[1], [0], [0], [1], [0, 0, 1, 1], [], []>} : vector<16x128xf32>, vector<128x128xf32>, vector<16x128xf32> -> vector<16x128xf32>
    %123 = vector.extract_strided_slice %5 {offsets = [5, 0], sizes = [1, 128], strides = [1, 1]} : vector<16x128xf32> to vector<1x128xf32>
    %124 = vector.shape_cast %123 : vector<1x128xf32> to vector<128xf32>
    %125 = vector.shape_cast %124 : vector<128xf32> to vector<1x128xf32>
    %126 = vector.broadcast %125 : vector<1x128xf32> to vector<16x128xf32>
    %127 = arith.addf %122, %126 : vector<16x128xf32>
    %128 = arith.mulf %127, %127 : vector<16x128xf32>
    %129 = arith.mulf %127, %128 : vector<16x128xf32>
    %cst_45 = arith.constant 4.471500e-02 : f32
    %130 = vector.broadcast %cst_45 : f32 to vector<16x128xf32>
    %131 = arith.mulf %130, %129 : vector<16x128xf32>
    %132 = arith.addf %127, %131 : vector<16x128xf32>
    %cst_46 = arith.constant 0.797884583 : f32
    %133 = vector.broadcast %cst_46 : f32 to vector<16x128xf32>
    %134 = arith.mulf %133, %132 : vector<16x128xf32>
    %135 = math.tanh %134 : vector<16x128xf32>
    %cst_47 = arith.constant 1.000000e+00 : f32
    %136 = vector.broadcast %cst_47 : f32 to vector<16x128xf32>
    %137 = arith.addf %136, %135 : vector<16x128xf32>
    %cst_48 = arith.constant 5.000000e-01 : f32
    %138 = vector.broadcast %cst_48 : f32 to vector<16x128xf32>
    %139 = arith.mulf %138, %137 : vector<16x128xf32>
    %140 = arith.mulf %127, %139 : vector<16x128xf32>
    %c3 = arith.constant 3 : index
    %c0_49 = arith.constant 0 : index
    %c0_50 = arith.constant 0 : index
    %141 = vector.load %arg5[%c3, %c0_49, %c0_50] : memref<12x128x128xf32, #tpu.memory_space<vmem>>, vector<1x128x128xf32>
    %142 = vector.shape_cast %141 : vector<1x128x128xf32> to vector<128x128xf32>
    %cst_51 = arith.constant dense<0.000000e+00> : vector<16x128xf32>
    %143 = tpu.matmul %140, %142, %cst_51 {dimension_numbers = #tpu.dot_dimension_numbers<[1], [0], [0], [1], [0, 0, 1, 1], [], []>} : vector<16x128xf32>, vector<128x128xf32>, vector<16x128xf32> -> vector<16x128xf32>
    %144 = vector.extract_strided_slice %5 {offsets = [6, 0], sizes = [1, 128], strides = [1, 1]} : vector<16x128xf32> to vector<1x128xf32>
    %145 = vector.shape_cast %144 : vector<1x128xf32> to vector<128xf32>
    %146 = vector.shape_cast %145 : vector<128xf32> to vector<1x128xf32>
    %147 = vector.broadcast %146 : vector<1x128xf32> to vector<16x128xf32>
    %148 = arith.addf %143, %147 : vector<16x128xf32>
    %149 = arith.addf %119, %148 : vector<16x128xf32>
    %150 = vector.extract_strided_slice %5 {offsets = [7, 0], sizes = [1, 128], strides = [1, 1]} : vector<16x128xf32> to vector<1x128xf32>
    %151 = vector.shape_cast %150 : vector<1x128xf32> to vector<128xf32>
    %152 = vector.extract_strided_slice %5 {offsets = [8, 0], sizes = [1, 128], strides = [1, 1]} : vector<16x128xf32> to vector<1x128xf32>
    %153 = vector.shape_cast %152 : vector<1x128xf32> to vector<128xf32>
    %cst_52 = arith.constant dense<0.000000e+00> : vector<16xf32>
    %154 = vector.multi_reduction <add>, %149, %cst_52 [1] : vector<16x128xf32> to vector<16xf32>
    %155 = vector.shape_cast %154 : vector<16xf32> to vector<16x1xf32>
    %cst_53 = arith.constant 3.125000e-02 : f32
    %156 = vector.broadcast %cst_53 : f32 to vector<16x1xf32>
    %157 = arith.mulf %155, %156 : vector<16x1xf32>
    %158 = arith.mulf %149, %149 : vector<16x128xf32>
    %cst_54 = arith.constant dense<0.000000e+00> : vector<16xf32>
    %159 = vector.multi_reduction <add>, %158, %cst_54 [1] : vector<16x128xf32> to vector<16xf32>
    %160 = vector.shape_cast %159 : vector<16xf32> to vector<16x1xf32>
    %cst_55 = arith.constant 3.125000e-02 : f32
    %161 = vector.broadcast %cst_55 : f32 to vector<16x1xf32>
    %162 = arith.mulf %160, %161 : vector<16x1xf32>
    %163 = arith.mulf %157, %157 : vector<16x1xf32>
    %164 = arith.subf %162, %163 : vector<16x1xf32>
    %165 = vector.broadcast %157 : vector<16x1xf32> to vector<16x128xf32>
    %166 = arith.subf %149, %165 : vector<16x128xf32>
    %cst_56 = arith.constant 9.99999996E-13 : f32
    %167 = vector.broadcast %cst_56 : f32 to vector<16x1xf32>
    %168 = arith.addf %164, %167 : vector<16x1xf32>
    %169 = math.rsqrt %168 : vector<16x1xf32>
    %170 = vector.broadcast %169 : vector<16x1xf32> to vector<16x128xf32>
    %171 = arith.mulf %166, %170 : vector<16x128xf32>
    %172 = vector.shape_cast %151 : vector<128xf32> to vector<1x128xf32>
    %173 = vector.broadcast %172 : vector<1x128xf32> to vector<16x128xf32>
    %174 = arith.mulf %171, %173 : vector<16x128xf32>
    %175 = vector.shape_cast %153 : vector<128xf32> to vector<1x128xf32>
    %176 = vector.broadcast %175 : vector<1x128xf32> to vector<16x128xf32>
    %177 = arith.addf %174, %176 : vector<16x128xf32>
    %178 = vector.extract_strided_slice %177 {offsets = [0, 0], sizes = [1, 128], strides = [1, 1]} : vector<16x128xf32> to vector<1x128xf32>
    %179 = vector.extract_strided_slice %177 {offsets = [8, 0], sizes = [1, 128], strides = [1, 1]} : vector<16x128xf32> to vector<1x128xf32>
    %180 = tpu.concatenate %178, %179 in 0 : vector<1x128xf32>, vector<1x128xf32> -> vector<2x128xf32>
    %c4 = arith.constant 4 : index
    %c0_57 = arith.constant 0 : index
    %c0_58 = arith.constant 0 : index
    %181 = vector.load %arg5[%c4, %c0_57, %c0_58] : memref<12x128x128xf32, #tpu.memory_space<vmem>>, vector<1x128x128xf32>
    %182 = vector.shape_cast %181 : vector<1x128x128xf32> to vector<128x128xf32>
    %cst_59 = arith.constant dense<0.000000e+00> : vector<2x128xf32>
    %183 = tpu.matmul %180, %182, %cst_59 {dimension_numbers = #tpu.dot_dimension_numbers<[1], [0], [0], [1], [0, 0, 1, 1], [], []>} : vector<2x128xf32>, vector<128x128xf32>, vector<2x128xf32> -> vector<2x128xf32>
    %184 = vector.extract_strided_slice %5 {offsets = [9, 0], sizes = [1, 128], strides = [1, 1]} : vector<16x128xf32> to vector<1x128xf32>
    %185 = vector.shape_cast %184 : vector<1x128xf32> to vector<128xf32>
    %186 = vector.shape_cast %185 : vector<128xf32> to vector<1x128xf32>
    %187 = vector.broadcast %186 : vector<1x128xf32> to vector<2x128xf32>
    %188 = arith.addf %183, %187 : vector<2x128xf32>
    %189 = math.tanh %188 : vector<2x128xf32>
    %c5 = arith.constant 5 : index
    %c0_60 = arith.constant 0 : index
    %c0_61 = arith.constant 0 : index
    %190 = vector.load %arg5[%c5, %c0_60, %c0_61] : memref<12x128x128xf32, #tpu.memory_space<vmem>>, vector<1x128x128xf32>
    %191 = vector.shape_cast %190 : vector<1x128x128xf32> to vector<128x128xf32>
    %cst_62 = arith.constant dense<0.000000e+00> : vector<2x128xf32>
    %192 = tpu.matmul %189, %191, %cst_62 {dimension_numbers = #tpu.dot_dimension_numbers<[1], [0], [0], [1], [0, 0, 1, 1], [], []>} : vector<2x128xf32>, vector<128x128xf32>, vector<2x128xf32> -> vector<2x128xf32>
    %193 = vector.extract_strided_slice %5 {offsets = [10, 0], sizes = [1, 128], strides = [1, 1]} : vector<16x128xf32> to vector<1x128xf32>
    %194 = vector.shape_cast %193 : vector<1x128xf32> to vector<128xf32>
    %195 = vector.shape_cast %194 : vector<128xf32> to vector<1x128xf32>
    %196 = vector.broadcast %195 : vector<1x128xf32> to vector<2x128xf32>
    %197 = arith.addf %192, %196 : vector<2x128xf32>
    %c1_63 = arith.constant 1 : index
    %c0_64 = arith.constant 0 : index
    %c0_65 = arith.constant 0 : index
    %198 = vector.load %arg1[%c1_63, %c0_64, %c0_65] : memref<2x16x128xf32, #tpu.memory_space<vmem>>, vector<1x16x128xf32>
    %199 = vector.shape_cast %198 : vector<1x16x128xf32> to vector<16x128xf32>
    %c1_66 = arith.constant 1 : index
    %c0_67 = arith.constant 0 : index
    %c0_68 = arith.constant 0 : index
    %200 = vector.load %arg2[%c1_66, %c0_67, %c0_68] : memref<2x16x16xf32, #tpu.memory_space<vmem>>, vector<1x16x16xf32>
    %201 = vector.shape_cast %200 : vector<1x16x16xf32> to vector<16x16xf32>
    %c1_69 = arith.constant 1 : index
    %c0_70 = arith.constant 0 : index
    %c0_71 = arith.constant 0 : index
    %202 = vector.load %arg6[%c1_69, %c0_70, %c0_71] : memref<2x16x128xf32, #tpu.memory_space<vmem>>, vector<1x16x128xf32>
    %203 = vector.shape_cast %202 : vector<1x16x128xf32> to vector<16x128xf32>
    %204 = vector.extract_strided_slice %203 {offsets = [0, 0], sizes = [1, 128], strides = [1, 1]} : vector<16x128xf32> to vector<1x128xf32>
    %205 = vector.shape_cast %204 : vector<1x128xf32> to vector<128xf32>
    %206 = vector.extract_strided_slice %203 {offsets = [1, 0], sizes = [1, 128], strides = [1, 1]} : vector<16x128xf32> to vector<1x128xf32>
    %207 = vector.shape_cast %206 : vector<1x128xf32> to vector<128xf32>
    %cst_72 = arith.constant dense<0.000000e+00> : vector<16xf32>
    %208 = vector.multi_reduction <add>, %199, %cst_72 [1] : vector<16x128xf32> to vector<16xf32>
    %209 = vector.shape_cast %208 : vector<16xf32> to vector<16x1xf32>
    %cst_73 = arith.constant 3.125000e-02 : f32
    %210 = vector.broadcast %cst_73 : f32 to vector<16x1xf32>
    %211 = arith.mulf %209, %210 : vector<16x1xf32>
    %212 = arith.mulf %199, %199 : vector<16x128xf32>
    %cst_74 = arith.constant dense<0.000000e+00> : vector<16xf32>
    %213 = vector.multi_reduction <add>, %212, %cst_74 [1] : vector<16x128xf32> to vector<16xf32>
    %214 = vector.shape_cast %213 : vector<16xf32> to vector<16x1xf32>
    %cst_75 = arith.constant 3.125000e-02 : f32
    %215 = vector.broadcast %cst_75 : f32 to vector<16x1xf32>
    %216 = arith.mulf %214, %215 : vector<16x1xf32>
    %217 = arith.mulf %211, %211 : vector<16x1xf32>
    %218 = arith.subf %216, %217 : vector<16x1xf32>
    %219 = vector.broadcast %211 : vector<16x1xf32> to vector<16x128xf32>
    %220 = arith.subf %199, %219 : vector<16x128xf32>
    %cst_76 = arith.constant 9.99999996E-13 : f32
    %221 = vector.broadcast %cst_76 : f32 to vector<16x1xf32>
    %222 = arith.addf %218, %221 : vector<16x1xf32>
    %223 = math.rsqrt %222 : vector<16x1xf32>
    %224 = vector.broadcast %223 : vector<16x1xf32> to vector<16x128xf32>
    %225 = arith.mulf %220, %224 : vector<16x128xf32>
    %226 = vector.shape_cast %205 : vector<128xf32> to vector<1x128xf32>
    %227 = vector.broadcast %226 : vector<1x128xf32> to vector<16x128xf32>
    %228 = arith.mulf %225, %227 : vector<16x128xf32>
    %229 = vector.shape_cast %207 : vector<128xf32> to vector<1x128xf32>
    %230 = vector.broadcast %229 : vector<1x128xf32> to vector<16x128xf32>
    %231 = arith.addf %228, %230 : vector<16x128xf32>
    %c1_77 = arith.constant 1 : index
    %c0_78 = arith.constant 0 : index
    %c0_79 = arith.constant 0 : index
    %232 = vector.load %arg3[%c1_77, %c0_78, %c0_79] : memref<2x128x768xf32, #tpu.memory_space<vmem>>, vector<1x128x768xf32>
    %233 = vector.shape_cast %232 : vector<1x128x768xf32> to vector<128x768xf32>
    %cst_80 = arith.constant dense<0.000000e+00> : vector<16x768xf32>
    %234 = tpu.matmul %231, %233, %cst_80 {dimension_numbers = #tpu.dot_dimension_numbers<[1], [0], [0], [1], [0, 0, 1, 1], [], []>} : vector<16x128xf32>, vector<128x768xf32>, vector<16x768xf32> -> vector<16x768xf32>
    %c1_81 = arith.constant 1 : index
    %c0_82 = arith.constant 0 : index
    %c0_83 = arith.constant 0 : index
    %235 = vector.load %arg4[%c1_81, %c0_82, %c0_83] : memref<2x1x768xf32, #tpu.memory_space<vmem>>, vector<1x1x768xf32>
    %236 = vector.shape_cast %235 : vector<1x1x768xf32> to vector<1x768xf32>
    %237 = vector.broadcast %236 : vector<1x768xf32> to vector<16x768xf32>
    %238 = arith.addf %234, %237 : vector<16x768xf32>
    %cst_84 = arith.constant 0.000000e+00 : f32
    %239 = vector.broadcast %cst_84 : f32 to vector<16x128xf32>
    %240 = vector.extract_strided_slice %238 {offsets = [0, 0], sizes = [16, 128], strides = [1, 1]} : vector<16x768xf32> to vector<16x128xf32>
    %241 = vector.extract_strided_slice %238 {offsets = [0, 256], sizes = [16, 128], strides = [1, 1]} : vector<16x768xf32> to vector<16x128xf32>
    %242 = vector.extract_strided_slice %238 {offsets = [0, 512], sizes = [16, 128], strides = [1, 1]} : vector<16x768xf32> to vector<16x128xf32>
    %cst_85 = arith.constant dense<0.000000e+00> : vector<16x16xf32>
    %243 = tpu.matmul %240, %241, %cst_85 {dimension_numbers = #tpu.dot_dimension_numbers<[1], [1], [0], [0], [0, 0, 1, 0], [], []>} : vector<16x128xf32>, vector<16x128xf32>, vector<16x16xf32> -> vector<16x16xf32>
    %cst_86 = arith.constant 2.500000e-01 : f32
    %244 = vector.broadcast %cst_86 : f32 to vector<16x16xf32>
    %245 = arith.mulf %243, %244 : vector<16x16xf32>
    %246 = arith.addf %245, %201 : vector<16x16xf32>
    %cst_87 = arith.constant dense<0xFF800000> : vector<16xf32>
    %247 = vector.multi_reduction <maximumf>, %246, %cst_87 [1] : vector<16x16xf32> to vector<16xf32>
    %248 = vector.shape_cast %247 : vector<16xf32> to vector<16x1xf32>
    %249 = vector.broadcast %248 : vector<16x1xf32> to vector<16x16xf32>
    %250 = arith.subf %246, %249 : vector<16x16xf32>
    %251 = math.exp %250 : vector<16x16xf32>
    %cst_88 = arith.constant dense<0.000000e+00> : vector<16xf32>
    %252 = vector.multi_reduction <add>, %251, %cst_88 [1] : vector<16x16xf32> to vector<16xf32>
    %253 = vector.shape_cast %252 : vector<16xf32> to vector<16x1xf32>
    %254 = tpu.reciprocal %253 {approx = true} : vector<16x1xf32> -> vector<16x1xf32>
    %255 = vector.broadcast %254 : vector<16x1xf32> to vector<16x16xf32>
    %256 = arith.mulf %251, %255 : vector<16x16xf32>
    %cst_89 = arith.constant dense<0.000000e+00> : vector<16x128xf32>
    %257 = tpu.matmul %256, %242, %cst_89 {dimension_numbers = #tpu.dot_dimension_numbers<[1], [0], [0], [1], [0, 0, 1, 1], [], []>} : vector<16x16xf32>, vector<16x128xf32>, vector<16x128xf32> -> vector<16x128xf32>
    %c6 = arith.constant 6 : index
    %c0_90 = arith.constant 0 : index
    %c0_91 = arith.constant 0 : index
    %258 = vector.load %arg5[%c6, %c0_90, %c0_91] : memref<12x128x128xf32, #tpu.memory_space<vmem>>, vector<1x128x128xf32>
    %259 = vector.shape_cast %258 : vector<1x128x128xf32> to vector<128x128xf32>
    %cst_92 = arith.constant dense<0.000000e+00> : vector<16x128xf32>
    %260 = tpu.matmul %257, %259, %cst_92 {dimension_numbers = #tpu.dot_dimension_numbers<[1], [0], [0], [1], [0, 0, 1, 1], [], []>} : vector<16x128xf32>, vector<128x128xf32>, vector<16x128xf32> -> vector<16x128xf32>
    %261 = arith.addf %239, %260 : vector<16x128xf32>
    %262 = vector.extract_strided_slice %238 {offsets = [0, 128], sizes = [16, 128], strides = [1, 1]} : vector<16x768xf32> to vector<16x128xf32>
    %263 = vector.extract_strided_slice %238 {offsets = [0, 384], sizes = [16, 128], strides = [1, 1]} : vector<16x768xf32> to vector<16x128xf32>
    %264 = vector.extract_strided_slice %238 {offsets = [0, 640], sizes = [16, 128], strides = [1, 1]} : vector<16x768xf32> to vector<16x128xf32>
    %cst_93 = arith.constant dense<0.000000e+00> : vector<16x16xf32>
    %265 = tpu.matmul %262, %263, %cst_93 {dimension_numbers = #tpu.dot_dimension_numbers<[1], [1], [0], [0], [0, 0, 1, 0], [], []>} : vector<16x128xf32>, vector<16x128xf32>, vector<16x16xf32> -> vector<16x16xf32>
    %cst_94 = arith.constant 2.500000e-01 : f32
    %266 = vector.broadcast %cst_94 : f32 to vector<16x16xf32>
    %267 = arith.mulf %265, %266 : vector<16x16xf32>
    %268 = arith.addf %267, %201 : vector<16x16xf32>
    %cst_95 = arith.constant dense<0xFF800000> : vector<16xf32>
    %269 = vector.multi_reduction <maximumf>, %268, %cst_95 [1] : vector<16x16xf32> to vector<16xf32>
    %270 = vector.shape_cast %269 : vector<16xf32> to vector<16x1xf32>
    %271 = vector.broadcast %270 : vector<16x1xf32> to vector<16x16xf32>
    %272 = arith.subf %268, %271 : vector<16x16xf32>
    %273 = math.exp %272 : vector<16x16xf32>
    %cst_96 = arith.constant dense<0.000000e+00> : vector<16xf32>
    %274 = vector.multi_reduction <add>, %273, %cst_96 [1] : vector<16x16xf32> to vector<16xf32>
    %275 = vector.shape_cast %274 : vector<16xf32> to vector<16x1xf32>
    %276 = tpu.reciprocal %275 {approx = true} : vector<16x1xf32> -> vector<16x1xf32>
    %277 = vector.broadcast %276 : vector<16x1xf32> to vector<16x16xf32>
    %278 = arith.mulf %273, %277 : vector<16x16xf32>
    %cst_97 = arith.constant dense<0.000000e+00> : vector<16x128xf32>
    %279 = tpu.matmul %278, %264, %cst_97 {dimension_numbers = #tpu.dot_dimension_numbers<[1], [0], [0], [1], [0, 0, 1, 1], [], []>} : vector<16x16xf32>, vector<16x128xf32>, vector<16x128xf32> -> vector<16x128xf32>
    %c7 = arith.constant 7 : index
    %c0_98 = arith.constant 0 : index
    %c0_99 = arith.constant 0 : index
    %280 = vector.load %arg5[%c7, %c0_98, %c0_99] : memref<12x128x128xf32, #tpu.memory_space<vmem>>, vector<1x128x128xf32>
    %281 = vector.shape_cast %280 : vector<1x128x128xf32> to vector<128x128xf32>
    %cst_100 = arith.constant dense<0.000000e+00> : vector<16x128xf32>
    %282 = tpu.matmul %279, %281, %cst_100 {dimension_numbers = #tpu.dot_dimension_numbers<[1], [0], [0], [1], [0, 0, 1, 1], [], []>} : vector<16x128xf32>, vector<128x128xf32>, vector<16x128xf32> -> vector<16x128xf32>
    %283 = arith.addf %261, %282 : vector<16x128xf32>
    %284 = vector.extract_strided_slice %203 {offsets = [2, 0], sizes = [1, 128], strides = [1, 1]} : vector<16x128xf32> to vector<1x128xf32>
    %285 = vector.shape_cast %284 : vector<1x128xf32> to vector<128xf32>
    %286 = vector.shape_cast %285 : vector<128xf32> to vector<1x128xf32>
    %287 = vector.broadcast %286 : vector<1x128xf32> to vector<16x128xf32>
    %288 = arith.addf %283, %287 : vector<16x128xf32>
    %289 = arith.addf %231, %288 : vector<16x128xf32>
    %290 = vector.extract_strided_slice %203 {offsets = [3, 0], sizes = [1, 128], strides = [1, 1]} : vector<16x128xf32> to vector<1x128xf32>
    %291 = vector.shape_cast %290 : vector<1x128xf32> to vector<128xf32>
    %292 = vector.extract_strided_slice %203 {offsets = [4, 0], sizes = [1, 128], strides = [1, 1]} : vector<16x128xf32> to vector<1x128xf32>
    %293 = vector.shape_cast %292 : vector<1x128xf32> to vector<128xf32>
    %cst_101 = arith.constant dense<0.000000e+00> : vector<16xf32>
    %294 = vector.multi_reduction <add>, %289, %cst_101 [1] : vector<16x128xf32> to vector<16xf32>
    %295 = vector.shape_cast %294 : vector<16xf32> to vector<16x1xf32>
    %cst_102 = arith.constant 3.125000e-02 : f32
    %296 = vector.broadcast %cst_102 : f32 to vector<16x1xf32>
    %297 = arith.mulf %295, %296 : vector<16x1xf32>
    %298 = arith.mulf %289, %289 : vector<16x128xf32>
    %cst_103 = arith.constant dense<0.000000e+00> : vector<16xf32>
    %299 = vector.multi_reduction <add>, %298, %cst_103 [1] : vector<16x128xf32> to vector<16xf32>
    %300 = vector.shape_cast %299 : vector<16xf32> to vector<16x1xf32>
    %cst_104 = arith.constant 3.125000e-02 : f32
    %301 = vector.broadcast %cst_104 : f32 to vector<16x1xf32>
    %302 = arith.mulf %300, %301 : vector<16x1xf32>
    %303 = arith.mulf %297, %297 : vector<16x1xf32>
    %304 = arith.subf %302, %303 : vector<16x1xf32>
    %305 = vector.broadcast %297 : vector<16x1xf32> to vector<16x128xf32>
    %306 = arith.subf %289, %305 : vector<16x128xf32>
    %cst_105 = arith.constant 9.99999996E-13 : f32
    %307 = vector.broadcast %cst_105 : f32 to vector<16x1xf32>
    %308 = arith.addf %304, %307 : vector<16x1xf32>
    %309 = math.rsqrt %308 : vector<16x1xf32>
    %310 = vector.broadcast %309 : vector<16x1xf32> to vector<16x128xf32>
    %311 = arith.mulf %306, %310 : vector<16x128xf32>
    %312 = vector.shape_cast %291 : vector<128xf32> to vector<1x128xf32>
    %313 = vector.broadcast %312 : vector<1x128xf32> to vector<16x128xf32>
    %314 = arith.mulf %311, %313 : vector<16x128xf32>
    %315 = vector.shape_cast %293 : vector<128xf32> to vector<1x128xf32>
    %316 = vector.broadcast %315 : vector<1x128xf32> to vector<16x128xf32>
    %317 = arith.addf %314, %316 : vector<16x128xf32>
    %c8 = arith.constant 8 : index
    %c0_106 = arith.constant 0 : index
    %c0_107 = arith.constant 0 : index
    %318 = vector.load %arg5[%c8, %c0_106, %c0_107] : memref<12x128x128xf32, #tpu.memory_space<vmem>>, vector<1x128x128xf32>
    %319 = vector.shape_cast %318 : vector<1x128x128xf32> to vector<128x128xf32>
    %cst_108 = arith.constant dense<0.000000e+00> : vector<16x128xf32>
    %320 = tpu.matmul %317, %319, %cst_108 {dimension_numbers = #tpu.dot_dimension_numbers<[1], [0], [0], [1], [0, 0, 1, 1], [], []>} : vector<16x128xf32>, vector<128x128xf32>, vector<16x128xf32> -> vector<16x128xf32>
    %321 = vector.extract_strided_slice %203 {offsets = [5, 0], sizes = [1, 128], strides = [1, 1]} : vector<16x128xf32> to vector<1x128xf32>
    %322 = vector.shape_cast %321 : vector<1x128xf32> to vector<128xf32>
    %323 = vector.shape_cast %322 : vector<128xf32> to vector<1x128xf32>
    %324 = vector.broadcast %323 : vector<1x128xf32> to vector<16x128xf32>
    %325 = arith.addf %320, %324 : vector<16x128xf32>
    %326 = arith.mulf %325, %325 : vector<16x128xf32>
    %327 = arith.mulf %325, %326 : vector<16x128xf32>
    %cst_109 = arith.constant 4.471500e-02 : f32
    %328 = vector.broadcast %cst_109 : f32 to vector<16x128xf32>
    %329 = arith.mulf %328, %327 : vector<16x128xf32>
    %330 = arith.addf %325, %329 : vector<16x128xf32>
    %cst_110 = arith.constant 0.797884583 : f32
    %331 = vector.broadcast %cst_110 : f32 to vector<16x128xf32>
    %332 = arith.mulf %331, %330 : vector<16x128xf32>
    %333 = math.tanh %332 : vector<16x128xf32>
    %cst_111 = arith.constant 1.000000e+00 : f32
    %334 = vector.broadcast %cst_111 : f32 to vector<16x128xf32>
    %335 = arith.addf %334, %333 : vector<16x128xf32>
    %cst_112 = arith.constant 5.000000e-01 : f32
    %336 = vector.broadcast %cst_112 : f32 to vector<16x128xf32>
    %337 = arith.mulf %336, %335 : vector<16x128xf32>
    %338 = arith.mulf %325, %337 : vector<16x128xf32>
    %c9 = arith.constant 9 : index
    %c0_113 = arith.constant 0 : index
    %c0_114 = arith.constant 0 : index
    %339 = vector.load %arg5[%c9, %c0_113, %c0_114] : memref<12x128x128xf32, #tpu.memory_space<vmem>>, vector<1x128x128xf32>
    %340 = vector.shape_cast %339 : vector<1x128x128xf32> to vector<128x128xf32>
    %cst_115 = arith.constant dense<0.000000e+00> : vector<16x128xf32>
    %341 = tpu.matmul %338, %340, %cst_115 {dimension_numbers = #tpu.dot_dimension_numbers<[1], [0], [0], [1], [0, 0, 1, 1], [], []>} : vector<16x128xf32>, vector<128x128xf32>, vector<16x128xf32> -> vector<16x128xf32>
    %342 = vector.extract_strided_slice %203 {offsets = [6, 0], sizes = [1, 128], strides = [1, 1]} : vector<16x128xf32> to vector<1x128xf32>
    %343 = vector.shape_cast %342 : vector<1x128xf32> to vector<128xf32>
    %344 = vector.shape_cast %343 : vector<128xf32> to vector<1x128xf32>
    %345 = vector.broadcast %344 : vector<1x128xf32> to vector<16x128xf32>
    %346 = arith.addf %341, %345 : vector<16x128xf32>
    %347 = arith.addf %317, %346 : vector<16x128xf32>
    %348 = vector.extract_strided_slice %203 {offsets = [7, 0], sizes = [1, 128], strides = [1, 1]} : vector<16x128xf32> to vector<1x128xf32>
    %349 = vector.shape_cast %348 : vector<1x128xf32> to vector<128xf32>
    %350 = vector.extract_strided_slice %203 {offsets = [8, 0], sizes = [1, 128], strides = [1, 1]} : vector<16x128xf32> to vector<1x128xf32>
    %351 = vector.shape_cast %350 : vector<1x128xf32> to vector<128xf32>
    %cst_116 = arith.constant dense<0.000000e+00> : vector<16xf32>
    %352 = vector.multi_reduction <add>, %347, %cst_116 [1] : vector<16x128xf32> to vector<16xf32>
    %353 = vector.shape_cast %352 : vector<16xf32> to vector<16x1xf32>
    %cst_117 = arith.constant 3.125000e-02 : f32
    %354 = vector.broadcast %cst_117 : f32 to vector<16x1xf32>
    %355 = arith.mulf %353, %354 : vector<16x1xf32>
    %356 = arith.mulf %347, %347 : vector<16x128xf32>
    %cst_118 = arith.constant dense<0.000000e+00> : vector<16xf32>
    %357 = vector.multi_reduction <add>, %356, %cst_118 [1] : vector<16x128xf32> to vector<16xf32>
    %358 = vector.shape_cast %357 : vector<16xf32> to vector<16x1xf32>
    %cst_119 = arith.constant 3.125000e-02 : f32
    %359 = vector.broadcast %cst_119 : f32 to vector<16x1xf32>
    %360 = arith.mulf %358, %359 : vector<16x1xf32>
    %361 = arith.mulf %355, %355 : vector<16x1xf32>
    %362 = arith.subf %360, %361 : vector<16x1xf32>
    %363 = vector.broadcast %355 : vector<16x1xf32> to vector<16x128xf32>
    %364 = arith.subf %347, %363 : vector<16x128xf32>
    %cst_120 = arith.constant 9.99999996E-13 : f32
    %365 = vector.broadcast %cst_120 : f32 to vector<16x1xf32>
    %366 = arith.addf %362, %365 : vector<16x1xf32>
    %367 = math.rsqrt %366 : vector<16x1xf32>
    %368 = vector.broadcast %367 : vector<16x1xf32> to vector<16x128xf32>
    %369 = arith.mulf %364, %368 : vector<16x128xf32>
    %370 = vector.shape_cast %349 : vector<128xf32> to vector<1x128xf32>
    %371 = vector.broadcast %370 : vector<1x128xf32> to vector<16x128xf32>
    %372 = arith.mulf %369, %371 : vector<16x128xf32>
    %373 = vector.shape_cast %351 : vector<128xf32> to vector<1x128xf32>
    %374 = vector.broadcast %373 : vector<1x128xf32> to vector<16x128xf32>
    %375 = arith.addf %372, %374 : vector<16x128xf32>
    %376 = vector.extract_strided_slice %375 {offsets = [0, 0], sizes = [1, 128], strides = [1, 1]} : vector<16x128xf32> to vector<1x128xf32>
    %377 = vector.extract_strided_slice %375 {offsets = [8, 0], sizes = [1, 128], strides = [1, 1]} : vector<16x128xf32> to vector<1x128xf32>
    %378 = tpu.concatenate %376, %377 in 0 : vector<1x128xf32>, vector<1x128xf32> -> vector<2x128xf32>
    %c10 = arith.constant 10 : index
    %c0_121 = arith.constant 0 : index
    %c0_122 = arith.constant 0 : index
    %379 = vector.load %arg5[%c10, %c0_121, %c0_122] : memref<12x128x128xf32, #tpu.memory_space<vmem>>, vector<1x128x128xf32>
    %380 = vector.shape_cast %379 : vector<1x128x128xf32> to vector<128x128xf32>
    %cst_123 = arith.constant dense<0.000000e+00> : vector<2x128xf32>
    %381 = tpu.matmul %378, %380, %cst_123 {dimension_numbers = #tpu.dot_dimension_numbers<[1], [0], [0], [1], [0, 0, 1, 1], [], []>} : vector<2x128xf32>, vector<128x128xf32>, vector<2x128xf32> -> vector<2x128xf32>
    %382 = vector.extract_strided_slice %203 {offsets = [9, 0], sizes = [1, 128], strides = [1, 1]} : vector<16x128xf32> to vector<1x128xf32>
    %383 = vector.shape_cast %382 : vector<1x128xf32> to vector<128xf32>
    %384 = vector.shape_cast %383 : vector<128xf32> to vector<1x128xf32>
    %385 = vector.broadcast %384 : vector<1x128xf32> to vector<2x128xf32>
    %386 = arith.addf %381, %385 : vector<2x128xf32>
    %387 = math.tanh %386 : vector<2x128xf32>
    %c11 = arith.constant 11 : index
    %c0_124 = arith.constant 0 : index
    %c0_125 = arith.constant 0 : index
    %388 = vector.load %arg5[%c11, %c0_124, %c0_125] : memref<12x128x128xf32, #tpu.memory_space<vmem>>, vector<1x128x128xf32>
    %389 = vector.shape_cast %388 : vector<1x128x128xf32> to vector<128x128xf32>
    %cst_126 = arith.constant dense<0.000000e+00> : vector<2x128xf32>
    %390 = tpu.matmul %387, %389, %cst_126 {dimension_numbers = #tpu.dot_dimension_numbers<[1], [0], [0], [1], [0, 0, 1, 1], [], []>} : vector<2x128xf32>, vector<128x128xf32>, vector<2x128xf32> -> vector<2x128xf32>
    %391 = vector.extract_strided_slice %203 {offsets = [10, 0], sizes = [1, 128], strides = [1, 1]} : vector<16x128xf32> to vector<1x128xf32>
    %392 = vector.shape_cast %391 : vector<1x128xf32> to vector<128xf32>
    %393 = vector.shape_cast %392 : vector<128xf32> to vector<1x128xf32>
    %394 = vector.broadcast %393 : vector<1x128xf32> to vector<2x128xf32>
    %395 = arith.addf %390, %394 : vector<2x128xf32>
    %396 = arith.mulf %197, %395 : vector<2x128xf32>
    %cst_127 = arith.constant dense<0.000000e+00> : vector<2xf32>
    %397 = vector.multi_reduction <add>, %396, %cst_127 [1] : vector<2x128xf32> to vector<2xf32>
    %398 = vector.shape_cast %397 : vector<2xf32> to vector<2x1xf32>
    %399 = arith.mulf %197, %197 : vector<2x128xf32>
    %cst_128 = arith.constant dense<0.000000e+00> : vector<2xf32>
    %400 = vector.multi_reduction <add>, %399, %cst_128 [1] : vector<2x128xf32> to vector<2xf32>
    %401 = vector.shape_cast %400 : vector<2xf32> to vector<2x1xf32>
    %402 = math.sqrt %401 : vector<2x1xf32>
    %403 = arith.mulf %395, %395 : vector<2x128xf32>
    %cst_129 = arith.constant dense<0.000000e+00> : vector<2xf32>
    %404 = vector.multi_reduction <add>, %403, %cst_129 [1] : vector<2x128xf32> to vector<2xf32>
    %405 = vector.shape_cast %404 : vector<2xf32> to vector<2x1xf32>
    %406 = math.sqrt %405 : vector<2x1xf32>
    %cst_130 = arith.constant 9.99999993E-9 : f32
    %407 = vector.broadcast %cst_130 : f32 to vector<2x1xf32>
    %408 = arith.maximumf %402, %407 : vector<2x1xf32>
    %cst_131 = arith.constant 9.99999993E-9 : f32
    %409 = vector.broadcast %cst_131 : f32 to vector<2x1xf32>
    %410 = arith.maximumf %406, %409 : vector<2x1xf32>
    %411 = arith.mulf %408, %410 : vector<2x1xf32>
    %412 = tpu.reciprocal %411 {approx = true} : vector<2x1xf32> -> vector<2x1xf32>
    %413 = arith.mulf %398, %412 : vector<2x1xf32>
    %c0_132 = arith.constant 0 : index
    %c0_133 = arith.constant 0 : index
    %414 = vector.load %arg7[%c0_132, %c0_133] : memref<2x1xf32, #tpu.memory_space<vmem>>, vector<2x1xf32>
    tpu.vector_store %arg7[%c0_132, %c0_133], %413 {strides = array<i32>} : memref<2x1xf32, #tpu.memory_space<vmem>>, vector<2x1xf32>,
    return
  }
  func.func @transform_0(%arg0: i32) -> (i32, i32, i32) {
    %c0_i32 = arith.constant 0 : i32
    %c0_i32_0 = arith.constant 0 : i32
    %c0_i32_1 = arith.constant 0 : i32
    %c0_i32_2 = arith.constant 0 : i32
    return %c0_i32, %c0_i32_0, %c0_i32_1 : i32, i32, i32
  }
  func.func @transform_1(%arg0: i32) -> (i32, i32, i32) {
    %c0_i32 = arith.constant 0 : i32
    %c0_i32_0 = arith.constant 0 : i32
    %c0_i32_1 = arith.constant 0 : i32
    %c0_i32_2 = arith.constant 0 : i32
    return %c0_i32, %c0_i32_0, %c0_i32_1 : i32, i32, i32
  }
  func.func @transform_2(%arg0: i32) -> (i32, i32, i32) {
    %c0_i32 = arith.constant 0 : i32
    %c0_i32_0 = arith.constant 0 : i32
    %c0_i32_1 = arith.constant 0 : i32
    %c0_i32_2 = arith.constant 0 : i32
    return %c0_i32, %c0_i32_0, %c0_i32_1 : i32, i32, i32
  }
  func.func @transform_3(%arg0: i32) -> (i32, i32, i32) {
    %c0_i32 = arith.constant 0 : i32
    %c0_i32_0 = arith.constant 0 : i32
    %c0_i32_1 = arith.constant 0 : i32
    %c0_i32_2 = arith.constant 0 : i32
    return %c0_i32, %c0_i32_0, %c0_i32_1 : i32, i32, i32
  }
  func.func @transform_4(%arg0: i32) -> (i32, i32, i32) {
    %c0_i32 = arith.constant 0 : i32
    %c0_i32_0 = arith.constant 0 : i32
    %c0_i32_1 = arith.constant 0 : i32
    %c0_i32_2 = arith.constant 0 : i32
    return %c0_i32, %c0_i32_0, %c0_i32_1 : i32, i32, i32
  }
  func.func @transform_5(%arg0: i32) -> (i32, i32, i32) {
    %c0_i32 = arith.constant 0 : i32
    %c0_i32_0 = arith.constant 0 : i32
    %c0_i32_1 = arith.constant 0 : i32
    %c0_i32_2 = arith.constant 0 : i32
    return %c0_i32, %c0_i32_0, %c0_i32_1 : i32, i32, i32
  }
  func.func @transform_6(%arg0: i32) -> (i32, i32) {
    %c0_i32 = arith.constant 0 : i32
    %c0_i32_0 = arith.constant 0 : i32
    %c0_i32_1 = arith.constant 0 : i32
    return %c0_i32, %c0_i32_0 : i32, i32
  }
}

</mosaic_0001>

<llo_original>
// kernel: _two_tower_similarity_impl.1
$region0: #{_two_tower_similarity_impl.1}
  #allocation0 [shape = 'u32[]', space=smem, size = 0x4, offset = 0x4, fixed_abs, tag = 'smem constant byte address 0x4 - core index']
  #allocation1 [shape = 'u32[144,128]{1,0:T(1,128)}', space=vmem, size = 0x12000, scoped, tag = 'internal scratch']
  %s0 = inlined_call_operand.vmem [shape: f32[2,16,128], index: 0, kind: input, shape index: {}]
  %s1 = inlined_call_operand.vmem [shape: f32[2,16,16], index: 1, kind: input, shape index: {}]
  %s2 = inlined_call_operand.hbm [shape: f32[2,128,768], index: 2, kind: input, shape index: {}]
  %s3 = inlined_call_operand.vmem [shape: f32[2,1,768], index: 3, kind: input, shape index: {}]
  %s4 = inlined_call_operand.hbm [shape: f32[12,128,128], index: 4, kind: input, shape index: {}]
  %s5 = inlined_call_operand.vmem [shape: f32[2,16,128], index: 5, kind: input, shape index: {}]
  %s6 = inlined_call_operand.vmem [shape: f32[2,1], index: 6, kind: output, shape index: {}]
  %s7 = sld [smem:[#allocation0]]
  $region42: #{_two_tower_similarity_impl.1} parent=0
    _
  %s9 = ssub.s32 1, %s7
  %s10 = scalar_select 0, %s9, %s7
  $region1: #{_two_tower_similarity_impl.1} parent=0
    #allocation2 [shape = 'u8[786432]{0}', space=vmem, size = 0xc0000, scoped, tag = 'input window, operand 2, single buffered']
    #allocation3 [shape = 's32[1]{0}', space=sflag, size = 0x4, scoped, tag = 'scoped memory for _two_tower_similarity_impl.1']
    #allocation4 [shape = 'u8[786432]{0}', space=vmem, size = 0xc0000, scoped, tag = 'input window, operand 4, single buffered']
    #allocation5 [shape = 's32[1]{0}', space=sflag, size = 0x4, scoped, tag = 'scoped memory for _two_tower_similarity_impl.1']
    %11 = vsyncpa [#allocation3], 0
    %12 = vsyncpa [#allocation5], 0
    // Predicated region
    $region2: #{_two_tower_similarity_impl.1} parent=1 // pred_check
      _
    $region3: #{_two_tower_similarity_impl.1} parent=1 // pred_check_branch
      %14 = sbr.rel (0) target = $region5
    $region4: #{_two_tower_similarity_impl.1} parent=1 // pred_region
      _
    $region5: #{_two_tower_similarity_impl.1} parent=1 // pred_fallthru
      _
    // Predicated region
    $region6: #{_two_tower_similarity_impl.1} parent=1 // pred_check
      _
    $region7: #{_two_tower_similarity_impl.1} parent=1 // pred_check_branch
      %16 = sbr.rel (0) target = $region9
    $region8: #{_two_tower_similarity_impl.1} parent=1 // pred_region
      _
    $region9: #{_two_tower_similarity_impl.1} parent=1 // pred_fallthru
      _
    // Predicated region
    $region10: #{_two_tower_similarity_impl.1} parent=1 // pred_check
      _
    $region11: #{_two_tower_similarity_impl.1} parent=1 // pred_check_branch
      %18 = sbr.rel (0) target = $region13
    $region12: #{_two_tower_similarity_impl.1} parent=1 // pred_region
      %s20 = ssub.s32 24576, 24576
      %21 = vsyncadd [#allocation3], %s20
      %s22 = sshll.u32 [#allocation2], 4
      %s23 = int_to_ptr.vmem [resolvable:$true] %s22
      %28 = dma.hbm_to_vmem [thread:$0]  %s2, 24576, %s23, [#allocation3], 768, 768, 48
    $region13: #{_two_tower_similarity_impl.1} parent=1 // pred_fallthru
      _
    // Predicated region
    $region14: #{_two_tower_similarity_impl.1} parent=1 // pred_check
      _
    $region15: #{_two_tower_similarity_impl.1} parent=1 // pred_check_branch
      %30 = sbr.rel (0) target = $region17
    $region16: #{_two_tower_similarity_impl.1} parent=1 // pred_region
      _
    $region17: #{_two_tower_similarity_impl.1} parent=1 // pred_fallthru
      _
    // Predicated region
    $region18: #{_two_tower_similarity_impl.1} parent=1 // pred_check
      _
    $region19: #{_two_tower_similarity_impl.1} parent=1 // pred_check_branch
      %32 = sbr.rel (0) target = $region21
    $region20: #{_two_tower_similarity_impl.1} parent=1 // pred_region
      %s34 = ssub.s32 24576, 24576
      %35 = vsyncadd [#allocation5], %s34
      %s36 = sshll.u32 [#allocation4], 4
      %s37 = int_to_ptr.vmem [resolvable:$true] %s36
      %42 = dma.hbm_to_vmem [thread:$0]  %s4, 24576, %s37, [#allocation5], 128, 128, 8
    $region21: #{_two_tower_similarity_impl.1} parent=1 // pred_fallthru
      _
    // Predicated region
    $region22: #{_two_tower_similarity_impl.1} parent=1 // pred_check
      _
    $region23: #{_two_tower_similarity_impl.1} parent=1 // pred_check_branch
      %44 = sbr.rel (0) target = $region25
    $region24: #{_two_tower_similarity_impl.1} parent=1 // pred_region
      _
    $region25: #{_two_tower_similarity_impl.1} parent=1 // pred_fallthru
      _
    // Predicated region
    $region26: #{_two_tower_similarity_impl.1} parent=1 // pred_check
      _
    $region27: #{_two_tower_similarity_impl.1} parent=1 // pred_check_branch
      %46 = sbr.rel (0) target = $region29
    $region28: #{_two_tower_similarity_impl.1} parent=1 // pred_region
      %47 = dma.done [#allocation3], 24576
    $region29: #{_two_tower_similarity_impl.1} parent=1 // pred_fallthru
      _
    // Predicated region
    $region30: #{_two_tower_similarity_impl.1} parent=1 // pred_check
      _
    $region31: #{_two_tower_similarity_impl.1} parent=1 // pred_check_branch
      %49 = sbr.rel (0) target = $region33
    $region32: #{_two_tower_similarity_impl.1} parent=1 // pred_region
      %50 = dma.done [#allocation5], 24576
    $region33: #{_two_tower_similarity_impl.1} parent=1 // pred_fallthru
      _
    %v51 = vld [vmem:[%s0] sm:$0xff]
    %v52 = vld [vmem:[%s0 + $0x8] sm:$0xff]
    %v53 = vld [vmem:[%s1] sm:$0xff]
    %v54 = vld [vmem:[%s1 + $0x8] sm:$0xff]
    %v55 = vld [vmem:[%s5] sm:$0xff]
    %v56 = vld [vmem:[%s5 + $0x8] sm:$0xff]
    %57 = vadd.xlane.f32.xlu0 %v51
    %v58 = vpop.xlane.xlu0 %57
    %59 = vadd.xlane.f32.xlu0 %v52
    %v60 = vpop.xlane.xlu0 %59
    %v61 = vmul.f32 %v58, 0.03125
    %v62 = vmul.f32 %v60, 0.03125
    %v63 = vmul.f32 %v51, %v51
    %v64 = vmul.f32 %v52, %v52
    %65 = vadd.xlane.f32.xlu0 %v63
    %v66 = vpop.xlane.xlu0 %65
    %67 = vadd.xlane.f32.xlu0 %v64
    %v68 = vpop.xlane.xlu0 %67
    %v69 = vmul.f32 %v66, 0.03125
    %v70 = vmul.f32 %v68, 0.03125
    %v71 = vmul.f32 %v61, %v61
    %v72 = vmul.f32 %v62, %v62
    %v73 = vsub.f32 %v69, %v71
    %v74 = vsub.f32 %v70, %v72
    %v75 = vsub.f32 %v51, %v61
    %v76 = vsub.f32 %v52, %v62
    %v77 = vadd.f32 %v73, 1e-12
    %v78 = vadd.f32 %v74, 1e-12
    %v79 = vrsqrt.pop %v77
    %v80 = vrsqrt.pop %v78
    %v81 = vmul.f32 %v75, %v79
    %v82 = vmul.f32 %v76, %v80
    %v83 = vlaneseq
    %v84 = vshrl.u32 %v83, 7
    %v85 = vsub.s32 0, %v84
    %v86 = vrot.slane %v55, %v85
    %v87 = vmul.f32 %v81, %v86
    %v88 = vmul.f32 %v82, %v86
    %v89 = vlaneseq
    %v90 = vshrl.u32 %v89, 7
    %v91 = vsub.s32 1, %v90
    %v92 = vrot.slane %v55, %v91
    %v93 = vadd.f32 %v87, %v92
    %v94 = vadd.f32 %v88, %v92
    %v95 = vld [vmem:[#allocation2] sm:$0xff]
    %v96 = vld [vmem:[#allocation2 + $0x8] sm:$0xff]
    %v97 = vld [vmem:[#allocation2 + $0x10] sm:$0xff]
    %v98 = vld [vmem:[#allocation2 + $0x18] sm:$0xff]
    %v99 = vld [vmem:[#allocation2 + $0x20] sm:$0xff]
    %v100 = vld [vmem:[#allocation2 + $0x28] sm:$0xff]
    %v101 = vld [vmem:[#allocation2 + $0x30] sm:$0xff]
    %v102 = vld [vmem:[#allocation2 + $0x38] sm:$0xff]
    %v103 = vld [vmem:[#allocation2 + $0x40] sm:$0xff]
    %v104 = vld [vmem:[#allocation2 + $0x48] sm:$0xff]
    %v105 = vld [vmem:[#allocation2 + $0x50] sm:$0xff]
    %v106 = vld [vmem:[#allocation2 + $0x58] sm:$0xff]
    %v107 = vld [vmem:[#allocation2 + $0x60] sm:$0xff]
    %v108 = vld [vmem:[#allocation2 + $0x68] sm:$0xff]
    %v109 = vld [vmem:[#allocation2 + $0x70] sm:$0xff]
    %v110 = vld [vmem:[#allocation2 + $0x78] sm:$0xff]
    %v111 = vld [vmem:[#allocation2 + $0x80] sm:$0xff]
    %v112 = vld [vmem:[#allocation2 + $0x88] sm:$0xff]
    %v113 = vld [vmem:[#allocation2 + $0x90] sm:$0xff]
    %v114 = vld [vmem:[#allocation2 + $0x98] sm:$0xff]
    %v115 = vld [vmem:[#allocation2 + $0xa0] sm:$0xff]
    %v116 = vld [vmem:[#allocation2 + $0xa8] sm:$0xff]
    %v117 = vld [vmem:[#allocation2 + $0xb0] sm:$0xff]
    %v118 = vld [vmem:[#allocation2 + $0xb8] sm:$0xff]
    %v119 = vld [vmem:[#allocation2 + $0xc0] sm:$0xff]
    %v120 = vld [vmem:[#allocation2 + $0xc8] sm:$0xff]
    %v121 = vld [vmem:[#allocation2 + $0xd0] sm:$0xff]
    %v122 = vld [vmem:[#allocation2 + $0xd8] sm:$0xff]
    %v123 = vld [vmem:[#allocation2 + $0xe0] sm:$0xff]
    %v124 = vld [vmem:[#allocation2 + $0xe8] sm:$0xff]
    %v125 = vld [vmem:[#allocation2 + $0xf0] sm:$0xff]
    %v126 = vld [vmem:[#allocation2 + $0xf8] sm:$0xff]
    %v127 = vld [vmem:[#allocation2 + $0x100] sm:$0xff]
    %v128 = vld [vmem:[#allocation2 + $0x108] sm:$0xff]
    %v129 = vld [vmem:[#allocation2 + $0x110] sm:$0xff]
    %v130 = vld [vmem:[#allocation2 + $0x118] sm:$0xff]
    %v131 = vld [vmem:[#allocation2 + $0x120] sm:$0xff]
    %v132 = vld [vmem:[#allocation2 + $0x128] sm:$0xff]
    %v133 = vld [vmem:[#allocation2 + $0x130] sm:$0xff]
    %v134 = vld [vmem:[#allocation2 + $0x138] sm:$0xff]
    %v135 = vld [vmem:[#allocation2 + $0x140] sm:$0xff]
    %v136 = vld [vmem:[#allocation2 + $0x148] sm:$0xff]
    %v137 = vld [vmem:[#allocation2 + $0x150] sm:$0xff]
    %v138 = vld [vmem:[#allocation2 + $0x158] sm:$0xff]
    %v139 = vld [vmem:[#allocation2 + $0x160] sm:$0xff]
    %v140 = vld [vmem:[#allocation2 + $0x168] sm:$0xff]
    %v141 = vld [vmem:[#allocation2 + $0x170] sm:$0xff]
    %v142 = vld [vmem:[#allocation2 + $0x178] sm:$0xff]
    %v143 = vld [vmem:[#allocation2 + $0x180] sm:$0xff]
    %v144 = vld [vmem:[#allocation2 + $0x188] sm:$0xff]
    %v145 = vld [vmem:[#allocation2 + $0x190] sm:$0xff]
    %v146 = vld [vmem:[#allocation2 + $0x198] sm:$0xff]
    %v147 = vld [vmem:[#allocation2 + $0x1a0] sm:$0xff]
    %v148 = vld [vmem:[#allocation2 + $0x1a8] sm:$0xff]
    %v149 = vld [vmem:[#allocation2 + $0x1b0] sm:$0xff]
    %v150 = vld [vmem:[#allocation2 + $0x1b8] sm:$0xff]
    %v151 = vld [vmem:[#allocation2 + $0x1c0] sm:$0xff]
    %v152 = vld [vmem:[#allocation2 + $0x1c8] sm:$0xff]
    %v153 = vld [vmem:[#allocation2 + $0x1d0] sm:$0xff]
    %v154 = vld [vmem:[#allocation2 + $0x1d8] sm:$0xff]
    %v155 = vld [vmem:[#allocation2 + $0x1e0] sm:$0xff]
    %v156 = vld [vmem:[#allocation2 + $0x1e8] sm:$0xff]
    %v157 = vld [vmem:[#allocation2 + $0x1f0] sm:$0xff]
    %v158 = vld [vmem:[#allocation2 + $0x1f8] sm:$0xff]
    %v159 = vld [vmem:[#allocation2 + $0x200] sm:$0xff]
    %v160 = vld [vmem:[#allocation2 + $0x208] sm:$0xff]
    %v161 = vld [vmem:[#allocation2 + $0x210] sm:$0xff]
    %v162 = vld [vmem:[#allocation2 + $0x218] sm:$0xff]
    %v163 = vld [vmem:[#allocation2 + $0x220] sm:$0xff]
    %v164 = vld [vmem:[#allocation2 + $0x228] sm:$0xff]
    %v165 = vld [vmem:[#allocation2 + $0x230] sm:$0xff]
    %v166 = vld [vmem:[#allocation2 + $0x238] sm:$0xff]
    %v167 = vld [vmem:[#allocation2 + $0x240] sm:$0xff]
    %v168 = vld [vmem:[#allocation2 + $0x248] sm:$0xff]
    %v169 = vld [vmem:[#allocation2 + $0x250] sm:$0xff]
    %v170 = vld [vmem:[#allocation2 + $0x258] sm:$0xff]
    %v171 = vld [vmem:[#allocation2 + $0x260] sm:$0xff]
    %v172 = vld [vmem:[#allocation2 + $0x268] sm:$0xff]
    %v173 = vld [vmem:[#allocation2 + $0x270] sm:$0xff]
    %v174 = vld [vmem:[#allocation2 + $0x278] sm:$0xff]
    %v175 = vld [vmem:[#allocation2 + $0x280] sm:$0xff]
    %v176 = vld [vmem:[#allocation2 + $0x288] sm:$0xff]
    %v177 = vld [vmem:[#allocation2 + $0x290] sm:$0xff]
    %v178 = vld [vmem:[#allocation2 + $0x298] sm:$0xff]
    %v179 = vld [vmem:[#allocation2 + $0x2a0] sm:$0xff]
    %v180 = vld [vmem:[#allocation2 + $0x2a8] sm:$0xff]
    %v181 = vld [vmem:[#allocation2 + $0x2b0] sm:$0xff]
    %v182 = vld [vmem:[#allocation2 + $0x2b8] sm:$0xff]
    %v183 = vld [vmem:[#allocation2 + $0x2c0] sm:$0xff]
    %v184 = vld [vmem:[#allocation2 + $0x2c8] sm:$0xff]
    %v185 = vld [vmem:[#allocation2 + $0x2d0] sm:$0xff]
    %v186 = vld [vmem:[#allocation2 + $0x2d8] sm:$0xff]
    %v187 = vld [vmem:[#allocation2 + $0x2e0] sm:$0xff]
    %v188 = vld [vmem:[#allocation2 + $0x2e8] sm:$0xff]
    %v189 = vld [vmem:[#allocation2 + $0x2f0] sm:$0xff]
    %v190 = vld [vmem:[#allocation2 + $0x2f8] sm:$0xff]
    %v191 = vld [vmem:[%s3] sm:$0x3f]
    %v193 = vlaneseq
    %v194 = vshrl.u32 %v193, 7
    %v195 = vsub.s32 0, %v194
    %v196 = vrot.slane %v191, %v195
    %v197 = vlaneseq
    %v198 = vshrl.u32 %v197, 7
    %v199 = vsub.s32 1, %v198
    %v200 = vrot.slane %v191, %v199
    %v201 = vlaneseq
    %v202 = vshrl.u32 %v201, 7
    %v203 = vsub.s32 2, %v202
    %v204 = vrot.slane %v191, %v203
    %v205 = vlaneseq
    %v206 = vshrl.u32 %v205, 7
    %v207 = vsub.s32 3, %v206
    %v208 = vrot.slane %v191, %v207
    %v209 = vlaneseq
    %v210 = vshrl.u32 %v209, 7
    %v211 = vsub.s32 4, %v210
    %v212 = vrot.slane %v191, %v211
    %v213 = vlaneseq
    %v214 = vshrl.u32 %v213, 7
    %v215 = vsub.s32 5, %v214
    %v216 = vrot.slane %v191, %v215
    %223 = vmatprep.subr.mxu0 %v96
    %224 = vmatpush1.msra.mxu0 %v95
    %225 = vmatprep.subr.mxu0 %v102
    %226 = vmatpush1.msra.mxu0 %v101
    %227 = vmatprep.subr.mxu0 %v108
    %228 = vmatpush1.msra.mxu0 %v107
    %229 = vmatprep.subr.mxu0 %v114
    %230 = vmatpush1.msra.mxu0 %v113
    %231 = vmatprep.subr.mxu0 %v120
    %232 = vmatpush1.msra.mxu0 %v119
    %233 = vmatprep.subr.mxu0 %v126
    %234 = vmatpush1.msra.mxu0 %v125
    %235 = vmatprep.subr.mxu0 %v132
    %236 = vmatpush1.msra.mxu0 %v131
    %237 = vmatprep.subr.mxu0 %v138
    %238 = vmatpush1.msra.mxu0 %v137
    %239 = vmatprep.subr.mxu0 %v144
    %240 = vmatpush1.msra.mxu0 %v143
    %241 = vmatprep.subr.mxu0 %v150
    %242 = vmatpush1.msra.mxu0 %v149
    %243 = vmatprep.subr.mxu0 %v156
    %244 = vmatpush1.msra.mxu0 %v155
    %245 = vmatprep.subr.mxu0 %v162
    %246 = vmatpush1.msra.mxu0 %v161
    %247 = vmatprep.subr.mxu0 %v168
    %248 = vmatpush1.msra.mxu0 %v167
    %249 = vmatprep.subr.mxu0 %v174
    %250 = vmatpush1.msra.mxu0 %v173
    %251 = vmatprep.subr.mxu0 %v180
    %252 = vmatpush1.msra.mxu0 %v179
    %253 = vmatprep.subr.mxu0 %v186
    %254 = vmatpush1.msra.mxu0 %v185
    %255 = vmatprep.subr.mxu0 0.0
    %256 = vmatpush1.msra.mxu0 0.0
    %257 = vmatprep.subr.mxu0 0.0
    %258 = vmatpush1.msra.mxu0 0.0
    %259 = vmatprep.subr.mxu0 0.0
    %260 = vmatpush1.msra.mxu0 0.0
    %261 = vmatprep.subr.mxu0 0.0
    %262 = vmatpush1.msra.mxu0 0.0
    %263 = vmatprep.subr.mxu0 0.0
    %264 = vmatpush1.msra.mxu0 0.0
    %265 = vmatprep.subr.mxu0 0.0
    %266 = vmatpush1.msra.mxu0 0.0
    %267 = vmatprep.subr.mxu0 0.0
    %268 = vmatpush1.msra.mxu0 0.0
    %269 = vmatprep.subr.mxu0 0.0
    %270 = vmatpush1.msra.mxu0 0.0
    %271 = vmatprep.subr.mxu0 0.0
    %272 = vmatpush1.msra.mxu0 0.0
    %273 = vmatprep.subr.mxu0 0.0
    %274 = vmatpush1.msra.mxu0 0.0
    %275 = vmatprep.subr.mxu0 0.0
    %276 = vmatpush1.msra.mxu0 0.0
    %277 = vmatprep.subr.mxu0 0.0
    %278 = vmatpush1.msra.mxu0 0.0
    %279 = vmatprep.subr.mxu0 0.0
    %280 = vmatpush1.msra.mxu0 0.0
    %281 = vmatprep.subr.mxu0 0.0
    %282 = vmatpush1.msra.mxu0 0.0
    %283 = vmatprep.subr.mxu0 0.0
    %284 = vmatpush1.msra.mxu0 0.0
    %285 = vmatprep.subr.mxu0 0.0
    %286 = vmatpush1.msra.mxu0 0.0
    %287 = vmatprep.mubr.f32.mxu0 0.0
    %288 = vmatmul.mubr.f32.gmra.mrb[0].mxu0 %v93
    %v289 = vpop.f32.mrb[0].mxu0
    %v290 = vadd.f32 %v196, %v289
    %v291 = vpop.f32.mrb[0].mxu0
    %v292 = vadd.f32 %v200, %v291
    %293 = vmatprep.mubr.f32.mxu0 0.0
    %294 = vmatmul.mubr.f32.gmra.mrb[0].mxu0 %v94
    %v295 = vpop.f32.mrb[0].mxu0
    %v296 = vadd.f32 %v196, %v295
    %v297 = vpop.f32.mrb[0].mxu0
    %v298 = vadd.f32 %v200, %v297
    %299 = vdwg.mxu0
    %300 = vmatprep.subr.mxu0 %v98
    %301 = vmatpush1.msra.mxu0 %v97
    %302 = vmatprep.subr.mxu0 %v104
    %303 = vmatpush1.msra.mxu0 %v103
    %304 = vmatprep.subr.mxu0 %v110
    %305 = vmatpush1.msra.mxu0 %v109
    %306 = vmatprep.subr.mxu0 %v116
    %307 = vmatpush1.msra.mxu0 %v115
    %308 = vmatprep.subr.mxu0 %v122
    %309 = vmatpush1.msra.mxu0 %v121
    %310 = vmatprep.subr.mxu0 %v128
    %311 = vmatpush1.msra.mxu0 %v127
    %312 = vmatprep.subr.mxu0 %v134
    %313 = vmatpush1.msra.mxu0 %v133
    %314 = vmatprep.subr.mxu0 %v140
    %315 = vmatpush1.msra.mxu0 %v139
    %316 = vmatprep.subr.mxu0 %v146
    %317 = vmatpush1.msra.mxu0 %v145
    %318 = vmatprep.subr.mxu0 %v152
    %319 = vmatpush1.msra.mxu0 %v151
    %320 = vmatprep.subr.mxu0 %v158
    %321 = vmatpush1.msra.mxu0 %v157
    %322 = vmatprep.subr.mxu0 %v164
    %323 = vmatpush1.msra.mxu0 %v163
    %324 = vmatprep.subr.mxu0 %v170
    %325 = vmatpush1.msra.mxu0 %v169
    %326 = vmatprep.subr.mxu0 %v176
    %327 = vmatpush1.msra.mxu0 %v175
    %328 = vmatprep.subr.mxu0 %v182
    %329 = vmatpush1.msra.mxu0 %v181
    %330 = vmatprep.subr.mxu0 %v188
    %331 = vmatpush1.msra.mxu0 %v187
    %332 = vmatprep.subr.mxu0 0.0
    %333 = vmatpush1.msra.mxu0 0.0
    %334 = vmatprep.subr.mxu0 0.0
    %335 = vmatpush1.msra.mxu0 0.0
    %336 = vmatprep.subr.mxu0 0.0
    %337 = vmatpush1.msra.mxu0 0.0
    %338 = vmatprep.subr.mxu0 0.0
    %339 = vmatpush1.msra.mxu0 0.0
    %340 = vmatprep.subr.mxu0 0.0
    %341 = vmatpush1.msra.mxu0 0.0
    %342 = vmatprep.subr.mxu0 0.0
    %343 = vmatpush1.msra.mxu0 0.0
    %344 = vmatprep.subr.mxu0 0.0
    %345 = vmatpush1.msra.mxu0 0.0
    %346 = vmatprep.subr.mxu0 0.0
    %347 = vmatpush1.msra.mxu0 0.0
    %348 = vmatprep.subr.mxu0 0.0
    %349 = vmatpush1.msra.mxu0 0.0
    %350 = vmatprep.subr.mxu0 0.0
    %351 = vmatpush1.msra.mxu0 0.0
    %352 = vmatprep.subr.mxu0 0.0
    %353 = vmatpush1.msra.mxu0 0.0
    %354 = vmatprep.subr.mxu0 0.0
    %355 = vmatpush1.msra.mxu0 0.0
    %356 = vmatprep.subr.mxu0 0.0
    %357 = vmatpush1.msra.mxu0 0.0
    %358 = vmatprep.subr.mxu0 0.0
    %359 = vmatpush1.msra.mxu0 0.0
    %360 = vmatprep.subr.mxu0 0.0
    %361 = vmatpush1.msra.mxu0 0.0
    %362 = vmatprep.subr.mxu0 0.0
    %363 = vmatpush1.msra.mxu0 0.0
    %364 = vmatprep.mubr.f32.mxu0 0.0
    %365 = vmatmul.mubr.f32.gmra.mrb[0].mxu0 %v93
    %v366 = vpop.f32.mrb[0].mxu0
    %v367 = vadd.f32 %v204, %v366
    %v368 = vpop.f32.mrb[0].mxu0
    %v369 = vadd.f32 %v208, %v368
    %370 = vmatprep.mubr.f32.mxu0 0.0
    %371 = vmatmul.mubr.f32.gmra.mrb[0].mxu0 %v94
    %v372 = vpop.f32.mrb[0].mxu0
    %v373 = vadd.f32 %v204, %v372
    %v374 = vpop.f32.mrb[0].mxu0
    %v375 = vadd.f32 %v208, %v374
    %376 = vdwg.mxu0
    %377 = vmatprep.subr.mxu0 %v100
    %378 = vmatpush1.msra.mxu0 %v99
    %379 = vmatprep.subr.mxu0 %v106
    %380 = vmatpush1.msra.mxu0 %v105
    %381 = vmatprep.subr.mxu0 %v112
    %382 = vmatpush1.msra.mxu0 %v111
    %383 = vmatprep.subr.mxu0 %v118
    %384 = vmatpush1.msra.mxu0 %v117
    %385 = vmatprep.subr.mxu0 %v124
    %386 = vmatpush1.msra.mxu0 %v123
    %387 = vmatprep.subr.mxu0 %v130
    %388 = vmatpush1.msra.mxu0 %v129
    %389 = vmatprep.subr.mxu0 %v136
    %390 = vmatpush1.msra.mxu0 %v135
    %391 = vmatprep.subr.mxu0 %v142
    %392 = vmatpush1.msra.mxu0 %v141
    %393 = vmatprep.subr.mxu0 %v148
    %394 = vmatpush1.msra.mxu0 %v147
    %395 = vmatprep.subr.mxu0 %v154
    %396 = vmatpush1.msra.mxu0 %v153
    %397 = vmatprep.subr.mxu0 %v160
    %398 = vmatpush1.msra.mxu0 %v159
    %399 = vmatprep.subr.mxu0 %v166
    %400 = vmatpush1.msra.mxu0 %v165
    %401 = vmatprep.subr.mxu0 %v172
    %402 = vmatpush1.msra.mxu0 %v171
    %403 = vmatprep.subr.mxu0 %v178
    %404 = vmatpush1.msra.mxu0 %v177
    %405 = vmatprep.subr.mxu0 %v184
    %406 = vmatpush1.msra.mxu0 %v183
    %407 = vmatprep.subr.mxu0 %v190
    %408 = vmatpush1.msra.mxu0 %v189
    %409 = vmatprep.subr.mxu0 0.0
    %410 = vmatpush1.msra.mxu0 0.0
    %411 = vmatprep.subr.mxu0 0.0
    %412 = vmatpush1.msra.mxu0 0.0
    %413 = vmatprep.subr.mxu0 0.0
    %414 = vmatpush1.msra.mxu0 0.0
    %415 = vmatprep.subr.mxu0 0.0
    %416 = vmatpush1.msra.mxu0 0.0
    %417 = vmatprep.subr.mxu0 0.0
    %418 = vmatpush1.msra.mxu0 0.0
    %419 = vmatprep.subr.mxu0 0.0
    %420 = vmatpush1.msra.mxu0 0.0
    %421 = vmatprep.subr.mxu0 0.0
    %422 = vmatpush1.msra.mxu0 0.0
    %423 = vmatprep.subr.mxu0 0.0
    %424 = vmatpush1.msra.mxu0 0.0
    %425 = vmatprep.subr.mxu0 0.0
    %426 = vmatpush1.msra.mxu0 0.0
    %427 = vmatprep.subr.mxu0 0.0
    %428 = vmatpush1.msra.mxu0 0.0
    %429 = vmatprep.subr.mxu0 0.0
    %430 = vmatpush1.msra.mxu0 0.0
    %431 = vmatprep.subr.mxu0 0.0
    %432 = vmatpush1.msra.mxu0 0.0
    %433 = vmatprep.subr.mxu0 0.0
    %434 = vmatpush1.msra.mxu0 0.0
    %435 = vmatprep.subr.mxu0 0.0
    %436 = vmatpush1.msra.mxu0 0.0
    %437 = vmatprep.subr.mxu0 0.0
    %438 = vmatpush1.msra.mxu0 0.0
    %439 = vmatprep.subr.mxu0 0.0
    %440 = vmatpush1.msra.mxu0 0.0
    %441 = vmatprep.mubr.f32.mxu0 0.0
    %442 = vmatmul.mubr.f32.gmra.mrb[0].mxu0 %v93
    %v443 = vpop.f32.mrb[0].mxu0
    %v444 = vadd.f32 %v212, %v443
    %v445 = vpop.f32.mrb[0].mxu0
    %v446 = vadd.f32 %v216, %v445
    %447 = vmatprep.mubr.f32.mxu0 0.0
    %448 = vmatmul.mubr.f32.gmra.mrb[0].mxu0 %v94
    %v449 = vpop.f32.mrb[0].mxu0
    %v450 = vadd.f32 %v212, %v449
    %v451 = vpop.f32.mrb[0].mxu0
    %v452 = vadd.f32 %v216, %v451
    %453 = vdwg.mxu0
    %454 = vmatprep.subr.mxu0 0.0
    %455 = vmatpush1.xpose.msra.mxu0 %v367
    %456 = vmatprep.subr.mxu0 0.0
    %457 = vmatpush1.xpose.msra.mxu0 %v373
    %458 = vmatprep.subr.mxu0 0.0
    %459 = vmatpush1.xpose.msra.mxu0 0.0
    %460 = vmatprep.subr.mxu0 0.0
    %461 = vmatpush1.xpose.msra.mxu0 0.0
    %462 = vmatprep.subr.mxu0 0.0
    %463 = vmatpush1.xpose.msra.mxu0 0.0
    %464 = vmatprep.subr.mxu0 0.0
    %465 = vmatpush1.xpose.msra.mxu0 0.0
    %466 = vmatprep.subr.mxu0 0.0
    %467 = vmatpush1.xpose.msra.mxu0 0.0
    %468 = vmatprep.subr.mxu0 0.0
    %469 = vmatpush1.xpose.msra.mxu0 0.0
    %470 = vmatprep.subr.mxu0 0.0
    %471 = vmatpush1.xpose.msra.mxu0 0.0
    %472 = vmatprep.subr.mxu0 0.0
    %473 = vmatpush1.xpose.msra.mxu0 0.0
    %474 = vmatprep.subr.mxu0 0.0
    %475 = vmatpush1.xpose.msra.mxu0 0.0
    %476 = vmatprep.subr.mxu0 0.0
    %477 = vmatpush1.xpose.msra.mxu0 0.0
    %478 = vmatprep.subr.mxu0 0.0
    %479 = vmatpush1.xpose.msra.mxu0 0.0
    %480 = vmatprep.subr.mxu0 0.0
    %481 = vmatpush1.xpose.msra.mxu0 0.0
    %482 = vmatprep.subr.mxu0 0.0
    %483 = vmatpush1.xpose.msra.mxu0 0.0
    %484 = vmatprep.subr.mxu0 0.0
    %485 = vmatpush1.xpose.msra.mxu0 0.0
    %486 = vmatprep.subr.mxu0 0.0
    %487 = vmatpush1.xpose.msra.mxu0 0.0
    %488 = vmatprep.subr.mxu0 0.0
    %489 = vmatpush1.xpose.msra.mxu0 0.0
    %490 = vmatprep.subr.mxu0 0.0
    %491 = vmatpush1.xpose.msra.mxu0 0.0
    %492 = vmatprep.subr.mxu0 0.0
    %493 = vmatpush1.xpose.msra.mxu0 0.0
    %494 = vmatprep.subr.mxu0 0.0
    %495 = vmatpush1.xpose.msra.mxu0 0.0
    %496 = vmatprep.subr.mxu0 0.0
    %497 = vmatpush1.xpose.msra.mxu0 0.0
    %498 = vmatprep.subr.mxu0 0.0
    %499 = vmatpush1.xpose.msra.mxu0 0.0
    %500 = vmatprep.subr.mxu0 0.0
    %501 = vmatpush1.xpose.msra.mxu0 0.0
    %502 = vmatprep.subr.mxu0 0.0
    %503 = vmatpush1.xpose.msra.mxu0 0.0
    %504 = vmatprep.subr.mxu0 0.0
    %505 = vmatpush1.xpose.msra.mxu0 0.0
    %506 = vmatprep.subr.mxu0 0.0
    %507 = vmatpush1.xpose.msra.mxu0 0.0
    %508 = vmatprep.subr.mxu0 0.0
    %509 = vmatpush1.xpose.msra.mxu0 0.0
    %510 = vmatprep.subr.mxu0 0.0
    %511 = vmatpush1.xpose.msra.mxu0 0.0
    %512 = vmatprep.subr.mxu0 0.0
    %513 = vmatpush1.xpose.msra.mxu0 0.0
    %514 = vmatprep.subr.mxu0 0.0
    %515 = vmatpush1.xpose.msra.mxu0 0.0
    %516 = vmatprep.subr.mxu0 0.0
    %517 = vmatpush1.xpose.msra.mxu0 0.0
    %518 = vmatprep.mubr.f32.mxu0 0.0
    %519 = vmatmul.mubr.f32.gmra.mrb[0].mxu0 %v290
    %v520 = vpop.f32.mrb[0].mxu0
    %v521 = vadd.f32 0.0, %v520
    %v522 = vpop.f32.mrb[0].mxu0
    %523 = vmatprep.mubr.f32.mxu0 0.0
    %524 = vmatmul.mubr.f32.gmra.mrb[0].mxu0 %v296
    %v525 = vpop.f32.mrb[0].mxu0
    %v526 = vadd.f32 0.0, %v525
    %v527 = vpop.f32.mrb[0].mxu0
    %528 = vdwg.mxu0
    %v529 = vmul.f32 %v521, 0.25
    %v530 = vmul.f32 %v526, 0.25
    %v531 = vadd.f32 %v529, %v53
    %v532 = vadd.f32 %v530, %v54
    %vm533 = vcmask 130048
    %v534 = vsel %vm533, %v531, -inf
    %535 = vmax.xlane.f32.xlu0 %v534
    %v536 = vpop.xlane.xlu0 %535
    %v537 = vsel %vm533, %v532, -inf
    %538 = vmax.xlane.f32.xlu0 %v537
    %v539 = vpop.xlane.xlu0 %538
    %v540 = vsub.f32 %v531, %v536
    %v541 = vsub.f32 %v532, %v539
    %v542 = vmul.f32 %v540, 1.442695
    %v543 = vpow.pop %v542
    %v544 = vmul.f32 %v541, 1.442695
    %v545 = vpow.pop %v544
    %v546 = vsel %vm533, %v543, 0.0
    %547 = vadd.xlane.f32.xlu0 %v546
    %v548 = vpop.xlane.xlu0 %547
    %v549 = vsel %vm533, %v545, 0.0
    %550 = vadd.xlane.f32.xlu0 %v549
    %v551 = vpop.xlane.xlu0 %550
    %v552 = vrcp.pop %v548
    %v553 = vrcp.pop %v551
    %v554 = vmul.f32 %v543, %v552
    %v555 = vmul.f32 %v545, %v553
    %v557 = vsel %vm533, %v554, 0
    %v560 = vsel %vm533, %v555, 0
    %562 = vmatprep.subr.mxu0 0.0
    %563 = vmatpush1.msra.mxu0 %v444
    %564 = vmatprep.subr.mxu0 0.0
    %565 = vmatpush1.msra.mxu0 %v450
    %566 = vmatprep.subr.mxu0 0.0
    %567 = vmatpush1.msra.mxu0 0.0
    %568 = vmatprep.subr.mxu0 0.0
    %569 = vmatpush1.msra.mxu0 0.0
    %570 = vmatprep.subr.mxu0 0.0
    %571 = vmatpush1.msra.mxu0 0.0
    %572 = vmatprep.subr.mxu0 0.0
    %573 = vmatpush1.msra.mxu0 0.0
    %574 = vmatprep.subr.mxu0 0.0
    %575 = vmatpush1.msra.mxu0 0.0
    %576 = vmatprep.subr.mxu0 0.0
    %577 = vmatpush1.msra.mxu0 0.0
    %578 = vmatprep.subr.mxu0 0.0
    %579 = vmatpush1.msra.mxu0 0.0
    %580 = vmatprep.subr.mxu0 0.0
    %581 = vmatpush1.msra.mxu0 0.0
    %582 = vmatprep.subr.mxu0 0.0
    %583 = vmatpush1.msra.mxu0 0.0
    %584 = vmatprep.subr.mxu0 0.0
    %585 = vmatpush1.msra.mxu0 0.0
    %586 = vmatprep.subr.mxu0 0.0
    %587 = vmatpush1.msra.mxu0 0.0
    %588 = vmatprep.subr.mxu0 0.0
    %589 = vmatpush1.msra.mxu0 0.0
    %590 = vmatprep.subr.mxu0 0.0
    %591 = vmatpush1.msra.mxu0 0.0
    %592 = vmatprep.subr.mxu0 0.0
    %593 = vmatpush1.msra.mxu0 0.0
    %594 = vmatprep.subr.mxu0 0.0
    %595 = vmatpush1.msra.mxu0 0.0
    %596 = vmatprep.subr.mxu0 0.0
    %597 = vmatpush1.msra.mxu0 0.0
    %598 = vmatprep.subr.mxu0 0.0
    %599 = vmatpush1.msra.mxu0 0.0
    %600 = vmatprep.subr.mxu0 0.0
    %601 = vmatpush1.msra.mxu0 0.0
    %602 = vmatprep.subr.mxu0 0.0
    %603 = vmatpush1.msra.mxu0 0.0
    %604 = vmatprep.subr.mxu0 0.0
    %605 = vmatpush1.msra.mxu0 0.0
    %606 = vmatprep.subr.mxu0 0.0
    %607 = vmatpush1.msra.mxu0 0.0
    %608 = vmatprep.subr.mxu0 0.0
    %609 = vmatpush1.msra.mxu0 0.0
    %610 = vmatprep.subr.mxu0 0.0
    %611 = vmatpush1.msra.mxu0 0.0
    %612 = vmatprep.subr.mxu0 0.0
    %613 = vmatpush1.msra.mxu0 0.0
    %614 = vmatprep.subr.mxu0 0.0
    %615 = vmatpush1.msra.mxu0 0.0
    %616 = vmatprep.subr.mxu0 0.0
    %617 = vmatpush1.msra.mxu0 0.0
    %618 = vmatprep.subr.mxu0 0.0
    %619 = vmatpush1.msra.mxu0 0.0
    %620 = vmatprep.subr.mxu0 0.0
    %621 = vmatpush1.msra.mxu0 0.0
    %622 = vmatprep.subr.mxu0 0.0
    %623 = vmatpush1.msra.mxu0 0.0
    %624 = vmatprep.subr.mxu0 0.0
    %625 = vmatpush1.msra.mxu0 0.0
    %626 = vmatprep.mubr.f32.mxu0 0.0
    %627 = vmatmul.mubr.f32.gmra.mrb[0].mxu0 %v557
    %v628 = vpop.f32.mrb[0].mxu0
    %v629 = vadd.f32 0.0, %v628
    %v630 = vpop.f32.mrb[0].mxu0
    %631 = vmatprep.mubr.f32.mxu0 0.0
    %632 = vmatmul.mubr.f32.gmra.mrb[0].mxu0 %v560
    %v633 = vpop.f32.mrb[0].mxu0
    %v634 = vadd.f32 0.0, %v633
    %v635 = vpop.f32.mrb[0].mxu0
    %636 = vdwg.mxu0
    %v637 = vld [vmem:[#allocation4] sm:$0xff]
    %v638 = vld [vmem:[#allocation4 + $0x8] sm:$0xff]
    %v639 = vld [vmem:[#allocation4 + $0x10] sm:$0xff]
    %v640 = vld [vmem:[#allocation4 + $0x18] sm:$0xff]
    %v641 = vld [vmem:[#allocation4 + $0x20] sm:$0xff]
    %v642 = vld [vmem:[#allocation4 + $0x28] sm:$0xff]
    %v643 = vld [vmem:[#allocation4 + $0x30] sm:$0xff]
    %v644 = vld [vmem:[#allocation4 + $0x38] sm:$0xff]
    %v645 = vld [vmem:[#allocation4 + $0x40] sm:$0xff]
    %v646 = vld [vmem:[#allocation4 + $0x48] sm:$0xff]
    %v647 = vld [vmem:[#allocation4 + $0x50] sm:$0xff]
    %v648 = vld [vmem:[#allocation4 + $0x58] sm:$0xff]
    %v649 = vld [vmem:[#allocation4 + $0x60] sm:$0xff]
    %v650 = vld [vmem:[#allocation4 + $0x68] sm:$0xff]
    %v651 = vld [vmem:[#allocation4 + $0x70] sm:$0xff]
    %v652 = vld [vmem:[#allocation4 + $0x78] sm:$0xff]
    %653 = vmatprep.subr.mxu0 0.0
    %654 = vmatpush1.xpose.msra.mxu0 %v369
    %655 = vmatprep.subr.mxu0 0.0
    %656 = vmatpush1.xpose.msra.mxu0 %v375
    %657 = vmatprep.subr.mxu0 0.0
    %658 = vmatpush1.xpose.msra.mxu0 0.0
    %659 = vmatprep.subr.mxu0 0.0
    %660 = vmatpush1.xpose.msra.mxu0 0.0
    %661 = vmatprep.subr.mxu0 0.0
    %662 = vmatpush1.xpose.msra.mxu0 0.0
    %663 = vmatprep.subr.mxu0 0.0
    %664 = vmatpush1.xpose.msra.mxu0 0.0
    %665 = vmatprep.subr.mxu0 0.0
    %666 = vmatpush1.xpose.msra.mxu0 0.0
    %667 = vmatprep.subr.mxu0 0.0
    %668 = vmatpush1.xpose.msra.mxu0 0.0
    %669 = vmatprep.subr.mxu0 0.0
    %670 = vmatpush1.xpose.msra.mxu0 0.0
    %671 = vmatprep.subr.mxu0 0.0
    %672 = vmatpush1.xpose.msra.mxu0 0.0
    %673 = vmatprep.subr.mxu0 0.0
    %674 = vmatpush1.xpose.msra.mxu0 0.0
    %675 = vmatprep.subr.mxu0 0.0
    %676 = vmatpush1.xpose.msra.mxu0 0.0
    %677 = vmatprep.subr.mxu0 0.0
    %678 = vmatpush1.xpose.msra.mxu0 0.0
    %679 = vmatprep.subr.mxu0 0.0
    %680 = vmatpush1.xpose.msra.mxu0 0.0
    %681 = vmatprep.subr.mxu0 0.0
    %682 = vmatpush1.xpose.msra.mxu0 0.0
    %683 = vmatprep.subr.mxu0 0.0
    %684 = vmatpush1.xpose.msra.mxu0 0.0
    %685 = vmatprep.subr.mxu0 0.0
    %686 = vmatpush1.xpose.msra.mxu0 0.0
    %687 = vmatprep.subr.mxu0 0.0
    %688 = vmatpush1.xpose.msra.mxu0 0.0
    %689 = vmatprep.subr.mxu0 0.0
    %690 = vmatpush1.xpose.msra.mxu0 0.0
    %691 = vmatprep.subr.mxu0 0.0
    %692 = vmatpush1.xpose.msra.mxu0 0.0
    %693 = vmatprep.subr.mxu0 0.0
    %694 = vmatpush1.xpose.msra.mxu0 0.0
    %695 = vmatprep.subr.mxu0 0.0
    %696 = vmatpush1.xpose.msra.mxu0 0.0
    %697 = vmatprep.subr.mxu0 0.0
    %698 = vmatpush1.xpose.msra.mxu0 0.0
    %699 = vmatprep.subr.mxu0 0.0
    %700 = vmatpush1.xpose.msra.mxu0 0.0
    %701 = vmatprep.subr.mxu0 0.0
    %702 = vmatpush1.xpose.msra.mxu0 0.0
    %703 = vmatprep.subr.mxu0 0.0
    %704 = vmatpush1.xpose.msra.mxu0 0.0
    %705 = vmatprep.subr.mxu0 0.0
    %706 = vmatpush1.xpose.msra.mxu0 0.0
    %707 = vmatprep.subr.mxu0 0.0
    %708 = vmatpush1.xpose.msra.mxu0 0.0
    %709 = vmatprep.subr.mxu0 0.0
    %710 = vmatpush1.xpose.msra.mxu0 0.0
    %711 = vmatprep.subr.mxu0 0.0
    %712 = vmatpush1.xpose.msra.mxu0 0.0
    %713 = vmatprep.subr.mxu0 0.0
    %714 = vmatpush1.xpose.msra.mxu0 0.0
    %715 = vmatprep.subr.mxu0 0.0
    %716 = vmatpush1.xpose.msra.mxu0 0.0
    %717 = vmatprep.mubr.f32.mxu0 0.0
    %718 = vmatmul.mubr.f32.gmra.mrb[0].mxu0 %v292
    %v719 = vpop.f32.mrb[0].mxu0
    %v720 = vadd.f32 0.0, %v719
    %v721 = vpop.f32.mrb[0].mxu0
    %722 = vmatprep.mubr.f32.mxu0 0.0
    %723 = vmatmul.mubr.f32.gmra.mrb[0].mxu0 %v298
    %v724 = vpop.f32.mrb[0].mxu0
    %v725 = vadd.f32 0.0, %v724
    %v726 = vpop.f32.mrb[0].mxu0
    %727 = vdwg.mxu0
    %v728 = vmul.f32 %v720, 0.25
    %v729 = vmul.f32 %v725, 0.25
    %v730 = vadd.f32 %v728, %v53
    %v731 = vadd.f32 %v729, %v54
    %v732 = vsel %vm533, %v730, -inf
    %733 = vmax.xlane.f32.xlu0 %v732
    %v734 = vpop.xlane.xlu0 %733
    %v735 = vsel %vm533, %v731, -inf
    %736 = vmax.xlane.f32.xlu0 %v735
    %v737 = vpop.xlane.xlu0 %736
    %v738 = vsub.f32 %v730, %v734
    %v739 = vsub.f32 %v731, %v737
    %v740 = vmul.f32 %v738, 1.442695
    %v741 = vpow.pop %v740
    %v742 = vmul.f32 %v739, 1.442695
    %v743 = vpow.pop %v742
    %v744 = vsel %vm533, %v741, 0.0
    %745 = vadd.xlane.f32.xlu0 %v744
    %v746 = vpop.xlane.xlu0 %745
    %v747 = vsel %vm533, %v743, 0.0
    %748 = vadd.xlane.f32.xlu0 %v747
    %v749 = vpop.xlane.xlu0 %748
    %v750 = vrcp.pop %v746
    %v751 = vrcp.pop %v749
    %v752 = vmul.f32 %v741, %v750
    %v753 = vmul.f32 %v743, %v751
    %v755 = vsel %vm533, %v752, 0
    %v758 = vsel %vm533, %v753, 0
    %760 = vmatprep.subr.mxu0 0.0
    %761 = vmatpush1.msra.mxu0 %v446
    %762 = vmatprep.subr.mxu0 0.0
    %763 = vmatpush1.msra.mxu0 %v452
    %764 = vmatprep.subr.mxu0 0.0
    %765 = vmatpush1.msra.mxu0 0.0
    %766 = vmatprep.subr.mxu0 0.0
    %767 = vmatpush1.msra.mxu0 0.0
    %768 = vmatprep.subr.mxu0 0.0
    %769 = vmatpush1.msra.mxu0 0.0
    %770 = vmatprep.subr.mxu0 0.0
    %771 = vmatpush1.msra.mxu0 0.0
    %772 = vmatprep.subr.mxu0 0.0
    %773 = vmatpush1.msra.mxu0 0.0
    %774 = vmatprep.subr.mxu0 0.0
    %775 = vmatpush1.msra.mxu0 0.0
    %776 = vmatprep.subr.mxu0 0.0
    %777 = vmatpush1.msra.mxu0 0.0
    %778 = vmatprep.subr.mxu0 0.0
    %779 = vmatpush1.msra.mxu0 0.0
    %780 = vmatprep.subr.mxu0 0.0
    %781 = vmatpush1.msra.mxu0 0.0
    %782 = vmatprep.subr.mxu0 0.0
    %783 = vmatpush1.msra.mxu0 0.0
    %784 = vmatprep.subr.mxu0 0.0
    %785 = vmatpush1.msra.mxu0 0.0
    %786 = vmatprep.subr.mxu0 0.0
    %787 = vmatpush1.msra.mxu0 0.0
    %788 = vmatprep.subr.mxu0 0.0
    %789 = vmatpush1.msra.mxu0 0.0
    %790 = vmatprep.subr.mxu0 0.0
    %791 = vmatpush1.msra.mxu0 0.0
    %792 = vmatprep.subr.mxu0 0.0
    %793 = vmatpush1.msra.mxu0 0.0
    %794 = vmatprep.subr.mxu0 0.0
    %795 = vmatpush1.msra.mxu0 0.0
    %796 = vmatprep.subr.mxu0 0.0
    %797 = vmatpush1.msra.mxu0 0.0
    %798 = vmatprep.subr.mxu0 0.0
    %799 = vmatpush1.msra.mxu0 0.0
    %800 = vmatprep.subr.mxu0 0.0
    %801 = vmatpush1.msra.mxu0 0.0
    %802 = vmatprep.subr.mxu0 0.0
    %803 = vmatpush1.msra.mxu0 0.0
    %804 = vmatprep.subr.mxu0 0.0
    %805 = vmatpush1.msra.mxu0 0.0
    %806 = vmatprep.subr.mxu0 0.0
    %807 = vmatpush1.msra.mxu0 0.0
    %808 = vmatprep.subr.mxu0 0.0
    %809 = vmatpush1.msra.mxu0 0.0
    %810 = vmatprep.subr.mxu0 0.0
    %811 = vmatpush1.msra.mxu0 0.0
    %812 = vmatprep.subr.mxu0 0.0
    %813 = vmatpush1.msra.mxu0 0.0
    %814 = vmatprep.subr.mxu0 0.0
    %815 = vmatpush1.msra.mxu0 0.0
    %816 = vmatprep.subr.mxu0 0.0
    %817 = vmatpush1.msra.mxu0 0.0
    %818 = vmatprep.subr.mxu0 0.0
    %819 = vmatpush1.msra.mxu0 0.0
    %820 = vmatprep.subr.mxu0 0.0
    %821 = vmatpush1.msra.mxu0 0.0
    %822 = vmatprep.subr.mxu0 0.0
    %823 = vmatpush1.msra.mxu0 0.0
    %824 = vmatprep.mubr.f32.mxu0 0.0
    %825 = vmatmul.mubr.f32.gmra.mrb[0].mxu0 %v755
    %v826 = vpop.f32.mrb[0].mxu0
    %v827 = vadd.f32 0.0, %v826
    %v828 = vpop.f32.mrb[0].mxu0
    %829 = vmatprep.mubr.f32.mxu0 0.0
    %830 = vmatmul.mubr.f32.gmra.mrb[0].mxu0 %v758
    %v831 = vpop.f32.mrb[0].mxu0
    %v832 = vadd.f32 0.0, %v831
    %v833 = vpop.f32.mrb[0].mxu0
    %834 = vdwg.mxu0
    %s835 = scalar_lea.vmem [#allocation4], 128
    %v836 = vld [vmem:[%s835] sm:$0xff]
    %v837 = vld [vmem:[%s835 + $0x8] sm:$0xff]
    %v838 = vld [vmem:[%s835 + $0x10] sm:$0xff]
    %v839 = vld [vmem:[%s835 + $0x18] sm:$0xff]
    %v840 = vld [vmem:[%s835 + $0x20] sm:$0xff]
    %v841 = vld [vmem:[%s835 + $0x28] sm:$0xff]
    %v842 = vld [vmem:[%s835 + $0x30] sm:$0xff]
    %v843 = vld [vmem:[%s835 + $0x38] sm:$0xff]
    %v844 = vld [vmem:[%s835 + $0x40] sm:$0xff]
    %v845 = vld [vmem:[%s835 + $0x48] sm:$0xff]
    %v846 = vld [vmem:[%s835 + $0x50] sm:$0xff]
    %v847 = vld [vmem:[%s835 + $0x58] sm:$0xff]
    %v848 = vld [vmem:[%s835 + $0x60] sm:$0xff]
    %v849 = vld [vmem:[%s835 + $0x68] sm:$0xff]
    %v850 = vld [vmem:[%s835 + $0x70] sm:$0xff]
    %v851 = vld [vmem:[%s835 + $0x78] sm:$0xff]
    %852 = vmatprep.subr.mxu0 0.0
    %853 = vmatpush1.msra.mxu0 %v836
    %854 = vmatprep.subr.mxu0 0.0
    %855 = vmatpush1.msra.mxu0 %v837
    %856 = vmatprep.subr.mxu0 0.0
    %857 = vmatpush1.msra.mxu0 %v838
    %858 = vmatprep.subr.mxu0 0.0
    %859 = vmatpush1.msra.mxu0 %v839
    %860 = vmatprep.subr.mxu0 0.0
    %861 = vmatpush1.msra.mxu0 %v840
    %862 = vmatprep.subr.mxu0 0.0
    %863 = vmatpush1.msra.mxu0 %v841
    %864 = vmatprep.subr.mxu0 0.0
    %865 = vmatpush1.msra.mxu0 %v842
    %866 = vmatprep.subr.mxu0 0.0
    %867 = vmatpush1.msra.mxu0 %v843
    %868 = vmatprep.subr.mxu0 0.0
    %869 = vmatpush1.msra.mxu0 %v844
    %870 = vmatprep.subr.mxu0 0.0
    %871 = vmatpush1.msra.mxu0 %v845
    %872 = vmatprep.subr.mxu0 0.0
    %873 = vmatpush1.msra.mxu0 %v846
    %874 = vmatprep.subr.mxu0 0.0
    %875 = vmatpush1.msra.mxu0 %v847
    %876 = vmatprep.subr.mxu0 0.0
    %877 = vmatpush1.msra.mxu0 %v848
    %878 = vmatprep.subr.mxu0 0.0
    %879 = vmatpush1.msra.mxu0 %v849
    %880 = vmatprep.subr.mxu0 0.0
    %881 = vmatpush1.msra.mxu0 %v850
    %882 = vmatprep.subr.mxu0 0.0
    %883 = vmatpush1.msra.mxu0 %v851
    %884 = vmatprep.subr.mxu0 0.0
    %885 = vmatpush1.msra.mxu0 0.0
    %886 = vmatprep.subr.mxu0 0.0
    %887 = vmatpush1.msra.mxu0 0.0
    %888 = vmatprep.subr.mxu0 0.0
    %889 = vmatpush1.msra.mxu0 0.0
    %890 = vmatprep.subr.mxu0 0.0
    %891 = vmatpush1.msra.mxu0 0.0
    %892 = vmatprep.subr.mxu0 0.0
    %893 = vmatpush1.msra.mxu0 0.0
    %894 = vmatprep.subr.mxu0 0.0
    %895 = vmatpush1.msra.mxu0 0.0
    %896 = vmatprep.subr.mxu0 0.0
    %897 = vmatpush1.msra.mxu0 0.0
    %898 = vmatprep.subr.mxu0 0.0
    %899 = vmatpush1.msra.mxu0 0.0
    %900 = vmatprep.subr.mxu0 0.0
    %901 = vmatpush1.msra.mxu0 0.0
    %902 = vmatprep.subr.mxu0 0.0
    %903 = vmatpush1.msra.mxu0 0.0
    %904 = vmatprep.subr.mxu0 0.0
    %905 = vmatpush1.msra.mxu0 0.0
    %906 = vmatprep.subr.mxu0 0.0
    %907 = vmatpush1.msra.mxu0 0.0
    %908 = vmatprep.subr.mxu0 0.0
    %909 = vmatpush1.msra.mxu0 0.0
    %910 = vmatprep.subr.mxu0 0.0
    %911 = vmatpush1.msra.mxu0 0.0
    %912 = vmatprep.subr.mxu0 0.0
    %913 = vmatpush1.msra.mxu0 0.0
    %914 = vmatprep.subr.mxu0 0.0
    %915 = vmatpush1.msra.mxu0 0.0
    %916 = vmatprep.mubr.f32.mxu0 0.0
    %917 = vmatmul.mubr.f32.gmra.mrb[0].mxu0 %v827
    %v918 = vpop.f32.mrb[0].mxu0
    %v919 = vadd.f32 0.0, %v918
    %v920 = vpop.f32.mrb[0].mxu0
    %921 = vmatprep.mubr.f32.mxu0 0.0
    %922 = vmatmul.mubr.f32.gmra.mrb[0].mxu0 %v832
    %v923 = vpop.f32.mrb[0].mxu0
    %v924 = vadd.f32 0.0, %v923
    %v925 = vpop.f32.mrb[0].mxu0
    %926 = vdwg.mxu0
    %927 = vmatprep.subr.mxu0 0.0
    %928 = vmatpush1.msra.mxu0 %v637
    %929 = vmatprep.subr.mxu0 0.0
    %930 = vmatpush1.msra.mxu0 %v638
    %931 = vmatprep.subr.mxu0 0.0
    %932 = vmatpush1.msra.mxu0 %v639
    %933 = vmatprep.subr.mxu0 0.0
    %934 = vmatpush1.msra.mxu0 %v640
    %935 = vmatprep.subr.mxu0 0.0
    %936 = vmatpush1.msra.mxu0 %v641
    %937 = vmatprep.subr.mxu0 0.0
    %938 = vmatpush1.msra.mxu0 %v642
    %939 = vmatprep.subr.mxu0 0.0
    %940 = vmatpush1.msra.mxu0 %v643
    %941 = vmatprep.subr.mxu0 0.0
    %942 = vmatpush1.msra.mxu0 %v644
    %943 = vmatprep.subr.mxu0 0.0
    %944 = vmatpush1.msra.mxu0 %v645
    %945 = vmatprep.subr.mxu0 0.0
    %946 = vmatpush1.msra.mxu0 %v646
    %947 = vmatprep.subr.mxu0 0.0
    %948 = vmatpush1.msra.mxu0 %v647
    %949 = vmatprep.subr.mxu0 0.0
    %950 = vmatpush1.msra.mxu0 %v648
    %951 = vmatprep.subr.mxu0 0.0
    %952 = vmatpush1.msra.mxu0 %v649
    %953 = vmatprep.subr.mxu0 0.0
    %954 = vmatpush1.msra.mxu0 %v650
    %955 = vmatprep.subr.mxu0 0.0
    %956 = vmatpush1.msra.mxu0 %v651
    %957 = vmatprep.subr.mxu0 0.0
    %958 = vmatpush1.msra.mxu0 %v652
    %959 = vmatprep.subr.mxu0 0.0
    %960 = vmatpush1.msra.mxu0 0.0
    %961 = vmatprep.subr.mxu0 0.0
    %962 = vmatpush1.msra.mxu0 0.0
    %963 = vmatprep.subr.mxu0 0.0
    %964 = vmatpush1.msra.mxu0 0.0
    %965 = vmatprep.subr.mxu0 0.0
    %966 = vmatpush1.msra.mxu0 0.0
    %967 = vmatprep.subr.mxu0 0.0
    %968 = vmatpush1.msra.mxu0 0.0
    %969 = vmatprep.subr.mxu0 0.0
    %970 = vmatpush1.msra.mxu0 0.0
    %971 = vmatprep.subr.mxu0 0.0
    %972 = vmatpush1.msra.mxu0 0.0
    %973 = vmatprep.subr.mxu0 0.0
    %974 = vmatpush1.msra.mxu0 0.0
    %975 = vmatprep.subr.mxu0 0.0
    %976 = vmatpush1.msra.mxu0 0.0
    %977 = vmatprep.subr.mxu0 0.0
    %978 = vmatpush1.msra.mxu0 0.0
    %979 = vmatprep.subr.mxu0 0.0
    %980 = vmatpush1.msra.mxu0 0.0
    %981 = vmatprep.subr.mxu0 0.0
    %982 = vmatpush1.msra.mxu0 0.0
    %983 = vmatprep.subr.mxu0 0.0
    %984 = vmatpush1.msra.mxu0 0.0
    %985 = vmatprep.subr.mxu0 0.0
    %986 = vmatpush1.msra.mxu0 0.0
    %987 = vmatprep.subr.mxu0 0.0
    %988 = vmatpush1.msra.mxu0 0.0
    %989 = vmatprep.subr.mxu0 0.0
    %990 = vmatpush1.msra.mxu0 0.0
    %991 = vmatprep.mubr.f32.mxu0 0.0
    %992 = vmatmul.mubr.f32.gmra.mrb[0].mxu0 %v629
    %v993 = vpop.f32.mrb[0].mxu0
    %v994 = vadd.f32 %v919, %v993
    %v995 = vpop.f32.mrb[0].mxu0
    %996 = vmatprep.mubr.f32.mxu0 0.0
    %997 = vmatmul.mubr.f32.gmra.mrb[0].mxu0 %v634
    %v998 = vpop.f32.mrb[0].mxu0
    %v999 = vadd.f32 %v924, %v998
    %v1000 = vpop.f32.mrb[0].mxu0
    %1001 = vdwg.mxu0
    %v1002 = vlaneseq
    %v1003 = vshrl.u32 %v1002, 7
    %v1004 = vsub.s32 2, %v1003
    %v1005 = vrot.slane %v55, %v1004
    %v1006 = vadd.f32 %v994, %v1005
    %v1007 = vadd.f32 %v999, %v1005
    %v1008 = vadd.f32 %v93, %v1006
    %v1009 = vadd.f32 %v94, %v1007
    %1010 = vadd.xlane.f32.xlu0 %v1008
    %v1011 = vpop.xlane.xlu0 %1010
    %1012 = vadd.xlane.f32.xlu0 %v1009
    %v1013 = vpop.xlane.xlu0 %1012
    %v1014 = vmul.f32 %v1011, 0.03125
    %v1015 = vmul.f32 %v1013, 0.03125
    %v1016 = vmul.f32 %v1008, %v1008
    %v1017 = vmul.f32 %v1009, %v1009
    %1018 = vadd.xlane.f32.xlu0 %v1016
    %v1019 = vpop.xlane.xlu0 %1018
    %1020 = vadd.xlane.f32.xlu0 %v1017
    %v1021 = vpop.xlane.xlu0 %1020
    %v1022 = vmul.f32 %v1019, 0.03125
    %v1023 = vmul.f32 %v1021, 0.03125
    %v1024 = vmul.f32 %v1014, %v1014
    %v1025 = vmul.f32 %v1015, %v1015
    %v1026 = vsub.f32 %v1022, %v1024
    %v1027 = vsub.f32 %v1023, %v1025
    %v1028 = vsub.f32 %v1008, %v1014
    %v1029 = vsub.f32 %v1009, %v1015
    %v1030 = vadd.f32 %v1026, 1e-12
    %v1031 = vadd.f32 %v1027, 1e-12
    %v1032 = vrsqrt.pop %v1030
    %v1033 = vrsqrt.pop %v1031
    %v1034 = vmul.f32 %v1028, %v1032
    %v1035 = vmul.f32 %v1029, %v1033
    %v1036 = vlaneseq
    %v1037 = vshrl.u32 %v1036, 7
    %v1038 = vsub.s32 3, %v1037
    %v1039 = vrot.slane %v55, %v1038
    %v1040 = vmul.f32 %v1034, %v1039
    %v1041 = vmul.f32 %v1035, %v1039
    %v1042 = vlaneseq
    %v1043 = vshrl.u32 %v1042, 7
    %v1044 = vsub.s32 4, %v1043
    %v1045 = vrot.slane %v55, %v1044
    %v1046 = vadd.f32 %v1040, %v1045
    %v1047 = vadd.f32 %v1041, %v1045
    %s1048 = scalar_lea.vmem [#allocation4], 256
    %v1049 = vld [vmem:[%s1048] sm:$0xff]
    %v1050 = vld [vmem:[%s1048 + $0x8] sm:$0xff]
    %v1051 = vld [vmem:[%s1048 + $0x10] sm:$0xff]
    %v1052 = vld [vmem:[%s1048 + $0x18] sm:$0xff]
    %v1053 = vld [vmem:[%s1048 + $0x20] sm:$0xff]
    %v1054 = vld [vmem:[%s1048 + $0x28] sm:$0xff]
    %v1055 = vld [vmem:[%s1048 + $0x30] sm:$0xff]
    %v1056 = vld [vmem:[%s1048 + $0x38] sm:$0xff]
    %v1057 = vld [vmem:[%s1048 + $0x40] sm:$0xff]
    %v1058 = vld [vmem:[%s1048 + $0x48] sm:$0xff]
    %v1059 = vld [vmem:[%s1048 + $0x50] sm:$0xff]
    %v1060 = vld [vmem:[%s1048 + $0x58] sm:$0xff]
    %v1061 = vld [vmem:[%s1048 + $0x60] sm:$0xff]
    %v1062 = vld [vmem:[%s1048 + $0x68] sm:$0xff]
    %v1063 = vld [vmem:[%s1048 + $0x70] sm:$0xff]
    %v1064 = vld [vmem:[%s1048 + $0x78] sm:$0xff]
    %v1065 = vlaneseq
    %v1066 = vshrl.u32 %v1065, 7
    %v1067 = vsub.s32 5, %v1066
    %v1068 = vrot.slane %v55, %v1067
    %1069 = vmatprep.subr.mxu0 0.0
    %1070 = vmatpush1.msra.mxu0 %v1049
    %1071 = vmatprep.subr.mxu0 0.0
    %1072 = vmatpush1.msra.mxu0 %v1050
    %1073 = vmatprep.subr.mxu0 0.0
    %1074 = vmatpush1.msra.mxu0 %v1051
    %1075 = vmatprep.subr.mxu0 0.0
    %1076 = vmatpush1.msra.mxu0 %v1052
    %1077 = vmatprep.subr.mxu0 0.0
    %1078 = vmatpush1.msra.mxu0 %v1053
    %1079 = vmatprep.subr.mxu0 0.0
    %1080 = vmatpush1.msra.mxu0 %v1054
    %1081 = vmatprep.subr.mxu0 0.0
    %1082 = vmatpush1.msra.mxu0 %v1055
    %1083 = vmatprep.subr.mxu0 0.0
    %1084 = vmatpush1.msra.mxu0 %v1056
    %1085 = vmatprep.subr.mxu0 0.0
    %1086 = vmatpush1.msra.mxu0 %v1057
    %1087 = vmatprep.subr.mxu0 0.0
    %1088 = vmatpush1.msra.mxu0 %v1058
    %1089 = vmatprep.subr.mxu0 0.0
    %1090 = vmatpush1.msra.mxu0 %v1059
    %1091 = vmatprep.subr.mxu0 0.0
    %1092 = vmatpush1.msra.mxu0 %v1060
    %1093 = vmatprep.subr.mxu0 0.0
    %1094 = vmatpush1.msra.mxu0 %v1061
    %1095 = vmatprep.subr.mxu0 0.0
    %1096 = vmatpush1.msra.mxu0 %v1062
    %1097 = vmatprep.subr.mxu0 0.0
    %1098 = vmatpush1.msra.mxu0 %v1063
    %1099 = vmatprep.subr.mxu0 0.0
    %1100 = vmatpush1.msra.mxu0 %v1064
    %1101 = vmatprep.subr.mxu0 0.0
    %1102 = vmatpush1.msra.mxu0 0.0
    %1103 = vmatprep.subr.mxu0 0.0
    %1104 = vmatpush1.msra.mxu0 0.0
    %1105 = vmatprep.subr.mxu0 0.0
    %1106 = vmatpush1.msra.mxu0 0.0
    %1107 = vmatprep.subr.mxu0 0.0
    %1108 = vmatpush1.msra.mxu0 0.0
    %1109 = vmatprep.subr.mxu0 0.0
    %1110 = vmatpush1.msra.mxu0 0.0
    %1111 = vmatprep.subr.mxu0 0.0
    %1112 = vmatpush1.msra.mxu0 0.0
    %1113 = vmatprep.subr.mxu0 0.0
    %1114 = vmatpush1.msra.mxu0 0.0
    %1115 = vmatprep.subr.mxu0 0.0
    %1116 = vmatpush1.msra.mxu0 0.0
    %1117 = vmatprep.subr.mxu0 0.0
    %1118 = vmatpush1.msra.mxu0 0.0
    %1119 = vmatprep.subr.mxu0 0.0
    %1120 = vmatpush1.msra.mxu0 0.0
    %1121 = vmatprep.subr.mxu0 0.0
    %1122 = vmatpush1.msra.mxu0 0.0
    %1123 = vmatprep.subr.mxu0 0.0
    %1124 = vmatpush1.msra.mxu0 0.0
    %1125 = vmatprep.subr.mxu0 0.0
    %1126 = vmatpush1.msra.mxu0 0.0
    %1127 = vmatprep.subr.mxu0 0.0
    %1128 = vmatpush1.msra.mxu0 0.0
    %1129 = vmatprep.subr.mxu0 0.0
    %1130 = vmatpush1.msra.mxu0 0.0
    %1131 = vmatprep.subr.mxu0 0.0
    %1132 = vmatpush1.msra.mxu0 0.0
    %1133 = vmatprep.mubr.f32.mxu0 0.0
    %1134 = vmatmul.mubr.f32.gmra.mrb[0].mxu0 %v1046
    %v1135 = vpop.f32.mrb[0].mxu0
    %v1136 = vadd.f32 %v1068, %v1135
    %v1137 = vpop.f32.mrb[0].mxu0
    %1138 = vmatprep.mubr.f32.mxu0 0.0
    %1139 = vmatmul.mubr.f32.gmra.mrb[0].mxu0 %v1047
    %v1140 = vpop.f32.mrb[0].mxu0
    %v1141 = vadd.f32 %v1068, %v1140
    %v1142 = vpop.f32.mrb[0].mxu0
    %1143 = vdwg.mxu0
    %v1144 = vmul.f32 %v1136, %v1136
    %v1145 = vmul.f32 %v1141, %v1141
    %v1146 = vmul.f32 %v1136, %v1144
    %v1147 = vmul.f32 %v1141, %v1145
    %v1148 = vmul.f32 %v1146, 0.044715
    %v1149 = vmul.f32 %v1147, 0.044715
    %v1150 = vadd.f32 %v1136, %v1148
    %v1151 = vadd.f32 %v1141, %v1149
    %v1152 = vmul.f32 %v1150, 0.7978846
    %v1153 = vmul.f32 %v1151, 0.7978846
    %v1154 = vtanh.pop %v1152
    %v1155 = vtanh.pop %v1153
    %v1156 = vadd.f32 %v1154, 1.0
    %v1157 = vadd.f32 %v1155, 1.0
    %v1158 = vmul.f32 %v1156, 0.5
    %v1159 = vmul.f32 %v1157, 0.5
    %v1160 = vmul.f32 %v1136, %v1158
    %v1161 = vmul.f32 %v1141, %v1159
    %s1162 = scalar_lea.vmem [#allocation4], 384
    %v1163 = vld [vmem:[%s1162] sm:$0xff]
    %v1164 = vld [vmem:[%s1162 + $0x8] sm:$0xff]
    %v1165 = vld [vmem:[%s1162 + $0x10] sm:$0xff]
    %v1166 = vld [vmem:[%s1162 + $0x18] sm:$0xff]
    %v1167 = vld [vmem:[%s1162 + $0x20] sm:$0xff]
    %v1168 = vld [vmem:[%s1162 + $0x28] sm:$0xff]
    %v1169 = vld [vmem:[%s1162 + $0x30] sm:$0xff]
    %v1170 = vld [vmem:[%s1162 + $0x38] sm:$0xff]
    %v1171 = vld [vmem:[%s1162 + $0x40] sm:$0xff]
    %v1172 = vld [vmem:[%s1162 + $0x48] sm:$0xff]
    %v1173 = vld [vmem:[%s1162 + $0x50] sm:$0xff]
    %v1174 = vld [vmem:[%s1162 + $0x58] sm:$0xff]
    %v1175 = vld [vmem:[%s1162 + $0x60] sm:$0xff]
    %v1176 = vld [vmem:[%s1162 + $0x68] sm:$0xff]
    %v1177 = vld [vmem:[%s1162 + $0x70] sm:$0xff]
    %v1178 = vld [vmem:[%s1162 + $0x78] sm:$0xff]
    %v1179 = vlaneseq
    %v1180 = vshrl.u32 %v1179, 7
    %v1181 = vsub.s32 6, %v1180
    %v1182 = vrot.slane %v55, %v1181
    %1183 = vmatprep.subr.mxu0 0.0
    %1184 = vmatpush1.msra.mxu0 %v1163
    %1185 = vmatprep.subr.mxu0 0.0
    %1186 = vmatpush1.msra.mxu0 %v1164
    %1187 = vmatprep.subr.mxu0 0.0
    %1188 = vmatpush1.msra.mxu0 %v1165
    %1189 = vmatprep.subr.mxu0 0.0
    %1190 = vmatpush1.msra.mxu0 %v1166
    %1191 = vmatprep.subr.mxu0 0.0
    %1192 = vmatpush1.msra.mxu0 %v1167
    %1193 = vmatprep.subr.mxu0 0.0
    %1194 = vmatpush1.msra.mxu0 %v1168
    %1195 = vmatprep.subr.mxu0 0.0
    %1196 = vmatpush1.msra.mxu0 %v1169
    %1197 = vmatprep.subr.mxu0 0.0
    %1198 = vmatpush1.msra.mxu0 %v1170
    %1199 = vmatprep.subr.mxu0 0.0
    %1200 = vmatpush1.msra.mxu0 %v1171
    %1201 = vmatprep.subr.mxu0 0.0
    %1202 = vmatpush1.msra.mxu0 %v1172
    %1203 = vmatprep.subr.mxu0 0.0
    %1204 = vmatpush1.msra.mxu0 %v1173
    %1205 = vmatprep.subr.mxu0 0.0
    %1206 = vmatpush1.msra.mxu0 %v1174
    %1207 = vmatprep.subr.mxu0 0.0
    %1208 = vmatpush1.msra.mxu0 %v1175
    %1209 = vmatprep.subr.mxu0 0.0
    %1210 = vmatpush1.msra.mxu0 %v1176
    %1211 = vmatprep.subr.mxu0 0.0
    %1212 = vmatpush1.msra.mxu0 %v1177
    %1213 = vmatprep.subr.mxu0 0.0
    %1214 = vmatpush1.msra.mxu0 %v1178
    %1215 = vmatprep.subr.mxu0 0.0
    %1216 = vmatpush1.msra.mxu0 0.0
    %1217 = vmatprep.subr.mxu0 0.0
    %1218 = vmatpush1.msra.mxu0 0.0
    %1219 = vmatprep.subr.mxu0 0.0
    %1220 = vmatpush1.msra.mxu0 0.0
    %1221 = vmatprep.subr.mxu0 0.0
    %1222 = vmatpush1.msra.mxu0 0.0
    %1223 = vmatprep.subr.mxu0 0.0
    %1224 = vmatpush1.msra.mxu0 0.0
    %1225 = vmatprep.subr.mxu0 0.0
    %1226 = vmatpush1.msra.mxu0 0.0
    %1227 = vmatprep.subr.mxu0 0.0
    %1228 = vmatpush1.msra.mxu0 0.0
    %1229 = vmatprep.subr.mxu0 0.0
    %1230 = vmatpush1.msra.mxu0 0.0
    %1231 = vmatprep.subr.mxu0 0.0
    %1232 = vmatpush1.msra.mxu0 0.0
    %1233 = vmatprep.subr.mxu0 0.0
    %1234 = vmatpush1.msra.mxu0 0.0
    %1235 = vmatprep.subr.mxu0 0.0
    %1236 = vmatpush1.msra.mxu0 0.0
    %1237 = vmatprep.subr.mxu0 0.0
    %1238 = vmatpush1.msra.mxu0 0.0
    %1239 = vmatprep.subr.mxu0 0.0
    %1240 = vmatpush1.msra.mxu0 0.0
    %1241 = vmatprep.subr.mxu0 0.0
    %1242 = vmatpush1.msra.mxu0 0.0
    %1243 = vmatprep.subr.mxu0 0.0
    %1244 = vmatpush1.msra.mxu0 0.0
    %1245 = vmatprep.subr.mxu0 0.0
    %1246 = vmatpush1.msra.mxu0 0.0
    %1247 = vmatprep.mubr.f32.mxu0 0.0
    %1248 = vmatmul.mubr.f32.gmra.mrb[0].mxu0 %v1160
    %v1249 = vpop.f32.mrb[0].mxu0
    %v1250 = vadd.f32 %v1182, %v1249
    %v1251 = vpop.f32.mrb[0].mxu0
    %1252 = vmatprep.mubr.f32.mxu0 0.0
    %1253 = vmatmul.mubr.f32.gmra.mrb[0].mxu0 %v1161
    %v1254 = vpop.f32.mrb[0].mxu0
    %v1255 = vadd.f32 %v1182, %v1254
    %v1256 = vpop.f32.mrb[0].mxu0
    %1257 = vdwg.mxu0
    %v1258 = vadd.f32 %v1046, %v1250
    %v1259 = vadd.f32 %v1047, %v1255
    %1260 = vadd.xlane.f32.xlu0 %v1258
    %v1261 = vpop.xlane.xlu0 %1260
    %1262 = vadd.xlane.f32.xlu0 %v1259
    %v1263 = vpop.xlane.xlu0 %1262
    %v1264 = vmul.f32 %v1261, 0.03125
    %v1265 = vmul.f32 %v1263, 0.03125
    %v1266 = vmul.f32 %v1258, %v1258
    %v1267 = vmul.f32 %v1259, %v1259
    %1268 = vadd.xlane.f32.xlu0 %v1266
    %v1269 = vpop.xlane.xlu0 %1268
    %1270 = vadd.xlane.f32.xlu0 %v1267
    %v1271 = vpop.xlane.xlu0 %1270
    %v1272 = vmul.f32 %v1269, 0.03125
    %v1273 = vmul.f32 %v1271, 0.03125
    %v1274 = vmul.f32 %v1264, %v1264
    %v1275 = vmul.f32 %v1265, %v1265
    %v1276 = vsub.f32 %v1272, %v1274
    %v1277 = vsub.f32 %v1273, %v1275
    %v1278 = vsub.f32 %v1258, %v1264
    %v1279 = vsub.f32 %v1259, %v1265
    %v1280 = vadd.f32 %v1276, 1e-12
    %v1281 = vadd.f32 %v1277, 1e-12
    %v1282 = vrsqrt.pop %v1280
    %v1283 = vrsqrt.pop %v1281
    %v1284 = vmul.f32 %v1278, %v1282
    %v1285 = vmul.f32 %v1279, %v1283
    %v1286 = vlaneseq
    %v1287 = vshrl.u32 %v1286, 7
    %v1288 = vsub.s32 7, %v1287
    %v1289 = vrot.slane %v55, %v1288
    %v1290 = vmul.f32 %v1284, %v1289
    %v1291 = vmul.f32 %v1285, %v1289
    %v1292 = vlaneseq
    %v1293 = vshrl.u32 %v1292, 7
    %v1294 = vsub.s32 0, %v1293
    %v1295 = vrot.slane %v56, %v1294
    %v1296 = vadd.f32 %v1290, %v1295
    %v1297 = vadd.f32 %v1291, %v1295
    %v1299 = vrot.slane %v1297, 7
    %vm1301 = vcmask 1040384
    %v1302 = vsel %vm1301, %v1296, %v1299
    %s1303 = scalar_lea.vmem [#allocation4], 512
    %v1304 = vld [vmem:[%s1303] sm:$0xff]
    %v1305 = vld [vmem:[%s1303 + $0x8] sm:$0xff]
    %v1306 = vld [vmem:[%s1303 + $0x10] sm:$0xff]
    %v1307 = vld [vmem:[%s1303 + $0x18] sm:$0xff]
    %v1308 = vld [vmem:[%s1303 + $0x20] sm:$0xff]
    %v1309 = vld [vmem:[%s1303 + $0x28] sm:$0xff]
    %v1310 = vld [vmem:[%s1303 + $0x30] sm:$0xff]
    %v1311 = vld [vmem:[%s1303 + $0x38] sm:$0xff]
    %v1312 = vld [vmem:[%s1303 + $0x40] sm:$0xff]
    %v1313 = vld [vmem:[%s1303 + $0x48] sm:$0xff]
    %v1314 = vld [vmem:[%s1303 + $0x50] sm:$0xff]
    %v1315 = vld [vmem:[%s1303 + $0x58] sm:$0xff]
    %v1316 = vld [vmem:[%s1303 + $0x60] sm:$0xff]
    %v1317 = vld [vmem:[%s1303 + $0x68] sm:$0xff]
    %v1318 = vld [vmem:[%s1303 + $0x70] sm:$0xff]
    %v1319 = vld [vmem:[%s1303 + $0x78] sm:$0xff]
    %v1320 = vlaneseq
    %v1321 = vshrl.u32 %v1320, 7
    %v1322 = vsub.s32 1, %v1321
    %v1323 = vrot.slane %v56, %v1322
    %1324 = vmatprep.subr.mxu0 0.0
    %1325 = vmatpush1.msra.mxu0 %v1304
    %1326 = vmatprep.subr.mxu0 0.0
    %1327 = vmatpush1.msra.mxu0 %v1305
    %1328 = vmatprep.subr.mxu0 0.0
    %1329 = vmatpush1.msra.mxu0 %v1306
    %1330 = vmatprep.subr.mxu0 0.0
    %1331 = vmatpush1.msra.mxu0 %v1307
    %1332 = vmatprep.subr.mxu0 0.0
    %1333 = vmatpush1.msra.mxu0 %v1308
    %1334 = vmatprep.subr.mxu0 0.0
    %1335 = vmatpush1.msra.mxu0 %v1309
    %1336 = vmatprep.subr.mxu0 0.0
    %1337 = vmatpush1.msra.mxu0 %v1310
    %1338 = vmatprep.subr.mxu0 0.0
    %1339 = vmatpush1.msra.mxu0 %v1311
    %1340 = vmatprep.subr.mxu0 0.0
    %1341 = vmatpush1.msra.mxu0 %v1312
    %1342 = vmatprep.subr.mxu0 0.0
    %1343 = vmatpush1.msra.mxu0 %v1313
    %1344 = vmatprep.subr.mxu0 0.0
    %1345 = vmatpush1.msra.mxu0 %v1314
    %1346 = vmatprep.subr.mxu0 0.0
    %1347 = vmatpush1.msra.mxu0 %v1315
    %1348 = vmatprep.subr.mxu0 0.0
    %1349 = vmatpush1.msra.mxu0 %v1316
    %1350 = vmatprep.subr.mxu0 0.0
    %1351 = vmatpush1.msra.mxu0 %v1317
    %1352 = vmatprep.subr.mxu0 0.0
    %1353 = vmatpush1.msra.mxu0 %v1318
    %1354 = vmatprep.subr.mxu0 0.0
    %1355 = vmatpush1.msra.mxu0 %v1319
    %1356 = vmatprep.subr.mxu0 0.0
    %1357 = vmatpush1.msra.mxu0 0.0
    %1358 = vmatprep.subr.mxu0 0.0
    %1359 = vmatpush1.msra.mxu0 0.0
    %1360 = vmatprep.subr.mxu0 0.0
    %1361 = vmatpush1.msra.mxu0 0.0
    %1362 = vmatprep.subr.mxu0 0.0
    %1363 = vmatpush1.msra.mxu0 0.0
    %1364 = vmatprep.subr.mxu0 0.0
    %1365 = vmatpush1.msra.mxu0 0.0
    %1366 = vmatprep.subr.mxu0 0.0
    %1367 = vmatpush1.msra.mxu0 0.0
    %1368 = vmatprep.subr.mxu0 0.0
    %1369 = vmatpush1.msra.mxu0 0.0
    %1370 = vmatprep.subr.mxu0 0.0
    %1371 = vmatpush1.msra.mxu0 0.0
    %1372 = vmatprep.subr.mxu0 0.0
    %1373 = vmatpush1.msra.mxu0 0.0
    %1374 = vmatprep.subr.mxu0 0.0
    %1375 = vmatpush1.msra.mxu0 0.0
    %1376 = vmatprep.subr.mxu0 0.0
    %1377 = vmatpush1.msra.mxu0 0.0
    %1378 = vmatprep.subr.mxu0 0.0
    %1379 = vmatpush1.msra.mxu0 0.0
    %1380 = vmatprep.subr.mxu0 0.0
    %1381 = vmatpush1.msra.mxu0 0.0
    %1382 = vmatprep.subr.mxu0 0.0
    %1383 = vmatpush1.msra.mxu0 0.0
    %1384 = vmatprep.subr.mxu0 0.0
    %1385 = vmatpush1.msra.mxu0 0.0
    %1386 = vmatprep.subr.mxu0 0.0
    %1387 = vmatpush1.msra.mxu0 0.0
    %1388 = vmatprep.mubr.f32.mxu0 0.0
    %1389 = vmatmul.mubr.f32.gmra.mrb[0].mxu0 %v1302
    %v1390 = vpop.f32.mrb[0].mxu0
    %v1391 = vadd.f32 %v1323, %v1390
    %v1392 = vpop.f32.mrb[0].mxu0
    %1393 = vdwg.mxu0
    %v1394 = vtanh.pop %v1391
    %s1395 = scalar_lea.vmem [#allocation4], 640
    %v1396 = vld [vmem:[%s1395] sm:$0xff]
    %v1397 = vld [vmem:[%s1395 + $0x8] sm:$0xff]
    %v1398 = vld [vmem:[%s1395 + $0x10] sm:$0xff]
    %v1399 = vld [vmem:[%s1395 + $0x18] sm:$0xff]
    %v1400 = vld [vmem:[%s1395 + $0x20] sm:$0xff]
    %v1401 = vld [vmem:[%s1395 + $0x28] sm:$0xff]
    %v1402 = vld [vmem:[%s1395 + $0x30] sm:$0xff]
    %v1403 = vld [vmem:[%s1395 + $0x38] sm:$0xff]
    %v1404 = vld [vmem:[%s1395 + $0x40] sm:$0xff]
    %v1405 = vld [vmem:[%s1395 + $0x48] sm:$0xff]
    %v1406 = vld [vmem:[%s1395 + $0x50] sm:$0xff]
    %v1407 = vld [vmem:[%s1395 + $0x58] sm:$0xff]
    %v1408 = vld [vmem:[%s1395 + $0x60] sm:$0xff]
    %v1409 = vld [vmem:[%s1395 + $0x68] sm:$0xff]
    %v1410 = vld [vmem:[%s1395 + $0x70] sm:$0xff]
    %v1411 = vld [vmem:[%s1395 + $0x78] sm:$0xff]
    %v1412 = vlaneseq
    %v1413 = vshrl.u32 %v1412, 7
    %v1414 = vsub.s32 2, %v1413
    %v1415 = vrot.slane %v56, %v1414
    %1416 = vmatprep.subr.mxu0 0.0
    %1417 = vmatpush1.msra.mxu0 %v1396
    %1418 = vmatprep.subr.mxu0 0.0
    %1419 = vmatpush1.msra.mxu0 %v1397
    %1420 = vmatprep.subr.mxu0 0.0
    %1421 = vmatpush1.msra.mxu0 %v1398
    %1422 = vmatprep.subr.mxu0 0.0
    %1423 = vmatpush1.msra.mxu0 %v1399
    %1424 = vmatprep.subr.mxu0 0.0
    %1425 = vmatpush1.msra.mxu0 %v1400
    %1426 = vmatprep.subr.mxu0 0.0
    %1427 = vmatpush1.msra.mxu0 %v1401
    %1428 = vmatprep.subr.mxu0 0.0
    %1429 = vmatpush1.msra.mxu0 %v1402
    %1430 = vmatprep.subr.mxu0 0.0
    %1431 = vmatpush1.msra.mxu0 %v1403
    %1432 = vmatprep.subr.mxu0 0.0
    %1433 = vmatpush1.msra.mxu0 %v1404
    %1434 = vmatprep.subr.mxu0 0.0
    %1435 = vmatpush1.msra.mxu0 %v1405
    %1436 = vmatprep.subr.mxu0 0.0
    %1437 = vmatpush1.msra.mxu0 %v1406
    %1438 = vmatprep.subr.mxu0 0.0
    %1439 = vmatpush1.msra.mxu0 %v1407
    %1440 = vmatprep.subr.mxu0 0.0
    %1441 = vmatpush1.msra.mxu0 %v1408
    %1442 = vmatprep.subr.mxu0 0.0
    %1443 = vmatpush1.msra.mxu0 %v1409
    %1444 = vmatprep.subr.mxu0 0.0
    %1445 = vmatpush1.msra.mxu0 %v1410
    %1446 = vmatprep.subr.mxu0 0.0
    %1447 = vmatpush1.msra.mxu0 %v1411
    %1448 = vmatprep.subr.mxu0 0.0
    %1449 = vmatpush1.msra.mxu0 0.0
    %1450 = vmatprep.subr.mxu0 0.0
    %1451 = vmatpush1.msra.mxu0 0.0
    %1452 = vmatprep.subr.mxu0 0.0
    %1453 = vmatpush1.msra.mxu0 0.0
    %1454 = vmatprep.subr.mxu0 0.0
    %1455 = vmatpush1.msra.mxu0 0.0
    %1456 = vmatprep.subr.mxu0 0.0
    %1457 = vmatpush1.msra.mxu0 0.0
    %1458 = vmatprep.subr.mxu0 0.0
    %1459 = vmatpush1.msra.mxu0 0.0
    %1460 = vmatprep.subr.mxu0 0.0
    %1461 = vmatpush1.msra.mxu0 0.0
    %1462 = vmatprep.subr.mxu0 0.0
    %1463 = vmatpush1.msra.mxu0 0.0
    %1464 = vmatprep.subr.mxu0 0.0
    %1465 = vmatpush1.msra.mxu0 0.0
    %1466 = vmatprep.subr.mxu0 0.0
    %1467 = vmatpush1.msra.mxu0 0.0
    %1468 = vmatprep.subr.mxu0 0.0
    %1469 = vmatpush1.msra.mxu0 0.0
    %1470 = vmatprep.subr.mxu0 0.0
    %1471 = vmatpush1.msra.mxu0 0.0
    %1472 = vmatprep.subr.mxu0 0.0
    %1473 = vmatpush1.msra.mxu0 0.0
    %1474 = vmatprep.subr.mxu0 0.0
    %1475 = vmatpush1.msra.mxu0 0.0
    %1476 = vmatprep.subr.mxu0 0.0
    %1477 = vmatpush1.msra.mxu0 0.0
    %1478 = vmatprep.subr.mxu0 0.0
    %1479 = vmatpush1.msra.mxu0 0.0
    %1480 = vmatprep.mubr.f32.mxu0 0.0
    %1481 = vmatmul.mubr.f32.gmra.mrb[0].mxu0 %v1394
    %v1482 = vpop.f32.mrb[0].mxu0
    %v1483 = vadd.f32 %v1415, %v1482
    %v1484 = vpop.f32.mrb[0].mxu0
    %1485 = vdwg.mxu0
    %s1486 = scalar_lea.vmem %s0, 16
    %v1487 = vld [vmem:[%s1486] sm:$0xff]
    %v1488 = vld [vmem:[%s1486 + $0x8] sm:$0xff]
    %s1489 = scalar_lea.vmem %s1, 16
    %v1490 = vld [vmem:[%s1489] sm:$0xff]
    %v1491 = vld [vmem:[%s1489 + $0x8] sm:$0xff]
    %s1492 = scalar_lea.vmem %s5, 16
    %v1493 = vld [vmem:[%s1492] sm:$0xff]
    %v1494 = vld [vmem:[%s1492 + $0x8] sm:$0xff]
    %1495 = vadd.xlane.f32.xlu0 %v1487
    %v1496 = vpop.xlane.xlu0 %1495
    %1497 = vadd.xlane.f32.xlu0 %v1488
    %v1498 = vpop.xlane.xlu0 %1497
    %v1499 = vmul.f32 %v1496, 0.03125
    %v1500 = vmul.f32 %v1498, 0.03125
    %v1501 = vmul.f32 %v1487, %v1487
    %v1502 = vmul.f32 %v1488, %v1488
    %1503 = vadd.xlane.f32.xlu0 %v1501
    %v1504 = vpop.xlane.xlu0 %1503
    %1505 = vadd.xlane.f32.xlu0 %v1502
    %v1506 = vpop.xlane.xlu0 %1505
    %v1507 = vmul.f32 %v1504, 0.03125
    %v1508 = vmul.f32 %v1506, 0.03125
    %v1509 = vmul.f32 %v1499, %v1499
    %v1510 = vmul.f32 %v1500, %v1500
    %v1511 = vsub.f32 %v1507, %v1509
    %v1512 = vsub.f32 %v1508, %v1510
    %v1513 = vsub.f32 %v1487, %v1499
    %v1514 = vsub.f32 %v1488, %v1500
    %v1515 = vadd.f32 %v1511, 1e-12
    %v1516 = vadd.f32 %v1512, 1e-12
    %v1517 = vrsqrt.pop %v1515
    %v1518 = vrsqrt.pop %v1516
    %v1519 = vmul.f32 %v1513, %v1517
    %v1520 = vmul.f32 %v1514, %v1518
    %v1521 = vlaneseq
    %v1522 = vshrl.u32 %v1521, 7
    %v1523 = vsub.s32 0, %v1522
    %v1524 = vrot.slane %v1493, %v1523
    %v1525 = vmul.f32 %v1519, %v1524
    %v1526 = vmul.f32 %v1520, %v1524
    %v1527 = vlaneseq
    %v1528 = vshrl.u32 %v1527, 7
    %v1529 = vsub.s32 1, %v1528
    %v1530 = vrot.slane %v1493, %v1529
    %v1531 = vadd.f32 %v1525, %v1530
    %v1532 = vadd.f32 %v1526, %v1530
    %s1533 = scalar_lea.vmem [#allocation2], 768
    %v1534 = vld [vmem:[%s1533] sm:$0xff]
    %v1535 = vld [vmem:[%s1533 + $0x8] sm:$0xff]
    %v1536 = vld [vmem:[%s1533 + $0x10] sm:$0xff]
    %v1537 = vld [vmem:[%s1533 + $0x18] sm:$0xff]
    %v1538 = vld [vmem:[%s1533 + $0x20] sm:$0xff]
    %v1539 = vld [vmem:[%s1533 + $0x28] sm:$0xff]
    %v1540 = vld [vmem:[%s1533 + $0x30] sm:$0xff]
    %v1541 = vld [vmem:[%s1533 + $0x38] sm:$0xff]
    %v1542 = vld [vmem:[%s1533 + $0x40] sm:$0xff]
    %v1543 = vld [vmem:[%s1533 + $0x48] sm:$0xff]
    %v1544 = vld [vmem:[%s1533 + $0x50] sm:$0xff]
    %v1545 = vld [vmem:[%s1533 + $0x58] sm:$0xff]
    %v1546 = vld [vmem:[%s1533 + $0x60] sm:$0xff]
    %v1547 = vld [vmem:[%s1533 + $0x68] sm:$0xff]
    %v1548 = vld [vmem:[%s1533 + $0x70] sm:$0xff]
    %v1549 = vld [vmem:[%s1533 + $0x78] sm:$0xff]
    %v1550 = vld [vmem:[%s1533 + $0x80] sm:$0xff]
    %v1551 = vld [vmem:[%s1533 + $0x88] sm:$0xff]
    %v1552 = vld [vmem:[%s1533 + $0x90] sm:$0xff]
    %v1553 = vld [vmem:[%s1533 + $0x98] sm:$0xff]
    %v1554 = vld [vmem:[%s1533 + $0xa0] sm:$0xff]
    %v1555 = vld [vmem:[%s1533 + $0xa8] sm:$0xff]
    %v1556 = vld [vmem:[%s1533 + $0xb0] sm:$0xff]
    %v1557 = vld [vmem:[%s1533 + $0xb8] sm:$0xff]
    %v1558 = vld [vmem:[%s1533 + $0xc0] sm:$0xff]
    %v1559 = vld [vmem:[%s1533 + $0xc8] sm:$0xff]
    %v1560 = vld [vmem:[%s1533 + $0xd0] sm:$0xff]
    %v1561 = vld [vmem:[%s1533 + $0xd8] sm:$0xff]
    %v1562 = vld [vmem:[%s1533 + $0xe0] sm:$0xff]
    %v1563 = vld [vmem:[%s1533 + $0xe8] sm:$0xff]
    %v1564 = vld [vmem:[%s1533 + $0xf0] sm:$0xff]
    %v1565 = vld [vmem:[%s1533 + $0xf8] sm:$0xff]
    %v1566 = vld [vmem:[%s1533 + $0x100] sm:$0xff]
    %v1567 = vld [vmem:[%s1533 + $0x108] sm:$0xff]
    %v1568 = vld [vmem:[%s1533 + $0x110] sm:$0xff]
    %v1569 = vld [vmem:[%s1533 + $0x118] sm:$0xff]
    %v1570 = vld [vmem:[%s1533 + $0x120] sm:$0xff]
    %v1571 = vld [vmem:[%s1533 + $0x128] sm:$0xff]
    %v1572 = vld [vmem:[%s1533 + $0x130] sm:$0xff]
    %v1573 = vld [vmem:[%s1533 + $0x138] sm:$0xff]
    %v1574 = vld [vmem:[%s1533 + $0x140] sm:$0xff]
    %v1575 = vld [vmem:[%s1533 + $0x148] sm:$0xff]
    %v1576 = vld [vmem:[%s1533 + $0x150] sm:$0xff]
    %v1577 = vld [vmem:[%s1533 + $0x158] sm:$0xff]
    %v1578 = vld [vmem:[%s1533 + $0x160] sm:$0xff]
    %v1579 = vld [vmem:[%s1533 + $0x168] sm:$0xff]
    %v1580 = vld [vmem:[%s1533 + $0x170] sm:$0xff]
    %v1581 = vld [vmem:[%s1533 + $0x178] sm:$0xff]
    %v1582 = vld [vmem:[%s1533 + $0x180] sm:$0xff]
    %v1583 = vld [vmem:[%s1533 + $0x188] sm:$0xff]
    %v1584 = vld [vmem:[%s1533 + $0x190] sm:$0xff]
    %v1585 = vld [vmem:[%s1533 + $0x198] sm:$0xff]
    %v1586 = vld [vmem:[%s1533 + $0x1a0] sm:$0xff]
    %v1587 = vld [vmem:[%s1533 + $0x1a8] sm:$0xff]
    %v1588 = vld [vmem:[%s1533 + $0x1b0] sm:$0xff]
    %v1589 = vld [vmem:[%s1533 + $0x1b8] sm:$0xff]
    %v1590 = vld [vmem:[%s1533 + $0x1c0] sm:$0xff]
    %v1591 = vld [vmem:[%s1533 + $0x1c8] sm:$0xff]
    %v1592 = vld [vmem:[%s1533 + $0x1d0] sm:$0xff]
    %v1593 = vld [vmem:[%s1533 + $0x1d8] sm:$0xff]
    %v1594 = vld [vmem:[%s1533 + $0x1e0] sm:$0xff]
    %v1595 = vld [vmem:[%s1533 + $0x1e8] sm:$0xff]
    %v1596 = vld [vmem:[%s1533 + $0x1f0] sm:$0xff]
    %v1597 = vld [vmem:[%s1533 + $0x1f8] sm:$0xff]
    %v1598 = vld [vmem:[%s1533 + $0x200] sm:$0xff]
    %v1599 = vld [vmem:[%s1533 + $0x208] sm:$0xff]
    %v1600 = vld [vmem:[%s1533 + $0x210] sm:$0xff]
    %v1601 = vld [vmem:[%s1533 + $0x218] sm:$0xff]
    %v1602 = vld [vmem:[%s1533 + $0x220] sm:$0xff]
    %v1603 = vld [vmem:[%s1533 + $0x228] sm:$0xff]
    %v1604 = vld [vmem:[%s1533 + $0x230] sm:$0xff]
    %v1605 = vld [vmem:[%s1533 + $0x238] sm:$0xff]
    %v1606 = vld [vmem:[%s1533 + $0x240] sm:$0xff]
    %v1607 = vld [vmem:[%s1533 + $0x248] sm:$0xff]
    %v1608 = vld [vmem:[%s1533 + $0x250] sm:$0xff]
    %v1609 = vld [vmem:[%s1533 + $0x258] sm:$0xff]
    %v1610 = vld [vmem:[%s1533 + $0x260] sm:$0xff]
    %v1611 = vld [vmem:[%s1533 + $0x268] sm:$0xff]
    %v1612 = vld [vmem:[%s1533 + $0x270] sm:$0xff]
    %v1613 = vld [vmem:[%s1533 + $0x278] sm:$0xff]
    %v1614 = vld [vmem:[%s1533 + $0x280] sm:$0xff]
    %v1615 = vld [vmem:[%s1533 + $0x288] sm:$0xff]
    %v1616 = vld [vmem:[%s1533 + $0x290] sm:$0xff]
    %v1617 = vld [vmem:[%s1533 + $0x298] sm:$0xff]
    %v1618 = vld [vmem:[%s1533 + $0x2a0] sm:$0xff]
    %v1619 = vld [vmem:[%s1533 + $0x2a8] sm:$0xff]
    %v1620 = vld [vmem:[%s1533 + $0x2b0] sm:$0xff]
    %v1621 = vld [vmem:[%s1533 + $0x2b8] sm:$0xff]
    %v1622 = vld [vmem:[%s1533 + $0x2c0] sm:$0xff]
    %v1623 = vld [vmem:[%s1533 + $0x2c8] sm:$0xff]
    %v1624 = vld [vmem:[%s1533 + $0x2d0] sm:$0xff]
    %v1625 = vld [vmem:[%s1533 + $0x2d8] sm:$0xff]
    %v1626 = vld [vmem:[%s1533 + $0x2e0] sm:$0xff]
    %v1627 = vld [vmem:[%s1533 + $0x2e8] sm:$0xff]
    %v1628 = vld [vmem:[%s1533 + $0x2f0] sm:$0xff]
    %v1629 = vld [vmem:[%s1533 + $0x2f8] sm:$0xff]
    %s1630 = scalar_lea.vmem %s3, 6
    %v1631 = vld [vmem:[%s1630] sm:$0x3f]
    %v1633 = vlaneseq
    %v1634 = vshrl.u32 %v1633, 7
    %v1635 = vsub.s32 0, %v1634
    %v1636 = vrot.slane %v1631, %v1635
    %v1637 = vlaneseq
    %v1638 = vshrl.u32 %v1637, 7
    %v1639 = vsub.s32 1, %v1638
    %v1640 = vrot.slane %v1631, %v1639
    %v1641 = vlaneseq
    %v1642 = vshrl.u32 %v1641, 7
    %v1643 = vsub.s32 2, %v1642
    %v1644 = vrot.slane %v1631, %v1643
    %v1645 = vlaneseq
    %v1646 = vshrl.u32 %v1645, 7
    %v1647 = vsub.s32 3, %v1646
    %v1648 = vrot.slane %v1631, %v1647
    %v1649 = vlaneseq
    %v1650 = vshrl.u32 %v1649, 7
    %v1651 = vsub.s32 4, %v1650
    %v1652 = vrot.slane %v1631, %v1651
    %v1653 = vlaneseq
    %v1654 = vshrl.u32 %v1653, 7
    %v1655 = vsub.s32 5, %v1654
    %v1656 = vrot.slane %v1631, %v1655
    %1663 = vmatprep.subr.mxu0 %v1535
    %1664 = vmatpush1.msra.mxu0 %v1534
    %1665 = vmatprep.subr.mxu0 %v1541
    %1666 = vmatpush1.msra.mxu0 %v1540
    %1667 = vmatprep.subr.mxu0 %v1547
    %1668 = vmatpush1.msra.mxu0 %v1546
    %1669 = vmatprep.subr.mxu0 %v1553
    %1670 = vmatpush1.msra.mxu0 %v1552
    %1671 = vmatprep.subr.mxu0 %v1559
    %1672 = vmatpush1.msra.mxu0 %v1558
    %1673 = vmatprep.subr.mxu0 %v1565
    %1674 = vmatpush1.msra.mxu0 %v1564
    %1675 = vmatprep.subr.mxu0 %v1571
    %1676 = vmatpush1.msra.mxu0 %v1570
    %1677 = vmatprep.subr.mxu0 %v1577
    %1678 = vmatpush1.msra.mxu0 %v1576
    %1679 = vmatprep.subr.mxu0 %v1583
    %1680 = vmatpush1.msra.mxu0 %v1582
    %1681 = vmatprep.subr.mxu0 %v1589
    %1682 = vmatpush1.msra.mxu0 %v1588
    %1683 = vmatprep.subr.mxu0 %v1595
    %1684 = vmatpush1.msra.mxu0 %v1594
    %1685 = vmatprep.subr.mxu0 %v1601
    %1686 = vmatpush1.msra.mxu0 %v1600
    %1687 = vmatprep.subr.mxu0 %v1607
    %1688 = vmatpush1.msra.mxu0 %v1606
    %1689 = vmatprep.subr.mxu0 %v1613
    %1690 = vmatpush1.msra.mxu0 %v1612
    %1691 = vmatprep.subr.mxu0 %v1619
    %1692 = vmatpush1.msra.mxu0 %v1618
    %1693 = vmatprep.subr.mxu0 %v1625
    %1694 = vmatpush1.msra.mxu0 %v1624
    %1695 = vmatprep.subr.mxu0 0.0
    %1696 = vmatpush1.msra.mxu0 0.0
    %1697 = vmatprep.subr.mxu0 0.0
    %1698 = vmatpush1.msra.mxu0 0.0
    %1699 = vmatprep.subr.mxu0 0.0
    %1700 = vmatpush1.msra.mxu0 0.0
    %1701 = vmatprep.subr.mxu0 0.0
    %1702 = vmatpush1.msra.mxu0 0.0
    %1703 = vmatprep.subr.mxu0 0.0
    %1704 = vmatpush1.msra.mxu0 0.0
    %1705 = vmatprep.subr.mxu0 0.0
    %1706 = vmatpush1.msra.mxu0 0.0
    %1707 = vmatprep.subr.mxu0 0.0
    %1708 = vmatpush1.msra.mxu0 0.0
    %1709 = vmatprep.subr.mxu0 0.0
    %1710 = vmatpush1.msra.mxu0 0.0
    %1711 = vmatprep.subr.mxu0 0.0
    %1712 = vmatpush1.msra.mxu0 0.0
    %1713 = vmatprep.subr.mxu0 0.0
    %1714 = vmatpush1.msra.mxu0 0.0
    %1715 = vmatprep.subr.mxu0 0.0
    %1716 = vmatpush1.msra.mxu0 0.0
    %1717 = vmatprep.subr.mxu0 0.0
    %1718 = vmatpush1.msra.mxu0 0.0
    %1719 = vmatprep.subr.mxu0 0.0
    %1720 = vmatpush1.msra.mxu0 0.0
    %1721 = vmatprep.subr.mxu0 0.0
    %1722 = vmatpush1.msra.mxu0 0.0
    %1723 = vmatprep.subr.mxu0 0.0
    %1724 = vmatpush1.msra.mxu0 0.0
    %1725 = vmatprep.subr.mxu0 0.0
    %1726 = vmatpush1.msra.mxu0 0.0
    %1727 = vmatprep.mubr.f32.mxu0 0.0
    %1728 = vmatmul.mubr.f32.gmra.mrb[0].mxu0 %v1531
    %v1729 = vpop.f32.mrb[0].mxu0
    %v1730 = vadd.f32 %v1636, %v1729
    %v1731 = vpop.f32.mrb[0].mxu0
    %v1732 = vadd.f32 %v1640, %v1731
    %1733 = vmatprep.mubr.f32.mxu0 0.0
    %1734 = vmatmul.mubr.f32.gmra.mrb[0].mxu0 %v1532
    %v1735 = vpop.f32.mrb[0].mxu0
    %v1736 = vadd.f32 %v1636, %v1735
    %v1737 = vpop.f32.mrb[0].mxu0
    %v1738 = vadd.f32 %v1640, %v1737
    %1739 = vdwg.mxu0
    %1740 = vmatprep.subr.mxu0 %v1537
    %1741 = vmatpush1.msra.mxu0 %v1536
    %1742 = vmatprep.subr.mxu0 %v1543
    %1743 = vmatpush1.msra.mxu0 %v1542
    %1744 = vmatprep.subr.mxu0 %v1549
    %1745 = vmatpush1.msra.mxu0 %v1548
    %1746 = vmatprep.subr.mxu0 %v1555
    %1747 = vmatpush1.msra.mxu0 %v1554
    %1748 = vmatprep.subr.mxu0 %v1561
    %1749 = vmatpush1.msra.mxu0 %v1560
    %1750 = vmatprep.subr.mxu0 %v1567
    %1751 = vmatpush1.msra.mxu0 %v1566
    %1752 = vmatprep.subr.mxu0 %v1573
    %1753 = vmatpush1.msra.mxu0 %v1572
    %1754 = vmatprep.subr.mxu0 %v1579
    %1755 = vmatpush1.msra.mxu0 %v1578
    %1756 = vmatprep.subr.mxu0 %v1585
    %1757 = vmatpush1.msra.mxu0 %v1584
    %1758 = vmatprep.subr.mxu0 %v1591
    %1759 = vmatpush1.msra.mxu0 %v1590
    %1760 = vmatprep.subr.mxu0 %v1597
    %1761 = vmatpush1.msra.mxu0 %v1596
    %1762 = vmatprep.subr.mxu0 %v1603
    %1763 = vmatpush1.msra.mxu0 %v1602
    %1764 = vmatprep.subr.mxu0 %v1609
    %1765 = vmatpush1.msra.mxu0 %v1608
    %1766 = vmatprep.subr.mxu0 %v1615
    %1767 = vmatpush1.msra.mxu0 %v1614
    %1768 = vmatprep.subr.mxu0 %v1621
    %1769 = vmatpush1.msra.mxu0 %v1620
    %1770 = vmatprep.subr.mxu0 %v1627
    %1771 = vmatpush1.msra.mxu0 %v1626
    %1772 = vmatprep.subr.mxu0 0.0
    %1773 = vmatpush1.msra.mxu0 0.0
    %1774 = vmatprep.subr.mxu0 0.0
    %1775 = vmatpush1.msra.mxu0 0.0
    %1776 = vmatprep.subr.mxu0 0.0
    %1777 = vmatpush1.msra.mxu0 0.0
    %1778 = vmatprep.subr.mxu0 0.0
    %1779 = vmatpush1.msra.mxu0 0.0
    %1780 = vmatprep.subr.mxu0 0.0
    %1781 = vmatpush1.msra.mxu0 0.0
    %1782 = vmatprep.subr.mxu0 0.0
    %1783 = vmatpush1.msra.mxu0 0.0
    %1784 = vmatprep.subr.mxu0 0.0
    %1785 = vmatpush1.msra.mxu0 0.0
    %1786 = vmatprep.subr.mxu0 0.0
    %1787 = vmatpush1.msra.mxu0 0.0
    %1788 = vmatprep.subr.mxu0 0.0
    %1789 = vmatpush1.msra.mxu0 0.0
    %1790 = vmatprep.subr.mxu0 0.0
    %1791 = vmatpush1.msra.mxu0 0.0
    %1792 = vmatprep.subr.mxu0 0.0
    %1793 = vmatpush1.msra.mxu0 0.0
    %1794 = vmatprep.subr.mxu0 0.0
    %1795 = vmatpush1.msra.mxu0 0.0
    %1796 = vmatprep.subr.mxu0 0.0
    %1797 = vmatpush1.msra.mxu0 0.0
    %1798 = vmatprep.subr.mxu0 0.0
    %1799 = vmatpush1.msra.mxu0 0.0
    %1800 = vmatprep.subr.mxu0 0.0
    %1801 = vmatpush1.msra.mxu0 0.0
    %1802 = vmatprep.subr.mxu0 0.0
    %1803 = vmatpush1.msra.mxu0 0.0
    %1804 = vmatprep.mubr.f32.mxu0 0.0
    %1805 = vmatmul.mubr.f32.gmra.mrb[0].mxu0 %v1531
    %v1806 = vpop.f32.mrb[0].mxu0
    %v1807 = vadd.f32 %v1644, %v1806
    %v1808 = vpop.f32.mrb[0].mxu0
    %v1809 = vadd.f32 %v1648, %v1808
    %1810 = vmatprep.mubr.f32.mxu0 0.0
    %1811 = vmatmul.mubr.f32.gmra.mrb[0].mxu0 %v1532
    %v1812 = vpop.f32.mrb[0].mxu0
    %v1813 = vadd.f32 %v1644, %v1812
    %v1814 = vpop.f32.mrb[0].mxu0
    %v1815 = vadd.f32 %v1648, %v1814
    %1816 = vdwg.mxu0
    %1817 = vmatprep.subr.mxu0 %v1539
    %1818 = vmatpush1.msra.mxu0 %v1538
    %1819 = vmatprep.subr.mxu0 %v1545
    %1820 = vmatpush1.msra.mxu0 %v1544
    %1821 = vmatprep.subr.mxu0 %v1551
    %1822 = vmatpush1.msra.mxu0 %v1550
    %1823 = vmatprep.subr.mxu0 %v1557
    %1824 = vmatpush1.msra.mxu0 %v1556
    %1825 = vmatprep.subr.mxu0 %v1563
    %1826 = vmatpush1.msra.mxu0 %v1562
    %1827 = vmatprep.subr.mxu0 %v1569
    %1828 = vmatpush1.msra.mxu0 %v1568
    %1829 = vmatprep.subr.mxu0 %v1575
    %1830 = vmatpush1.msra.mxu0 %v1574
    %1831 = vmatprep.subr.mxu0 %v1581
    %1832 = vmatpush1.msra.mxu0 %v1580
    %1833 = vmatprep.subr.mxu0 %v1587
    %1834 = vmatpush1.msra.mxu0 %v1586
    %1835 = vmatprep.subr.mxu0 %v1593
    %1836 = vmatpush1.msra.mxu0 %v1592
    %1837 = vmatprep.subr.mxu0 %v1599
    %1838 = vmatpush1.msra.mxu0 %v1598
    %1839 = vmatprep.subr.mxu0 %v1605
    %1840 = vmatpush1.msra.mxu0 %v1604
    %1841 = vmatprep.subr.mxu0 %v1611
    %1842 = vmatpush1.msra.mxu0 %v1610
    %1843 = vmatprep.subr.mxu0 %v1617
    %1844 = vmatpush1.msra.mxu0 %v1616
    %1845 = vmatprep.subr.mxu0 %v1623
    %1846 = vmatpush1.msra.mxu0 %v1622
    %1847 = vmatprep.subr.mxu0 %v1629
    %1848 = vmatpush1.msra.mxu0 %v1628
    %1849 = vmatprep.subr.mxu0 0.0
    %1850 = vmatpush1.msra.mxu0 0.0
    %1851 = vmatprep.subr.mxu0 0.0
    %1852 = vmatpush1.msra.mxu0 0.0
    %1853 = vmatprep.subr.mxu0 0.0
    %1854 = vmatpush1.msra.mxu0 0.0
    %1855 = vmatprep.subr.mxu0 0.0
    %1856 = vmatpush1.msra.mxu0 0.0
    %1857 = vmatprep.subr.mxu0 0.0
    %1858 = vmatpush1.msra.mxu0 0.0
    %1859 = vmatprep.subr.mxu0 0.0
    %1860 = vmatpush1.msra.mxu0 0.0
    %1861 = vmatprep.subr.mxu0 0.0
    %1862 = vmatpush1.msra.mxu0 0.0
    %1863 = vmatprep.subr.mxu0 0.0
    %1864 = vmatpush1.msra.mxu0 0.0
    %1865 = vmatprep.subr.mxu0 0.0
    %1866 = vmatpush1.msra.mxu0 0.0
    %1867 = vmatprep.subr.mxu0 0.0
    %1868 = vmatpush1.msra.mxu0 0.0
    %1869 = vmatprep.subr.mxu0 0.0
    %1870 = vmatpush1.msra.mxu0 0.0
    %1871 = vmatprep.subr.mxu0 0.0
    %1872 = vmatpush1.msra.mxu0 0.0
    %1873 = vmatprep.subr.mxu0 0.0
    %1874 = vmatpush1.msra.mxu0 0.0
    %1875 = vmatprep.subr.mxu0 0.0
    %1876 = vmatpush1.msra.mxu0 0.0
    %1877 = vmatprep.subr.mxu0 0.0
    %1878 = vmatpush1.msra.mxu0 0.0
    %1879 = vmatprep.subr.mxu0 0.0
    %1880 = vmatpush1.msra.mxu0 0.0
    %1881 = vmatprep.mubr.f32.mxu0 0.0
    %1882 = vmatmul.mubr.f32.gmra.mrb[0].mxu0 %v1531
    %v1883 = vpop.f32.mrb[0].mxu0
    %v1884 = vadd.f32 %v1652, %v1883
    %v1885 = vpop.f32.mrb[0].mxu0
    %v1886 = vadd.f32 %v1656, %v1885
    %1887 = vmatprep.mubr.f32.mxu0 0.0
    %1888 = vmatmul.mubr.f32.gmra.mrb[0].mxu0 %v1532
    %v1889 = vpop.f32.mrb[0].mxu0
    %v1890 = vadd.f32 %v1652, %v1889
    %v1891 = vpop.f32.mrb[0].mxu0
    %v1892 = vadd.f32 %v1656, %v1891
    %1893 = vdwg.mxu0
    %1894 = vmatprep.subr.mxu0 0.0
    %1895 = vmatpush1.xpose.msra.mxu0 %v1807
    %1896 = vmatprep.subr.mxu0 0.0
    %1897 = vmatpush1.xpose.msra.mxu0 %v1813
    %1898 = vmatprep.subr.mxu0 0.0
    %1899 = vmatpush1.xpose.msra.mxu0 0.0
    %1900 = vmatprep.subr.mxu0 0.0
    %1901 = vmatpush1.xpose.msra.mxu0 0.0
    %1902 = vmatprep.subr.mxu0 0.0
    %1903 = vmatpush1.xpose.msra.mxu0 0.0
    %1904 = vmatprep.subr.mxu0 0.0
    %1905 = vmatpush1.xpose.msra.mxu0 0.0
    %1906 = vmatprep.subr.mxu0 0.0
    %1907 = vmatpush1.xpose.msra.mxu0 0.0
    %1908 = vmatprep.subr.mxu0 0.0
    %1909 = vmatpush1.xpose.msra.mxu0 0.0
    %1910 = vmatprep.subr.mxu0 0.0
    %1911 = vmatpush1.xpose.msra.mxu0 0.0
    %1912 = vmatprep.subr.mxu0 0.0
    %1913 = vmatpush1.xpose.msra.mxu0 0.0
    %1914 = vmatprep.subr.mxu0 0.0
    %1915 = vmatpush1.xpose.msra.mxu0 0.0
    %1916 = vmatprep.subr.mxu0 0.0
    %1917 = vmatpush1.xpose.msra.mxu0 0.0
    %1918 = vmatprep.subr.mxu0 0.0
    %1919 = vmatpush1.xpose.msra.mxu0 0.0
    %1920 = vmatprep.subr.mxu0 0.0
    %1921 = vmatpush1.xpose.msra.mxu0 0.0
    %1922 = vmatprep.subr.mxu0 0.0
    %1923 = vmatpush1.xpose.msra.mxu0 0.0
    %1924 = vmatprep.subr.mxu0 0.0
    %1925 = vmatpush1.xpose.msra.mxu0 0.0
    %1926 = vmatprep.subr.mxu0 0.0
    %1927 = vmatpush1.xpose.msra.mxu0 0.0
    %1928 = vmatprep.subr.mxu0 0.0
    %1929 = vmatpush1.xpose.msra.mxu0 0.0
    %1930 = vmatprep.subr.mxu0 0.0
    %1931 = vmatpush1.xpose.msra.mxu0 0.0
    %1932 = vmatprep.subr.mxu0 0.0
    %1933 = vmatpush1.xpose.msra.mxu0 0.0
    %1934 = vmatprep.subr.mxu0 0.0
    %1935 = vmatpush1.xpose.msra.mxu0 0.0
    %1936 = vmatprep.subr.mxu0 0.0
    %1937 = vmatpush1.xpose.msra.mxu0 0.0
    %1938 = vmatprep.subr.mxu0 0.0
    %1939 = vmatpush1.xpose.msra.mxu0 0.0
    %1940 = vmatprep.subr.mxu0 0.0
    %1941 = vmatpush1.xpose.msra.mxu0 0.0
    %1942 = vmatprep.subr.mxu0 0.0
    %1943 = vmatpush1.xpose.msra.mxu0 0.0
    %1944 = vmatprep.subr.mxu0 0.0
    %1945 = vmatpush1.xpose.msra.mxu0 0.0
    %1946 = vmatprep.subr.mxu0 0.0
    %1947 = vmatpush1.xpose.msra.mxu0 0.0
    %1948 = vmatprep.subr.mxu0 0.0
    %1949 = vmatpush1.xpose.msra.mxu0 0.0
    %1950 = vmatprep.subr.mxu0 0.0
    %1951 = vmatpush1.xpose.msra.mxu0 0.0
    %1952 = vmatprep.subr.mxu0 0.0
    %1953 = vmatpush1.xpose.msra.mxu0 0.0
    %1954 = vmatprep.subr.mxu0 0.0
    %1955 = vmatpush1.xpose.msra.mxu0 0.0
    %1956 = vmatprep.subr.mxu0 0.0
    %1957 = vmatpush1.xpose.msra.mxu0 0.0
    %1958 = vmatprep.mubr.f32.mxu0 0.0
    %1959 = vmatmul.mubr.f32.gmra.mrb[0].mxu0 %v1730
    %v1960 = vpop.f32.mrb[0].mxu0
    %v1961 = vadd.f32 0.0, %v1960
    %v1962 = vpop.f32.mrb[0].mxu0
    %1963 = vmatprep.mubr.f32.mxu0 0.0
    %1964 = vmatmul.mubr.f32.gmra.mrb[0].mxu0 %v1736
    %v1965 = vpop.f32.mrb[0].mxu0
    %v1966 = vadd.f32 0.0, %v1965
    %v1967 = vpop.f32.mrb[0].mxu0
    %1968 = vdwg.mxu0
    %v1969 = vmul.f32 %v1961, 0.25
    %v1970 = vmul.f32 %v1966, 0.25
    %v1971 = vadd.f32 %v1969, %v1490
    %v1972 = vadd.f32 %v1970, %v1491
    %v1973 = vsel %vm533, %v1971, -inf
    %1974 = vmax.xlane.f32.xlu0 %v1973
    %v1975 = vpop.xlane.xlu0 %1974
    %v1976 = vsel %vm533, %v1972, -inf
    %1977 = vmax.xlane.f32.xlu0 %v1976
    %v1978 = vpop.xlane.xlu0 %1977
    %v1979 = vsub.f32 %v1971, %v1975
    %v1980 = vsub.f32 %v1972, %v1978
    %v1981 = vmul.f32 %v1979, 1.442695
    %v1982 = vpow.pop %v1981
    %v1983 = vmul.f32 %v1980, 1.442695
    %v1984 = vpow.pop %v1983
    %v1985 = vsel %vm533, %v1982, 0.0
    %1986 = vadd.xlane.f32.xlu0 %v1985
    %v1987 = vpop.xlane.xlu0 %1986
    %v1988 = vsel %vm533, %v1984, 0.0
    %1989 = vadd.xlane.f32.xlu0 %v1988
    %v1990 = vpop.xlane.xlu0 %1989
    %v1991 = vrcp.pop %v1987
    %v1992 = vrcp.pop %v1990
    %v1993 = vmul.f32 %v1982, %v1991
    %v1994 = vmul.f32 %v1984, %v1992
    %v1996 = vsel %vm533, %v1993, 0
    %v1999 = vsel %vm533, %v1994, 0
    %2001 = vmatprep.subr.mxu0 0.0
    %2002 = vmatpush1.msra.mxu0 %v1884
    %2003 = vmatprep.subr.mxu0 0.0
    %2004 = vmatpush1.msra.mxu0 %v1890
    %2005 = vmatprep.subr.mxu0 0.0
    %2006 = vmatpush1.msra.mxu0 0.0
    %2007 = vmatprep.subr.mxu0 0.0
    %2008 = vmatpush1.msra.mxu0 0.0
    %2009 = vmatprep.subr.mxu0 0.0
    %2010 = vmatpush1.msra.mxu0 0.0
    %2011 = vmatprep.subr.mxu0 0.0
    %2012 = vmatpush1.msra.mxu0 0.0
    %2013 = vmatprep.subr.mxu0 0.0
    %2014 = vmatpush1.msra.mxu0 0.0
    %2015 = vmatprep.subr.mxu0 0.0
    %2016 = vmatpush1.msra.mxu0 0.0
    %2017 = vmatprep.subr.mxu0 0.0
    %2018 = vmatpush1.msra.mxu0 0.0
    %2019 = vmatprep.subr.mxu0 0.0
    %2020 = vmatpush1.msra.mxu0 0.0
    %2021 = vmatprep.subr.mxu0 0.0
    %2022 = vmatpush1.msra.mxu0 0.0
    %2023 = vmatprep.subr.mxu0 0.0
    %2024 = vmatpush1.msra.mxu0 0.0
    %2025 = vmatprep.subr.mxu0 0.0
    %2026 = vmatpush1.msra.mxu0 0.0
    %2027 = vmatprep.subr.mxu0 0.0
    %2028 = vmatpush1.msra.mxu0 0.0
    %2029 = vmatprep.subr.mxu0 0.0
    %2030 = vmatpush1.msra.mxu0 0.0
    %2031 = vmatprep.subr.mxu0 0.0
    %2032 = vmatpush1.msra.mxu0 0.0
    %2033 = vmatprep.subr.mxu0 0.0
    %2034 = vmatpush1.msra.mxu0 0.0
    %2035 = vmatprep.subr.mxu0 0.0
    %2036 = vmatpush1.msra.mxu0 0.0
    %2037 = vmatprep.subr.mxu0 0.0
    %2038 = vmatpush1.msra.mxu0 0.0
    %2039 = vmatprep.subr.mxu0 0.0
    %2040 = vmatpush1.msra.mxu0 0.0
    %2041 = vmatprep.subr.mxu0 0.0
    %2042 = vmatpush1.msra.mxu0 0.0
    %2043 = vmatprep.subr.mxu0 0.0
    %2044 = vmatpush1.msra.mxu0 0.0
    %2045 = vmatprep.subr.mxu0 0.0
    %2046 = vmatpush1.msra.mxu0 0.0
    %2047 = vmatprep.subr.mxu0 0.0
    %2048 = vmatpush1.msra.mxu0 0.0
    %2049 = vmatprep.subr.mxu0 0.0
    %2050 = vmatpush1.msra.mxu0 0.0
    %2051 = vmatprep.subr.mxu0 0.0
    %2052 = vmatpush1.msra.mxu0 0.0
    %2053 = vmatprep.subr.mxu0 0.0
    %2054 = vmatpush1.msra.mxu0 0.0
    %2055 = vmatprep.subr.mxu0 0.0
    %2056 = vmatpush1.msra.mxu0 0.0
    %2057 = vmatprep.subr.mxu0 0.0
    %2058 = vmatpush1.msra.mxu0 0.0
    %2059 = vmatprep.subr.mxu0 0.0
    %2060 = vmatpush1.msra.mxu0 0.0
    %2061 = vmatprep.subr.mxu0 0.0
    %2062 = vmatpush1.msra.mxu0 0.0
    %2063 = vmatprep.subr.mxu0 0.0
    %2064 = vmatpush1.msra.mxu0 0.0
    %2065 = vmatprep.mubr.f32.mxu0 0.0
    %2066 = vmatmul.mubr.f32.gmra.mrb[0].mxu0 %v1996
    %v2067 = vpop.f32.mrb[0].mxu0
    %v2068 = vadd.f32 0.0, %v2067
    %v2069 = vpop.f32.mrb[0].mxu0
    %2070 = vmatprep.mubr.f32.mxu0 0.0
    %2071 = vmatmul.mubr.f32.gmra.mrb[0].mxu0 %v1999
    %v2072 = vpop.f32.mrb[0].mxu0
    %v2073 = vadd.f32 0.0, %v2072
    %v2074 = vpop.f32.mrb[0].mxu0
    %2075 = vdwg.mxu0
    %s2076 = scalar_lea.vmem [#allocation4], 768
    %v2077 = vld [vmem:[%s2076] sm:$0xff]
    %v2078 = vld [vmem:[%s2076 + $0x8] sm:$0xff]
    %v2079 = vld [vmem:[%s2076 + $0x10] sm:$0xff]
    %v2080 = vld [vmem:[%s2076 + $0x18] sm:$0xff]
    %v2081 = vld [vmem:[%s2076 + $0x20] sm:$0xff]
    %v2082 = vld [vmem:[%s2076 + $0x28] sm:$0xff]
    %v2083 = vld [vmem:[%s2076 + $0x30] sm:$0xff]
    %v2084 = vld [vmem:[%s2076 + $0x38] sm:$0xff]
    %v2085 = vld [vmem:[%s2076 + $0x40] sm:$0xff]
    %v2086 = vld [vmem:[%s2076 + $0x48] sm:$0xff]
    %v2087 = vld [vmem:[%s2076 + $0x50] sm:$0xff]
    %v2088 = vld [vmem:[%s2076 + $0x58] sm:$0xff]
    %v2089 = vld [vmem:[%s2076 + $0x60] sm:$0xff]
    %v2090 = vld [vmem:[%s2076 + $0x68] sm:$0xff]
    %v2091 = vld [vmem:[%s2076 + $0x70] sm:$0xff]
    %v2092 = vld [vmem:[%s2076 + $0x78] sm:$0xff]
    %2093 = vmatprep.subr.mxu0 0.0
    %2094 = vmatpush1.xpose.msra.mxu0 %v1809
    %2095 = vmatprep.subr.mxu0 0.0
    %2096 = vmatpush1.xpose.msra.mxu0 %v1815
    %2097 = vmatprep.subr.mxu0 0.0
    %2098 = vmatpush1.xpose.msra.mxu0 0.0
    %2099 = vmatprep.subr.mxu0 0.0
    %2100 = vmatpush1.xpose.msra.mxu0 0.0
    %2101 = vmatprep.subr.mxu0 0.0
    %2102 = vmatpush1.xpose.msra.mxu0 0.0
    %2103 = vmatprep.subr.mxu0 0.0
    %2104 = vmatpush1.xpose.msra.mxu0 0.0
    %2105 = vmatprep.subr.mxu0 0.0
    %2106 = vmatpush1.xpose.msra.mxu0 0.0
    %2107 = vmatprep.subr.mxu0 0.0
    %2108 = vmatpush1.xpose.msra.mxu0 0.0
    %2109 = vmatprep.subr.mxu0 0.0
    %2110 = vmatpush1.xpose.msra.mxu0 0.0
    %2111 = vmatprep.subr.mxu0 0.0
    %2112 = vmatpush1.xpose.msra.mxu0 0.0
    %2113 = vmatprep.subr.mxu0 0.0
    %2114 = vmatpush1.xpose.msra.mxu0 0.0
    %2115 = vmatprep.subr.mxu0 0.0
    %2116 = vmatpush1.xpose.msra.mxu0 0.0
    %2117 = vmatprep.subr.mxu0 0.0
    %2118 = vmatpush1.xpose.msra.mxu0 0.0
    %2119 = vmatprep.subr.mxu0 0.0
    %2120 = vmatpush1.xpose.msra.mxu0 0.0
    %2121 = vmatprep.subr.mxu0 0.0
    %2122 = vmatpush1.xpose.msra.mxu0 0.0
    %2123 = vmatprep.subr.mxu0 0.0
    %2124 = vmatpush1.xpose.msra.mxu0 0.0
    %2125 = vmatprep.subr.mxu0 0.0
    %2126 = vmatpush1.xpose.msra.mxu0 0.0
    %2127 = vmatprep.subr.mxu0 0.0
    %2128 = vmatpush1.xpose.msra.mxu0 0.0
    %2129 = vmatprep.subr.mxu0 0.0
    %2130 = vmatpush1.xpose.msra.mxu0 0.0
    %2131 = vmatprep.subr.mxu0 0.0
    %2132 = vmatpush1.xpose.msra.mxu0 0.0
    %2133 = vmatprep.subr.mxu0 0.0
    %2134 = vmatpush1.xpose.msra.mxu0 0.0
    %2135 = vmatprep.subr.mxu0 0.0
    %2136 = vmatpush1.xpose.msra.mxu0 0.0
    %2137 = vmatprep.subr.mxu0 0.0
    %2138 = vmatpush1.xpose.msra.mxu0 0.0
    %2139 = vmatprep.subr.mxu0 0.0
    %2140 = vmatpush1.xpose.msra.mxu0 0.0
    %2141 = vmatprep.subr.mxu0 0.0
    %2142 = vmatpush1.xpose.msra.mxu0 0.0
    %2143 = vmatprep.subr.mxu0 0.0
    %2144 = vmatpush1.xpose.msra.mxu0 0.0
    %2145 = vmatprep.subr.mxu0 0.0
    %2146 = vmatpush1.xpose.msra.mxu0 0.0
    %2147 = vmatprep.subr.mxu0 0.0
    %2148 = vmatpush1.xpose.msra.mxu0 0.0
    %2149 = vmatprep.subr.mxu0 0.0
    %2150 = vmatpush1.xpose.msra.mxu0 0.0
    %2151 = vmatprep.subr.mxu0 0.0
    %2152 = vmatpush1.xpose.msra.mxu0 0.0
    %2153 = vmatprep.subr.mxu0 0.0
    %2154 = vmatpush1.xpose.msra.mxu0 0.0
    %2155 = vmatprep.subr.mxu0 0.0
    %2156 = vmatpush1.xpose.msra.mxu0 0.0
    %2157 = vmatprep.mubr.f32.mxu0 0.0
    %2158 = vmatmul.mubr.f32.gmra.mrb[0].mxu0 %v1732
    %v2159 = vpop.f32.mrb[0].mxu0
    %v2160 = vadd.f32 0.0, %v2159
    %v2161 = vpop.f32.mrb[0].mxu0
    %2162 = vmatprep.mubr.f32.mxu0 0.0
    %2163 = vmatmul.mubr.f32.gmra.mrb[0].mxu0 %v1738
    %v2164 = vpop.f32.mrb[0].mxu0
    %v2165 = vadd.f32 0.0, %v2164
    %v2166 = vpop.f32.mrb[0].mxu0
    %2167 = vdwg.mxu0
    %v2168 = vmul.f32 %v2160, 0.25
    %v2169 = vmul.f32 %v2165, 0.25
    %v2170 = vadd.f32 %v2168, %v1490
    %v2171 = vadd.f32 %v2169, %v1491
    %v2172 = vsel %vm533, %v2170, -inf
    %2173 = vmax.xlane.f32.xlu0 %v2172
    %v2174 = vpop.xlane.xlu0 %2173
    %v2175 = vsel %vm533, %v2171, -inf
    %2176 = vmax.xlane.f32.xlu0 %v2175
    %v2177 = vpop.xlane.xlu0 %2176
    %v2178 = vsub.f32 %v2170, %v2174
    %v2179 = vsub.f32 %v2171, %v2177
    %v2180 = vmul.f32 %v2178, 1.442695
    %v2181 = vpow.pop %v2180
    %v2182 = vmul.f32 %v2179, 1.442695
    %v2183 = vpow.pop %v2182
    %v2184 = vsel %vm533, %v2181, 0.0
    %2185 = vadd.xlane.f32.xlu0 %v2184
    %v2186 = vpop.xlane.xlu0 %2185
    %v2187 = vsel %vm533, %v2183, 0.0
    %2188 = vadd.xlane.f32.xlu0 %v2187
    %v2189 = vpop.xlane.xlu0 %2188
    %v2190 = vrcp.pop %v2186
    %v2191 = vrcp.pop %v2189
    %v2192 = vmul.f32 %v2181, %v2190
    %v2193 = vmul.f32 %v2183, %v2191
    %v2195 = vsel %vm533, %v2192, 0
    %v2198 = vsel %vm533, %v2193, 0
    %2200 = vmatprep.subr.mxu0 0.0
    %2201 = vmatpush1.msra.mxu0 %v1886
    %2202 = vmatprep.subr.mxu0 0.0
    %2203 = vmatpush1.msra.mxu0 %v1892
    %2204 = vmatprep.subr.mxu0 0.0
    %2205 = vmatpush1.msra.mxu0 0.0
    %2206 = vmatprep.subr.mxu0 0.0
    %2207 = vmatpush1.msra.mxu0 0.0
    %2208 = vmatprep.subr.mxu0 0.0
    %2209 = vmatpush1.msra.mxu0 0.0
    %2210 = vmatprep.subr.mxu0 0.0
    %2211 = vmatpush1.msra.mxu0 0.0
    %2212 = vmatprep.subr.mxu0 0.0
    %2213 = vmatpush1.msra.mxu0 0.0
    %2214 = vmatprep.subr.mxu0 0.0
    %2215 = vmatpush1.msra.mxu0 0.0
    %2216 = vmatprep.subr.mxu0 0.0
    %2217 = vmatpush1.msra.mxu0 0.0
    %2218 = vmatprep.subr.mxu0 0.0
    %2219 = vmatpush1.msra.mxu0 0.0
    %2220 = vmatprep.subr.mxu0 0.0
    %2221 = vmatpush1.msra.mxu0 0.0
    %2222 = vmatprep.subr.mxu0 0.0
    %2223 = vmatpush1.msra.mxu0 0.0
    %2224 = vmatprep.subr.mxu0 0.0
    %2225 = vmatpush1.msra.mxu0 0.0
    %2226 = vmatprep.subr.mxu0 0.0
    %2227 = vmatpush1.msra.mxu0 0.0
    %2228 = vmatprep.subr.mxu0 0.0
    %2229 = vmatpush1.msra.mxu0 0.0
    %2230 = vmatprep.subr.mxu0 0.0
    %2231 = vmatpush1.msra.mxu0 0.0
    %2232 = vmatprep.subr.mxu0 0.0
    %2233 = vmatpush1.msra.mxu0 0.0
    %2234 = vmatprep.subr.mxu0 0.0
    %2235 = vmatpush1.msra.mxu0 0.0
    %2236 = vmatprep.subr.mxu0 0.0
    %2237 = vmatpush1.msra.mxu0 0.0
    %2238 = vmatprep.subr.mxu0 0.0
    %2239 = vmatpush1.msra.mxu0 0.0
    %2240 = vmatprep.subr.mxu0 0.0
    %2241 = vmatpush1.msra.mxu0 0.0
    %2242 = vmatprep.subr.mxu0 0.0
    %2243 = vmatpush1.msra.mxu0 0.0
    %2244 = vmatprep.subr.mxu0 0.0
    %2245 = vmatpush1.msra.mxu0 0.0
    %2246 = vmatprep.subr.mxu0 0.0
    %2247 = vmatpush1.msra.mxu0 0.0
    %2248 = vmatprep.subr.mxu0 0.0
    %2249 = vmatpush1.msra.mxu0 0.0
    %2250 = vmatprep.subr.mxu0 0.0
    %2251 = vmatpush1.msra.mxu0 0.0
    %2252 = vmatprep.subr.mxu0 0.0
    %2253 = vmatpush1.msra.mxu0 0.0
    %2254 = vmatprep.subr.mxu0 0.0
    %2255 = vmatpush1.msra.mxu0 0.0
    %2256 = vmatprep.subr.mxu0 0.0
    %2257 = vmatpush1.msra.mxu0 0.0
    %2258 = vmatprep.subr.mxu0 0.0
    %2259 = vmatpush1.msra.mxu0 0.0
    %2260 = vmatprep.subr.mxu0 0.0
    %2261 = vmatpush1.msra.mxu0 0.0
    %2262 = vmatprep.subr.mxu0 0.0
    %2263 = vmatpush1.msra.mxu0 0.0
    %2264 = vmatprep.mubr.f32.mxu0 0.0
    %2265 = vmatmul.mubr.f32.gmra.mrb[0].mxu0 %v2195
    %v2266 = vpop.f32.mrb[0].mxu0
    %v2267 = vadd.f32 0.0, %v2266
    %v2268 = vpop.f32.mrb[0].mxu0
    %2269 = vmatprep.mubr.f32.mxu0 0.0
    %2270 = vmatmul.mubr.f32.gmra.mrb[0].mxu0 %v2198
    %v2271 = vpop.f32.mrb[0].mxu0
    %v2272 = vadd.f32 0.0, %v2271
    %v2273 = vpop.f32.mrb[0].mxu0
    %2274 = vdwg.mxu0
    %s2275 = scalar_lea.vmem [#allocation4], 896
    %v2276 = vld [vmem:[%s2275] sm:$0xff]
    %v2277 = vld [vmem:[%s2275 + $0x8] sm:$0xff]
    %v2278 = vld [vmem:[%s2275 + $0x10] sm:$0xff]
    %v2279 = vld [vmem:[%s2275 + $0x18] sm:$0xff]
    %v2280 = vld [vmem:[%s2275 + $0x20] sm:$0xff]
    %v2281 = vld [vmem:[%s2275 + $0x28] sm:$0xff]
    %v2282 = vld [vmem:[%s2275 + $0x30] sm:$0xff]
    %v2283 = vld [vmem:[%s2275 + $0x38] sm:$0xff]
    %v2284 = vld [vmem:[%s2275 + $0x40] sm:$0xff]
    %v2285 = vld [vmem:[%s2275 + $0x48] sm:$0xff]
    %v2286 = vld [vmem:[%s2275 + $0x50] sm:$0xff]
    %v2287 = vld [vmem:[%s2275 + $0x58] sm:$0xff]
    %v2288 = vld [vmem:[%s2275 + $0x60] sm:$0xff]
    %v2289 = vld [vmem:[%s2275 + $0x68] sm:$0xff]
    %v2290 = vld [vmem:[%s2275 + $0x70] sm:$0xff]
    %v2291 = vld [vmem:[%s2275 + $0x78] sm:$0xff]
    %2292 = vmatprep.subr.mxu0 0.0
    %2293 = vmatpush1.msra.mxu0 %v2276
    %2294 = vmatprep.subr.mxu0 0.0
    %2295 = vmatpush1.msra.mxu0 %v2277
    %2296 = vmatprep.subr.mxu0 0.0
    %2297 = vmatpush1.msra.mxu0 %v2278
    %2298 = vmatprep.subr.mxu0 0.0
    %2299 = vmatpush1.msra.mxu0 %v2279
    %2300 = vmatprep.subr.mxu0 0.0
    %2301 = vmatpush1.msra.mxu0 %v2280
    %2302 = vmatprep.subr.mxu0 0.0
    %2303 = vmatpush1.msra.mxu0 %v2281
    %2304 = vmatprep.subr.mxu0 0.0
    %2305 = vmatpush1.msra.mxu0 %v2282
    %2306 = vmatprep.subr.mxu0 0.0
    %2307 = vmatpush1.msra.mxu0 %v2283
    %2308 = vmatprep.subr.mxu0 0.0
    %2309 = vmatpush1.msra.mxu0 %v2284
    %2310 = vmatprep.subr.mxu0 0.0
    %2311 = vmatpush1.msra.mxu0 %v2285
    %2312 = vmatprep.subr.mxu0 0.0
    %2313 = vmatpush1.msra.mxu0 %v2286
    %2314 = vmatprep.subr.mxu0 0.0
    %2315 = vmatpush1.msra.mxu0 %v2287
    %2316 = vmatprep.subr.mxu0 0.0
    %2317 = vmatpush1.msra.mxu0 %v2288
    %2318 = vmatprep.subr.mxu0 0.0
    %2319 = vmatpush1.msra.mxu0 %v2289
    %2320 = vmatprep.subr.mxu0 0.0
    %2321 = vmatpush1.msra.mxu0 %v2290
    %2322 = vmatprep.subr.mxu0 0.0
    %2323 = vmatpush1.msra.mxu0 %v2291
    %2324 = vmatprep.subr.mxu0 0.0
    %2325 = vmatpush1.msra.mxu0 0.0
    %2326 = vmatprep.subr.mxu0 0.0
    %2327 = vmatpush1.msra.mxu0 0.0
    %2328 = vmatprep.subr.mxu0 0.0
    %2329 = vmatpush1.msra.mxu0 0.0
    %2330 = vmatprep.subr.mxu0 0.0
    %2331 = vmatpush1.msra.mxu0 0.0
    %2332 = vmatprep.subr.mxu0 0.0
    %2333 = vmatpush1.msra.mxu0 0.0
    %2334 = vmatprep.subr.mxu0 0.0
    %2335 = vmatpush1.msra.mxu0 0.0
    %2336 = vmatprep.subr.mxu0 0.0
    %2337 = vmatpush1.msra.mxu0 0.0
    %2338 = vmatprep.subr.mxu0 0.0
    %2339 = vmatpush1.msra.mxu0 0.0
    %2340 = vmatprep.subr.mxu0 0.0
    %2341 = vmatpush1.msra.mxu0 0.0
    %2342 = vmatprep.subr.mxu0 0.0
    %2343 = vmatpush1.msra.mxu0 0.0
    %2344 = vmatprep.subr.mxu0 0.0
    %2345 = vmatpush1.msra.mxu0 0.0
    %2346 = vmatprep.subr.mxu0 0.0
    %2347 = vmatpush1.msra.mxu0 0.0
    %2348 = vmatprep.subr.mxu0 0.0
    %2349 = vmatpush1.msra.mxu0 0.0
    %2350 = vmatprep.subr.mxu0 0.0
    %2351 = vmatpush1.msra.mxu0 0.0
    %2352 = vmatprep.subr.mxu0 0.0
    %2353 = vmatpush1.msra.mxu0 0.0
    %2354 = vmatprep.subr.mxu0 0.0
    %2355 = vmatpush1.msra.mxu0 0.0
    %2356 = vmatprep.mubr.f32.mxu0 0.0
    %2357 = vmatmul.mubr.f32.gmra.mrb[0].mxu0 %v2267
    %v2358 = vpop.f32.mrb[0].mxu0
    %v2359 = vadd.f32 0.0, %v2358
    %v2360 = vpop.f32.mrb[0].mxu0
    %2361 = vmatprep.mubr.f32.mxu0 0.0
    %2362 = vmatmul.mubr.f32.gmra.mrb[0].mxu0 %v2272
    %v2363 = vpop.f32.mrb[0].mxu0
    %v2364 = vadd.f32 0.0, %v2363
    %v2365 = vpop.f32.mrb[0].mxu0
    %2366 = vdwg.mxu0
    %2367 = vmatprep.subr.mxu0 0.0
    %2368 = vmatpush1.msra.mxu0 %v2077
    %2369 = vmatprep.subr.mxu0 0.0
    %2370 = vmatpush1.msra.mxu0 %v2078
    %2371 = vmatprep.subr.mxu0 0.0
    %2372 = vmatpush1.msra.mxu0 %v2079
    %2373 = vmatprep.subr.mxu0 0.0
    %2374 = vmatpush1.msra.mxu0 %v2080
    %2375 = vmatprep.subr.mxu0 0.0
    %2376 = vmatpush1.msra.mxu0 %v2081
    %2377 = vmatprep.subr.mxu0 0.0
    %2378 = vmatpush1.msra.mxu0 %v2082
    %2379 = vmatprep.subr.mxu0 0.0
    %2380 = vmatpush1.msra.mxu0 %v2083
    %2381 = vmatprep.subr.mxu0 0.0
    %2382 = vmatpush1.msra.mxu0 %v2084
    %2383 = vmatprep.subr.mxu0 0.0
    %2384 = vmatpush1.msra.mxu0 %v2085
    %2385 = vmatprep.subr.mxu0 0.0
    %2386 = vmatpush1.msra.mxu0 %v2086
    %2387 = vmatprep.subr.mxu0 0.0
    %2388 = vmatpush1.msra.mxu0 %v2087
    %2389 = vmatprep.subr.mxu0 0.0
    %2390 = vmatpush1.msra.mxu0 %v2088
    %2391 = vmatprep.subr.mxu0 0.0
    %2392 = vmatpush1.msra.mxu0 %v2089
    %2393 = vmatprep.subr.mxu0 0.0
    %2394 = vmatpush1.msra.mxu0 %v2090
    %2395 = vmatprep.subr.mxu0 0.0
    %2396 = vmatpush1.msra.mxu0 %v2091
    %2397 = vmatprep.subr.mxu0 0.0
    %2398 = vmatpush1.msra.mxu0 %v2092
    %2399 = vmatprep.subr.mxu0 0.0
    %2400 = vmatpush1.msra.mxu0 0.0
    %2401 = vmatprep.subr.mxu0 0.0
    %2402 = vmatpush1.msra.mxu0 0.0
    %2403 = vmatprep.subr.mxu0 0.0
    %2404 = vmatpush1.msra.mxu0 0.0
    %2405 = vmatprep.subr.mxu0 0.0
    %2406 = vmatpush1.msra.mxu0 0.0
    %2407 = vmatprep.subr.mxu0 0.0
    %2408 = vmatpush1.msra.mxu0 0.0
    %2409 = vmatprep.subr.mxu0 0.0
    %2410 = vmatpush1.msra.mxu0 0.0
    %2411 = vmatprep.subr.mxu0 0.0
    %2412 = vmatpush1.msra.mxu0 0.0
    %2413 = vmatprep.subr.mxu0 0.0
    %2414 = vmatpush1.msra.mxu0 0.0
    %2415 = vmatprep.subr.mxu0 0.0
    %2416 = vmatpush1.msra.mxu0 0.0
    %2417 = vmatprep.subr.mxu0 0.0
    %2418 = vmatpush1.msra.mxu0 0.0
    %2419 = vmatprep.subr.mxu0 0.0
    %2420 = vmatpush1.msra.mxu0 0.0
    %2421 = vmatprep.subr.mxu0 0.0
    %2422 = vmatpush1.msra.mxu0 0.0
    %2423 = vmatprep.subr.mxu0 0.0
    %2424 = vmatpush1.msra.mxu0 0.0
    %2425 = vmatprep.subr.mxu0 0.0
    %2426 = vmatpush1.msra.mxu0 0.0
    %2427 = vmatprep.subr.mxu0 0.0
    %2428 = vmatpush1.msra.mxu0 0.0
    %2429 = vmatprep.subr.mxu0 0.0
    %2430 = vmatpush1.msra.mxu0 0.0
    %2431 = vmatprep.mubr.f32.mxu0 0.0
    %2432 = vmatmul.mubr.f32.gmra.mrb[0].mxu0 %v2068
    %v2433 = vpop.f32.mrb[0].mxu0
    %v2434 = vadd.f32 %v2359, %v2433
    %v2435 = vpop.f32.mrb[0].mxu0
    %2436 = vmatprep.mubr.f32.mxu0 0.0
    %2437 = vmatmul.mubr.f32.gmra.mrb[0].mxu0 %v2073
    %v2438 = vpop.f32.mrb[0].mxu0
    %v2439 = vadd.f32 %v2364, %v2438
    %v2440 = vpop.f32.mrb[0].mxu0
    %2441 = vdwg.mxu0
    %v2442 = vlaneseq
    %v2443 = vshrl.u32 %v2442, 7
    %v2444 = vsub.s32 2, %v2443
    %v2445 = vrot.slane %v1493, %v2444
    %v2446 = vadd.f32 %v2434, %v2445
    %v2447 = vadd.f32 %v2439, %v2445
    %v2448 = vadd.f32 %v1531, %v2446
    %v2449 = vadd.f32 %v1532, %v2447
    %2450 = vadd.xlane.f32.xlu0 %v2448
    %v2451 = vpop.xlane.xlu0 %2450
    %2452 = vadd.xlane.f32.xlu0 %v2449
    %v2453 = vpop.xlane.xlu0 %2452
    %v2454 = vmul.f32 %v2451, 0.03125
    %v2455 = vmul.f32 %v2453, 0.03125
    %v2456 = vmul.f32 %v2448, %v2448
    %v2457 = vmul.f32 %v2449, %v2449
    %2458 = vadd.xlane.f32.xlu0 %v2456
    %v2459 = vpop.xlane.xlu0 %2458
    %2460 = vadd.xlane.f32.xlu0 %v2457
    %v2461 = vpop.xlane.xlu0 %2460
    %v2462 = vmul.f32 %v2459, 0.03125
    %v2463 = vmul.f32 %v2461, 0.03125
    %v2464 = vmul.f32 %v2454, %v2454
    %v2465 = vmul.f32 %v2455, %v2455
    %v2466 = vsub.f32 %v2462, %v2464
    %v2467 = vsub.f32 %v2463, %v2465
    %v2468 = vsub.f32 %v2448, %v2454
    %v2469 = vsub.f32 %v2449, %v2455
    %v2470 = vadd.f32 %v2466, 1e-12
    %v2471 = vadd.f32 %v2467, 1e-12
    %v2472 = vrsqrt.pop %v2470
    %v2473 = vrsqrt.pop %v2471
    %v2474 = vmul.f32 %v2468, %v2472
    %v2475 = vmul.f32 %v2469, %v2473
    %v2476 = vlaneseq
    %v2477 = vshrl.u32 %v2476, 7
    %v2478 = vsub.s32 3, %v2477
    %v2479 = vrot.slane %v1493, %v2478
    %v2480 = vmul.f32 %v2474, %v2479
    %v2481 = vmul.f32 %v2475, %v2479
    %v2482 = vlaneseq
    %v2483 = vshrl.u32 %v2482, 7
    %v2484 = vsub.s32 4, %v2483
    %v2485 = vrot.slane %v1493, %v2484
    %v2486 = vadd.f32 %v2480, %v2485
    %v2487 = vadd.f32 %v2481, %v2485
    %s2488 = scalar_lea.vmem [#allocation4], 1024
    %v2489 = vld [vmem:[%s2488] sm:$0xff]
    %v2490 = vld [vmem:[%s2488 + $0x8] sm:$0xff]
    %v2491 = vld [vmem:[%s2488 + $0x10] sm:$0xff]
    %v2492 = vld [vmem:[%s2488 + $0x18] sm:$0xff]
    %v2493 = vld [vmem:[%s2488 + $0x20] sm:$0xff]
    %v2494 = vld [vmem:[%s2488 + $0x28] sm:$0xff]
    %v2495 = vld [vmem:[%s2488 + $0x30] sm:$0xff]
    %v2496 = vld [vmem:[%s2488 + $0x38] sm:$0xff]
    %v2497 = vld [vmem:[%s2488 + $0x40] sm:$0xff]
    %v2498 = vld [vmem:[%s2488 + $0x48] sm:$0xff]
    %v2499 = vld [vmem:[%s2488 + $0x50] sm:$0xff]
    %v2500 = vld [vmem:[%s2488 + $0x58] sm:$0xff]
    %v2501 = vld [vmem:[%s2488 + $0x60] sm:$0xff]
    %v2502 = vld [vmem:[%s2488 + $0x68] sm:$0xff]
    %v2503 = vld [vmem:[%s2488 + $0x70] sm:$0xff]
    %v2504 = vld [vmem:[%s2488 + $0x78] sm:$0xff]
    %v2505 = vlaneseq
    %v2506 = vshrl.u32 %v2505, 7
    %v2507 = vsub.s32 5, %v2506
    %v2508 = vrot.slane %v1493, %v2507
    %2509 = vmatprep.subr.mxu0 0.0
    %2510 = vmatpush1.msra.mxu0 %v2489
    %2511 = vmatprep.subr.mxu0 0.0
    %2512 = vmatpush1.msra.mxu0 %v2490
    %2513 = vmatprep.subr.mxu0 0.0
    %2514 = vmatpush1.msra.mxu0 %v2491
    %2515 = vmatprep.subr.mxu0 0.0
    %2516 = vmatpush1.msra.mxu0 %v2492
    %2517 = vmatprep.subr.mxu0 0.0
    %2518 = vmatpush1.msra.mxu0 %v2493
    %2519 = vmatprep.subr.mxu0 0.0
    %2520 = vmatpush1.msra.mxu0 %v2494
    %2521 = vmatprep.subr.mxu0 0.0
    %2522 = vmatpush1.msra.mxu0 %v2495
    %2523 = vmatprep.subr.mxu0 0.0
    %2524 = vmatpush1.msra.mxu0 %v2496
    %2525 = vmatprep.subr.mxu0 0.0
    %2526 = vmatpush1.msra.mxu0 %v2497
    %2527 = vmatprep.subr.mxu0 0.0
    %2528 = vmatpush1.msra.mxu0 %v2498
    %2529 = vmatprep.subr.mxu0 0.0
    %2530 = vmatpush1.msra.mxu0 %v2499
    %2531 = vmatprep.subr.mxu0 0.0
    %2532 = vmatpush1.msra.mxu0 %v2500
    %2533 = vmatprep.subr.mxu0 0.0
    %2534 = vmatpush1.msra.mxu0 %v2501
    %2535 = vmatprep.subr.mxu0 0.0
    %2536 = vmatpush1.msra.mxu0 %v2502
    %2537 = vmatprep.subr.mxu0 0.0
    %2538 = vmatpush1.msra.mxu0 %v2503
    %2539 = vmatprep.subr.mxu0 0.0
    %2540 = vmatpush1.msra.mxu0 %v2504
    %2541 = vmatprep.subr.mxu0 0.0
    %2542 = vmatpush1.msra.mxu0 0.0
    %2543 = vmatprep.subr.mxu0 0.0
    %2544 = vmatpush1.msra.mxu0 0.0
    %2545 = vmatprep.subr.mxu0 0.0
    %2546 = vmatpush1.msra.mxu0 0.0
    %2547 = vmatprep.subr.mxu0 0.0
    %2548 = vmatpush1.msra.mxu0 0.0
    %2549 = vmatprep.subr.mxu0 0.0
    %2550 = vmatpush1.msra.mxu0 0.0
    %2551 = vmatprep.subr.mxu0 0.0
    %2552 = vmatpush1.msra.mxu0 0.0
    %2553 = vmatprep.subr.mxu0 0.0
    %2554 = vmatpush1.msra.mxu0 0.0
    %2555 = vmatprep.subr.mxu0 0.0
    %2556 = vmatpush1.msra.mxu0 0.0
    %2557 = vmatprep.subr.mxu0 0.0
    %2558 = vmatpush1.msra.mxu0 0.0
    %2559 = vmatprep.subr.mxu0 0.0
    %2560 = vmatpush1.msra.mxu0 0.0
    %2561 = vmatprep.subr.mxu0 0.0
    %2562 = vmatpush1.msra.mxu0 0.0
    %2563 = vmatprep.subr.mxu0 0.0
    %2564 = vmatpush1.msra.mxu0 0.0
    %2565 = vmatprep.subr.mxu0 0.0
    %2566 = vmatpush1.msra.mxu0 0.0
    %2567 = vmatprep.subr.mxu0 0.0
    %2568 = vmatpush1.msra.mxu0 0.0
    %2569 = vmatprep.subr.mxu0 0.0
    %2570 = vmatpush1.msra.mxu0 0.0
    %2571 = vmatprep.subr.mxu0 0.0
    %2572 = vmatpush1.msra.mxu0 0.0
    %2573 = vmatprep.mubr.f32.mxu0 0.0
    %2574 = vmatmul.mubr.f32.gmra.mrb[0].mxu0 %v2486
    %v2575 = vpop.f32.mrb[0].mxu0
    %v2576 = vadd.f32 %v2508, %v2575
    %v2577 = vpop.f32.mrb[0].mxu0
    %2578 = vmatprep.mubr.f32.mxu0 0.0
    %2579 = vmatmul.mubr.f32.gmra.mrb[0].mxu0 %v2487
    %v2580 = vpop.f32.mrb[0].mxu0
    %v2581 = vadd.f32 %v2508, %v2580
    %v2582 = vpop.f32.mrb[0].mxu0
    %2583 = vdwg.mxu0
    %v2584 = vmul.f32 %v2576, %v2576
    %v2585 = vmul.f32 %v2581, %v2581
    %v2586 = vmul.f32 %v2576, %v2584
    %v2587 = vmul.f32 %v2581, %v2585
    %v2588 = vmul.f32 %v2586, 0.044715
    %v2589 = vmul.f32 %v2587, 0.044715
    %v2590 = vadd.f32 %v2576, %v2588
    %v2591 = vadd.f32 %v2581, %v2589
    %v2592 = vmul.f32 %v2590, 0.7978846
    %v2593 = vmul.f32 %v2591, 0.7978846
    %v2594 = vtanh.pop %v2592
    %v2595 = vtanh.pop %v2593
    %v2596 = vadd.f32 %v2594, 1.0
    %v2597 = vadd.f32 %v2595, 1.0
    %v2598 = vmul.f32 %v2596, 0.5
    %v2599 = vmul.f32 %v2597, 0.5
    %v2600 = vmul.f32 %v2576, %v2598
    %v2601 = vmul.f32 %v2581, %v2599
    %s2602 = scalar_lea.vmem [#allocation4], 1152
    %v2603 = vld [vmem:[%s2602] sm:$0xff]
    %v2604 = vld [vmem:[%s2602 + $0x8] sm:$0xff]
    %v2605 = vld [vmem:[%s2602 + $0x10] sm:$0xff]
    %v2606 = vld [vmem:[%s2602 + $0x18] sm:$0xff]
    %v2607 = vld [vmem:[%s2602 + $0x20] sm:$0xff]
    %v2608 = vld [vmem:[%s2602 + $0x28] sm:$0xff]
    %v2609 = vld [vmem:[%s2602 + $0x30] sm:$0xff]
    %v2610 = vld [vmem:[%s2602 + $0x38] sm:$0xff]
    %v2611 = vld [vmem:[%s2602 + $0x40] sm:$0xff]
    %v2612 = vld [vmem:[%s2602 + $0x48] sm:$0xff]
    %v2613 = vld [vmem:[%s2602 + $0x50] sm:$0xff]
    %v2614 = vld [vmem:[%s2602 + $0x58] sm:$0xff]
    %v2615 = vld [vmem:[%s2602 + $0x60] sm:$0xff]
    %v2616 = vld [vmem:[%s2602 + $0x68] sm:$0xff]
    %v2617 = vld [vmem:[%s2602 + $0x70] sm:$0xff]
    %v2618 = vld [vmem:[%s2602 + $0x78] sm:$0xff]
    %v2619 = vlaneseq
    %v2620 = vshrl.u32 %v2619, 7
    %v2621 = vsub.s32 6, %v2620
    %v2622 = vrot.slane %v1493, %v2621
    %2623 = vmatprep.subr.mxu0 0.0
    %2624 = vmatpush1.msra.mxu0 %v2603
    %2625 = vmatprep.subr.mxu0 0.0
    %2626 = vmatpush1.msra.mxu0 %v2604
    %2627 = vmatprep.subr.mxu0 0.0
    %2628 = vmatpush1.msra.mxu0 %v2605
    %2629 = vmatprep.subr.mxu0 0.0
    %2630 = vmatpush1.msra.mxu0 %v2606
    %2631 = vmatprep.subr.mxu0 0.0
    %2632 = vmatpush1.msra.mxu0 %v2607
    %2633 = vmatprep.subr.mxu0 0.0
    %2634 = vmatpush1.msra.mxu0 %v2608
    %2635 = vmatprep.subr.mxu0 0.0
    %2636 = vmatpush1.msra.mxu0 %v2609
    %2637 = vmatprep.subr.mxu0 0.0
    %2638 = vmatpush1.msra.mxu0 %v2610
    %2639 = vmatprep.subr.mxu0 0.0
    %2640 = vmatpush1.msra.mxu0 %v2611
    %2641 = vmatprep.subr.mxu0 0.0
    %2642 = vmatpush1.msra.mxu0 %v2612
    %2643 = vmatprep.subr.mxu0 0.0
    %2644 = vmatpush1.msra.mxu0 %v2613
    %2645 = vmatprep.subr.mxu0 0.0
    %2646 = vmatpush1.msra.mxu0 %v2614
    %2647 = vmatprep.subr.mxu0 0.0
    %2648 = vmatpush1.msra.mxu0 %v2615
    %2649 = vmatprep.subr.mxu0 0.0
    %2650 = vmatpush1.msra.mxu0 %v2616
    %2651 = vmatprep.subr.mxu0 0.0
    %2652 = vmatpush1.msra.mxu0 %v2617
    %2653 = vmatprep.subr.mxu0 0.0
    %2654 = vmatpush1.msra.mxu0 %v2618
    %2655 = vmatprep.subr.mxu0 0.0
    %2656 = vmatpush1.msra.mxu0 0.0
    %2657 = vmatprep.subr.mxu0 0.0
    %2658 = vmatpush1.msra.mxu0 0.0
    %2659 = vmatprep.subr.mxu0 0.0
    %2660 = vmatpush1.msra.mxu0 0.0
    %2661 = vmatprep.subr.mxu0 0.0
    %2662 = vmatpush1.msra.mxu0 0.0
    %2663 = vmatprep.subr.mxu0 0.0
    %2664 = vmatpush1.msra.mxu0 0.0
    %2665 = vmatprep.subr.mxu0 0.0
    %2666 = vmatpush1.msra.mxu0 0.0
    %2667 = vmatprep.subr.mxu0 0.0
    %2668 = vmatpush1.msra.mxu0 0.0
    %2669 = vmatprep.subr.mxu0 0.0
    %2670 = vmatpush1.msra.mxu0 0.0
    %2671 = vmatprep.subr.mxu0 0.0
    %2672 = vmatpush1.msra.mxu0 0.0
    %2673 = vmatprep.subr.mxu0 0.0
    %2674 = vmatpush1.msra.mxu0 0.0
    %2675 = vmatprep.subr.mxu0 0.0
    %2676 = vmatpush1.msra.mxu0 0.0
    %2677 = vmatprep.subr.mxu0 0.0
    %2678 = vmatpush1.msra.mxu0 0.0
    %2679 = vmatprep.subr.mxu0 0.0
    %2680 = vmatpush1.msra.mxu0 0.0
    %2681 = vmatprep.subr.mxu0 0.0
    %2682 = vmatpush1.msra.mxu0 0.0
    %2683 = vmatprep.subr.mxu0 0.0
    %2684 = vmatpush1.msra.mxu0 0.0
    %2685 = vmatprep.subr.mxu0 0.0
    %2686 = vmatpush1.msra.mxu0 0.0
    %2687 = vmatprep.mubr.f32.mxu0 0.0
    %2688 = vmatmul.mubr.f32.gmra.mrb[0].mxu0 %v2600
    %v2689 = vpop.f32.mrb[0].mxu0
    %v2690 = vadd.f32 %v2622, %v2689
    %v2691 = vpop.f32.mrb[0].mxu0
    %2692 = vmatprep.mubr.f32.mxu0 0.0
    %2693 = vmatmul.mubr.f32.gmra.mrb[0].mxu0 %v2601
    %v2694 = vpop.f32.mrb[0].mxu0
    %v2695 = vadd.f32 %v2622, %v2694
    %v2696 = vpop.f32.mrb[0].mxu0
    %2697 = vdwg.mxu0
    %v2698 = vadd.f32 %v2486, %v2690
    %v2699 = vadd.f32 %v2487, %v2695
    %2700 = vadd.xlane.f32.xlu0 %v2698
    %v2701 = vpop.xlane.xlu0 %2700
    %2702 = vadd.xlane.f32.xlu0 %v2699
    %v2703 = vpop.xlane.xlu0 %2702
    %v2704 = vmul.f32 %v2701, 0.03125
    %v2705 = vmul.f32 %v2703, 0.03125
    %v2706 = vmul.f32 %v2698, %v2698
    %v2707 = vmul.f32 %v2699, %v2699
    %2708 = vadd.xlane.f32.xlu0 %v2706
    %v2709 = vpop.xlane.xlu0 %2708
    %2710 = vadd.xlane.f32.xlu0 %v2707
    %v2711 = vpop.xlane.xlu0 %2710
    %v2712 = vmul.f32 %v2709, 0.03125
    %v2713 = vmul.f32 %v2711, 0.03125
    %v2714 = vmul.f32 %v2704, %v2704
    %v2715 = vmul.f32 %v2705, %v2705
    %v2716 = vsub.f32 %v2712, %v2714
    %v2717 = vsub.f32 %v2713, %v2715
    %v2718 = vsub.f32 %v2698, %v2704
    %v2719 = vsub.f32 %v2699, %v2705
    %v2720 = vadd.f32 %v2716, 1e-12
    %v2721 = vadd.f32 %v2717, 1e-12
    %v2722 = vrsqrt.pop %v2720
    %v2723 = vrsqrt.pop %v2721
    %v2724 = vmul.f32 %v2718, %v2722
    %v2725 = vmul.f32 %v2719, %v2723
    %v2726 = vlaneseq
    %v2727 = vshrl.u32 %v2726, 7
    %v2728 = vsub.s32 7, %v2727
    %v2729 = vrot.slane %v1493, %v2728
    %v2730 = vmul.f32 %v2724, %v2729
    %v2731 = vmul.f32 %v2725, %v2729
    %v2732 = vlaneseq
    %v2733 = vshrl.u32 %v2732, 7
    %v2734 = vsub.s32 0, %v2733
    %v2735 = vrot.slane %v1494, %v2734
    %v2736 = vadd.f32 %v2730, %v2735
    %v2737 = vadd.f32 %v2731, %v2735
    %v2739 = vrot.slane %v2737, 7
    %v2741 = vsel %vm1301, %v2736, %v2739
    %s2742 = scalar_lea.vmem [#allocation4], 1280
    %v2743 = vld [vmem:[%s2742] sm:$0xff]
    %v2744 = vld [vmem:[%s2742 + $0x8] sm:$0xff]
    %v2745 = vld [vmem:[%s2742 + $0x10] sm:$0xff]
    %v2746 = vld [vmem:[%s2742 + $0x18] sm:$0xff]
    %v2747 = vld [vmem:[%s2742 + $0x20] sm:$0xff]
    %v2748 = vld [vmem:[%s2742 + $0x28] sm:$0xff]
    %v2749 = vld [vmem:[%s2742 + $0x30] sm:$0xff]
    %v2750 = vld [vmem:[%s2742 + $0x38] sm:$0xff]
    %v2751 = vld [vmem:[%s2742 + $0x40] sm:$0xff]
    %v2752 = vld [vmem:[%s2742 + $0x48] sm:$0xff]
    %v2753 = vld [vmem:[%s2742 + $0x50] sm:$0xff]
    %v2754 = vld [vmem:[%s2742 + $0x58] sm:$0xff]
    %v2755 = vld [vmem:[%s2742 + $0x60] sm:$0xff]
    %v2756 = vld [vmem:[%s2742 + $0x68] sm:$0xff]
    %v2757 = vld [vmem:[%s2742 + $0x70] sm:$0xff]
    %v2758 = vld [vmem:[%s2742 + $0x78] sm:$0xff]
    %v2759 = vlaneseq
    %v2760 = vshrl.u32 %v2759, 7
    %v2761 = vsub.s32 1, %v2760
    %v2762 = vrot.slane %v1494, %v2761
    %2763 = vmatprep.subr.mxu0 0.0
    %2764 = vmatpush1.msra.mxu0 %v2743
    %2765 = vmatprep.subr.mxu0 0.0
    %2766 = vmatpush1.msra.mxu0 %v2744
    %2767 = vmatprep.subr.mxu0 0.0
    %2768 = vmatpush1.msra.mxu0 %v2745
    %2769 = vmatprep.subr.mxu0 0.0
    %2770 = vmatpush1.msra.mxu0 %v2746
    %2771 = vmatprep.subr.mxu0 0.0
    %2772 = vmatpush1.msra.mxu0 %v2747
    %2773 = vmatprep.subr.mxu0 0.0
    %2774 = vmatpush1.msra.mxu0 %v2748
    %2775 = vmatprep.subr.mxu0 0.0
    %2776 = vmatpush1.msra.mxu0 %v2749
    %2777 = vmatprep.subr.mxu0 0.0
    %2778 = vmatpush1.msra.mxu0 %v2750
    %2779 = vmatprep.subr.mxu0 0.0
    %2780 = vmatpush1.msra.mxu0 %v2751
    %2781 = vmatprep.subr.mxu0 0.0
    %2782 = vmatpush1.msra.mxu0 %v2752
    %2783 = vmatprep.subr.mxu0 0.0
    %2784 = vmatpush1.msra.mxu0 %v2753
    %2785 = vmatprep.subr.mxu0 0.0
    %2786 = vmatpush1.msra.mxu0 %v2754
    %2787 = vmatprep.subr.mxu0 0.0
    %2788 = vmatpush1.msra.mxu0 %v2755
    %2789 = vmatprep.subr.mxu0 0.0
    %2790 = vmatpush1.msra.mxu0 %v2756
    %2791 = vmatprep.subr.mxu0 0.0
    %2792 = vmatpush1.msra.mxu0 %v2757
    %2793 = vmatprep.subr.mxu0 0.0
    %2794 = vmatpush1.msra.mxu0 %v2758
    %2795 = vmatprep.subr.mxu0 0.0
    %2796 = vmatpush1.msra.mxu0 0.0
    %2797 = vmatprep.subr.mxu0 0.0
    %2798 = vmatpush1.msra.mxu0 0.0
    %2799 = vmatprep.subr.mxu0 0.0
    %2800 = vmatpush1.msra.mxu0 0.0
    %2801 = vmatprep.subr.mxu0 0.0
    %2802 = vmatpush1.msra.mxu0 0.0
    %2803 = vmatprep.subr.mxu0 0.0
    %2804 = vmatpush1.msra.mxu0 0.0
    %2805 = vmatprep.subr.mxu0 0.0
    %2806 = vmatpush1.msra.mxu0 0.0
    %2807 = vmatprep.subr.mxu0 0.0
    %2808 = vmatpush1.msra.mxu0 0.0
    %2809 = vmatprep.subr.mxu0 0.0
    %2810 = vmatpush1.msra.mxu0 0.0
    %2811 = vmatprep.subr.mxu0 0.0
    %2812 = vmatpush1.msra.mxu0 0.0
    %2813 = vmatprep.subr.mxu0 0.0
    %2814 = vmatpush1.msra.mxu0 0.0
    %2815 = vmatprep.subr.mxu0 0.0
    %2816 = vmatpush1.msra.mxu0 0.0
    %2817 = vmatprep.subr.mxu0 0.0
    %2818 = vmatpush1.msra.mxu0 0.0
    %2819 = vmatprep.subr.mxu0 0.0
    %2820 = vmatpush1.msra.mxu0 0.0
    %2821 = vmatprep.subr.mxu0 0.0
    %2822 = vmatpush1.msra.mxu0 0.0
    %2823 = vmatprep.subr.mxu0 0.0
    %2824 = vmatpush1.msra.mxu0 0.0
    %2825 = vmatprep.subr.mxu0 0.0
    %2826 = vmatpush1.msra.mxu0 0.0
    %2827 = vmatprep.mubr.f32.mxu0 0.0
    %2828 = vmatmul.mubr.f32.gmra.mrb[0].mxu0 %v2741
    %v2829 = vpop.f32.mrb[0].mxu0
    %v2830 = vadd.f32 %v2762, %v2829
    %v2831 = vpop.f32.mrb[0].mxu0
    %2832 = vdwg.mxu0
    %v2833 = vtanh.pop %v2830
    %s2834 = scalar_lea.vmem [#allocation4], 1408
    %v2835 = vld [vmem:[%s2834] sm:$0xff]
    %v2836 = vld [vmem:[%s2834 + $0x8] sm:$0xff]
    %v2837 = vld [vmem:[%s2834 + $0x10] sm:$0xff]
    %v2838 = vld [vmem:[%s2834 + $0x18] sm:$0xff]
    %v2839 = vld [vmem:[%s2834 + $0x20] sm:$0xff]
    %v2840 = vld [vmem:[%s2834 + $0x28] sm:$0xff]
    %v2841 = vld [vmem:[%s2834 + $0x30] sm:$0xff]
    %v2842 = vld [vmem:[%s2834 + $0x38] sm:$0xff]
    %v2843 = vld [vmem:[%s2834 + $0x40] sm:$0xff]
    %v2844 = vld [vmem:[%s2834 + $0x48] sm:$0xff]
    %v2845 = vld [vmem:[%s2834 + $0x50] sm:$0xff]
    %v2846 = vld [vmem:[%s2834 + $0x58] sm:$0xff]
    %v2847 = vld [vmem:[%s2834 + $0x60] sm:$0xff]
    %v2848 = vld [vmem:[%s2834 + $0x68] sm:$0xff]
    %v2849 = vld [vmem:[%s2834 + $0x70] sm:$0xff]
    %v2850 = vld [vmem:[%s2834 + $0x78] sm:$0xff]
    %v2851 = vlaneseq
    %v2852 = vshrl.u32 %v2851, 7
    %v2853 = vsub.s32 2, %v2852
    %v2854 = vrot.slane %v1494, %v2853
    %2855 = vmatprep.subr.mxu0 0.0
    %2856 = vmatpush1.msra.mxu0 %v2835
    %2857 = vmatprep.subr.mxu0 0.0
    %2858 = vmatpush1.msra.mxu0 %v2836
    %2859 = vmatprep.subr.mxu0 0.0
    %2860 = vmatpush1.msra.mxu0 %v2837
    %2861 = vmatprep.subr.mxu0 0.0
    %2862 = vmatpush1.msra.mxu0 %v2838
    %2863 = vmatprep.subr.mxu0 0.0
    %2864 = vmatpush1.msra.mxu0 %v2839
    %2865 = vmatprep.subr.mxu0 0.0
    %2866 = vmatpush1.msra.mxu0 %v2840
    %2867 = vmatprep.subr.mxu0 0.0
    %2868 = vmatpush1.msra.mxu0 %v2841
    %2869 = vmatprep.subr.mxu0 0.0
    %2870 = vmatpush1.msra.mxu0 %v2842
    %2871 = vmatprep.subr.mxu0 0.0
    %2872 = vmatpush1.msra.mxu0 %v2843
    %2873 = vmatprep.subr.mxu0 0.0
    %2874 = vmatpush1.msra.mxu0 %v2844
    %2875 = vmatprep.subr.mxu0 0.0
    %2876 = vmatpush1.msra.mxu0 %v2845
    %2877 = vmatprep.subr.mxu0 0.0
    %2878 = vmatpush1.msra.mxu0 %v2846
    %2879 = vmatprep.subr.mxu0 0.0
    %2880 = vmatpush1.msra.mxu0 %v2847
    %2881 = vmatprep.subr.mxu0 0.0
    %2882 = vmatpush1.msra.mxu0 %v2848
    %2883 = vmatprep.subr.mxu0 0.0
    %2884 = vmatpush1.msra.mxu0 %v2849
    %2885 = vmatprep.subr.mxu0 0.0
    %2886 = vmatpush1.msra.mxu0 %v2850
    %2887 = vmatprep.subr.mxu0 0.0
    %2888 = vmatpush1.msra.mxu0 0.0
    %2889 = vmatprep.subr.mxu0 0.0
    %2890 = vmatpush1.msra.mxu0 0.0
    %2891 = vmatprep.subr.mxu0 0.0
    %2892 = vmatpush1.msra.mxu0 0.0
    %2893 = vmatprep.subr.mxu0 0.0
    %2894 = vmatpush1.msra.mxu0 0.0
    %2895 = vmatprep.subr.mxu0 0.0
    %2896 = vmatpush1.msra.mxu0 0.0
    %2897 = vmatprep.subr.mxu0 0.0
    %2898 = vmatpush1.msra.mxu0 0.0
    %2899 = vmatprep.subr.mxu0 0.0
    %2900 = vmatpush1.msra.mxu0 0.0
    %2901 = vmatprep.subr.mxu0 0.0
    %2902 = vmatpush1.msra.mxu0 0.0
    %2903 = vmatprep.subr.mxu0 0.0
    %2904 = vmatpush1.msra.mxu0 0.0
    %2905 = vmatprep.subr.mxu0 0.0
    %2906 = vmatpush1.msra.mxu0 0.0
    %2907 = vmatprep.subr.mxu0 0.0
    %2908 = vmatpush1.msra.mxu0 0.0
    %2909 = vmatprep.subr.mxu0 0.0
    %2910 = vmatpush1.msra.mxu0 0.0
    %2911 = vmatprep.subr.mxu0 0.0
    %2912 = vmatpush1.msra.mxu0 0.0
    %2913 = vmatprep.subr.mxu0 0.0
    %2914 = vmatpush1.msra.mxu0 0.0
    %2915 = vmatprep.subr.mxu0 0.0
    %2916 = vmatpush1.msra.mxu0 0.0
    %2917 = vmatprep.subr.mxu0 0.0
    %2918 = vmatpush1.msra.mxu0 0.0
    %2919 = vmatprep.mubr.f32.mxu0 0.0
    %2920 = vmatmul.mubr.f32.gmra.mrb[0].mxu0 %v2833
    %v2921 = vpop.f32.mrb[0].mxu0
    %v2922 = vadd.f32 %v2854, %v2921
    %v2923 = vpop.f32.mrb[0].mxu0
    %2924 = vdwg.mxu0
    %v2925 = vmul.f32 %v1483, %v2922
    %vm2926 = vcmask 1041408
    %v2927 = vsel %vm2926, %v2925, 0.0
    %2928 = vadd.xlane.f32.xlu0 %v2927
    %v2929 = vpop.xlane.xlu0 %2928
    %v2930 = vmul.f32 %v1483, %v1483
    %v2931 = vsel %vm2926, %v2930, 0.0
    %2932 = vadd.xlane.f32.xlu0 %v2931
    %v2933 = vpop.xlane.xlu0 %2932
    %v2934 = vrsqrt.pop %v2933
    %v2935 = vmul.f32 %v2933, %v2934
    %vm2936 = vcmp.eq.f32.partialorder %v2933, inf
    %v2937 = vsel %vm2936, %v2933, %v2935
    %vm2938 = vcmp.eq.f32.partialorder %v2933, 0.0
    %v2939 = vand.u32 %v2933, 2147483648
    %v2940 = vsel %vm2938, %v2939, %v2937
    %v2941 = vmul.f32 %v2922, %v2922
    %v2942 = vsel %vm2926, %v2941, 0.0
    %2943 = vadd.xlane.f32.xlu0 %v2942
    %v2944 = vpop.xlane.xlu0 %2943
    %v2945 = vrsqrt.pop %v2944
    %v2946 = vmul.f32 %v2944, %v2945
    %vm2947 = vcmp.eq.f32.partialorder %v2944, inf
    %v2948 = vsel %vm2947, %v2944, %v2946
    %vm2949 = vcmp.eq.f32.partialorder %v2944, 0.0
    %v2950 = vand.u32 %v2944, 2147483648
    %v2951 = vsel %vm2949, %v2950, %v2948
    %v2952 = vmax.f32 %v2940, 1e-08
    %v2953 = vmax.f32 %v2951, 1e-08
    %v2954 = vmul.f32 %v2952, %v2953
    %v2955 = vrcp.pop %v2954
    %v2956 = vmul.f32 %v2929, %v2955
    %vm2957 = vcmask 1024
    %2958 = vst.msk [vmem:[%s6] sm:$0x3] %vm2957, %v2956
    // Predicated region
    $region34: #{_two_tower_similarity_impl.1} parent=1 // pred_check
      _
    $region35: #{_two_tower_similarity_impl.1} parent=1 // pred_check_branch
      %2960 = sbr.rel (0) target = $region37
    $region36: #{_two_tower_similarity_impl.1} parent=1 // pred_region
      _
    $region37: #{_two_tower_similarity_impl.1} parent=1 // pred_fallthru
      _
    // Predicated region
    $region38: #{_two_tower_similarity_impl.1} parent=1 // pred_check
      _
    $region39: #{_two_tower_similarity_impl.1} parent=1 // pred_check_branch
      %2962 = sbr.rel (0) target = $region41
    $region40: #{_two_tower_similarity_impl.1} parent=1 // pred_region
      _
    $region41: #{_two_tower_similarity_impl.1} parent=1 // pred_fallthru
      _
    %2963 = vsyncpa [#allocation3], 1
    %2964 = vsyncpa [#allocation5], 1

</llo_original>
